<compile_context>
chip_gen: v5e
topology: v5e:2x2
jax: 0.10.0
libtpu: 0.0.40
codegen_flags: <defaults>
</compile_context>

<pallas_src>
import math

import jax
import jax.numpy as jnp
from jax.experimental import pallas as pl
from jax.experimental.pallas import tpu as pltpu

EMBED = 32        # d_model
N_HEADS = 4       # n_head  (d_K = 8)
FWD_EXP = 2       # forward_expansion
LN_EPS = 1e-5     # nn.LayerNorm default
NEG_INF = -1e10   # masked_fill value in the reference module


# ------------------------------- fused kernel -------------------------------

def _decoder_block_kernel(
    x_ref,      # (Bt*Lq,  E)   decoder input rows (flattened over batch)
    k_ref,      # (Bt*Lkv, E)   encoder K rows
    v_ref,      # (Bt*Lkv, E)   encoder V rows
    tb_ref,     # (1, Lq, Lq)   target/causal additive bias (VMEM-resident)
    sb_ref,     # (Bt, 1, Lkv)  source-padding additive bias
    wqkv_ref,   # (6, H, E, dk) [self q,k,v | cross q,k,v] per-head projections
    bqkv_ref,   # (6, H, 1, dk) matching biases
    wout_ref,   # (2, H, dk, E) [self fc_out | cross fc_out], per-head row blocks
    vecs_ref,   # (9, 1, E)     bo1, ng, nb, bo2, ln1g, ln1b, b2, ln2g, ln2b
    w1_ref,     # (E,  Hf)      FFN first linear
    b1_ref,     # (1,  Hf)
    w2_ref,     # (Hf, E)       FFN second linear
    o_ref,      # (Bt*Lq, E)
):
    n_head = wqkv_ref.shape[1]
    dk = wqkv_ref.shape[3]
    lq = tb_ref.shape[1]
    bt = x_ref.shape[0] // lq
    lkv = k_ref.shape[0] // bt
    inv_scale = 1.0 / math.sqrt(dk)          # e = QK^T / sqrt(d_K)

    xf = x_ref[...]                           # (Bt*Lq, E)
    kf = k_ref[...]                           # (Bt*Lkv, E)
    vf = v_ref[...]                           # (Bt*Lkv, E)
    tbias = tb_ref[0]                         # (Lq, Lq)
    sbias = sb_ref[...]                       # (Bt, 1, Lkv)

    def layernorm(z, gi, bi):
        g = vecs_ref[gi]                      # (1, E)
        b = vecs_ref[bi]
        mu = jnp.mean(z, axis=-1, keepdims=True)
        var = jnp.mean((z - mu) ** 2, axis=-1, keepdims=True)
        return (z - mu) * jax.lax.rsqrt(var + LN_EPS) * g + b

    def mha(q2d, k2d, v2d, bias, base, oidx, n_k):
        # Heads are a leading weight axis (no lane slices); the head concat is
        # folded into fc_out as an accumulation over heads on the MXU.
        acc = jnp.zeros((bt * lq, q2d.shape[-1]), jnp.float32)
        for h in range(n_head):               # static, unrolled (n_head = 4)
            qh = (jnp.dot(q2d, wqkv_ref[base + 0, h],
                          preferred_element_type=jnp.float32)
                  + bqkv_ref[base + 0, h]) * inv_scale
            kh = (jnp.dot(k2d, wqkv_ref[base + 1, h],
                          preferred_element_type=jnp.float32)
                  + bqkv_ref[base + 1, h])
            vh = (jnp.dot(v2d, wqkv_ref[base + 2, h],
                          preferred_element_type=jnp.float32)
                  + bqkv_ref[base + 2, h])
            # leading-dim (sublane-aligned) splits: Bt rows of length L
            q3 = qh.reshape(bt, lq, dk)
            k3 = kh.reshape(bt, n_k, dk)
            v3 = vh.reshape(bt, n_k, dk)
            s = jnp.einsum('bqd,bkd->bqk', q3, k3,
                           preferred_element_type=jnp.float32) + bias
            s = s - jnp.max(s, axis=-1, keepdims=True)
            p = jnp.exp(s)
            alpha = p / jnp.sum(p, axis=-1, keepdims=True)   # exact softmax
            ctx = jnp.einsum('bqk,bkd->bqd', alpha, v3,
                             preferred_element_type=jnp.float32)
            acc = acc + jnp.dot(ctx.reshape(bt * lq, dk), wout_ref[oidx, h],
                                preferred_element_type=jnp.float32)
        return acc

    # ---- masked self-attention: decoder_attn = MHA(X, X, X, target_mask) ----
    attn1 = mha(xf, xf, xf, tbias, 0, 0, lq) + vecs_ref[0]
    # Q = norm(dropout(decoder_attn) + X)            (dropout == identity)
    qd = layernorm(attn1 + xf, 1, 2)

    # ---- cross-attention: MHA(Q, K_enc, V_enc, source_mask) ----
    attn2 = mha(qd, kf, vf, sbias, 3, 1, lkv) + vecs_ref[3]
    # X = Lnorm1(dropout(attention) + Q)
    x2 = layernorm(attn2 + qd, 4, 5)

    # ---- FFN: Linear -> LeakyReLU(0.01) -> Linear ----
    h1 = jnp.dot(x2, w1_ref[...], preferred_element_type=jnp.float32) + b1_ref[...]
    h1 = jnp.where(h1 >= 0, h1, 0.01 * h1)
    ff = jnp.dot(h1, w2_ref[...], preferred_element_type=jnp.float32) + vecs_ref[6]
    # out = Lnorm2(dropout(forward) + X)
    out = layernorm(ff + x2, 7, 8)

    o_ref[...] = out.astype(o_ref.dtype)


# --------------------------------- wrapper ----------------------------------

def decoder_block_forward(p, X, K, V, source_mask, target_mask):
    """DecoderBlock.forward(X, K, V, source_mask, target_mask) -> (B, Lq, E)."""
    f32 = jnp.float32
    B, Lq, E = X.shape
    Lkv = K.shape[1]
    H = N_HEADS
    dk = E // H

    # Grid: many batch rows per step, but keep 2 steps when possible so both
    # TensorCores of a v7x share the batch (v5e/v6e: 2 steps is still ~B/2x
    # fewer grid-step overheads than per-row).
    if B >= 2 and B % 2 == 0:
        n_steps = 2
    else:
        n_steps = B                       # odd / tiny batch fallback
    Bt = B // n_steps
    Nq, Nk = Bt * Lq, Bt * Lkv

    # Activations flattened to (rows, E) slabs (free XLA reshapes out here),
    # so every in-kernel matmul / LayerNorm works on a (Bt*L, E) block and the
    # output store is one contiguous slab per step.
    X2 = X.astype(f32).reshape(B * Lq, E)
    K2 = K.astype(f32).reshape(B * Lkv, E)
    V2 = V.astype(f32).reshape(B * Lkv, E)

    # masked_fill(Mask == 0, -1e10) as additive biases.
    # Target (LHA/causal) mask is batch-invariant in this model -> DMA once,
    # VMEM-resident.  Source mask is a key-padding mask -> (B, 1, Lkv), the
    # kernel broadcasts it over queries.
    tmask = jnp.broadcast_to(target_mask, (B, 1, Lq, Lq))[0, 0]
    tbias = jnp.where(tmask != 0, 0.0, NEG_INF).astype(f32)[None]        # (1,Lq,Lq)
    smask = jnp.broadcast_to(source_mask, (B, 1, 1, Lkv))[:, 0, 0, :]
    sbias = jnp.where(smask != 0, 0.0, NEG_INF).astype(f32)[:, None, :]  # (B,1,Lkv)

    # ---- pack 22 weight/bias tensors into 7 kernel inputs ----
    def head_w(w):    # (E, E) in->out  ->  (H, E, dk)  (per-head columns)
        return w.reshape(E, H, dk).transpose(1, 0, 2)

    def head_b(b):    # (E,)  ->  (H, 1, dk)
        return b.reshape(H, 1, dk)

    s, c, f = p['self_mha'], p['cross_mha'], p['ffn']
    w_qkv = jnp.stack([head_w(s['wq']), head_w(s['wk']), head_w(s['wv']),
                       head_w(c['wq']), head_w(c['wk']), head_w(c['wv'])],
                      axis=0).astype(f32)                       # (6,H,E,dk)
    b_qkv = jnp.stack([head_b(s['bq']), head_b(s['bk']), head_b(s['bv']),
                       head_b(c['bq']), head_b(c['bk']), head_b(c['bv'])],
                      axis=0).astype(f32)                       # (6,H,1,dk)
    w_out = jnp.stack([s['wo'].reshape(H, dk, E),
                       c['wo'].reshape(H, dk, E)], axis=0).astype(f32)  # (2,H,dk,E)
    vecs = jnp.stack([s['bo'], p['norm_g'], p['norm_b'], c['bo'],
                      p['ln1_g'], p['ln1_b'], f['b2'],
                      p['ln2_g'], p['ln2_b']], axis=0).reshape(9, 1, E).astype(f32)
    w1 = f['w1'].astype(f32)
    b1 = f['b1'].reshape(1, -1).astype(f32)
    w2 = f['w2'].astype(f32)
    weights = [w_qkv, b_qkv, w_out, vecs, w1, b1, w2]

    def resident(arr):   # constant index_map -> fetched once, stays in VMEM
        nd = arr.ndim
        return pl.BlockSpec(arr.shape, lambda b, _nd=nd: (0,) * _nd)

    out2 = pl.pallas_call(
        _decoder_block_kernel,
        out_shape=jax.ShapeDtypeStruct((B * Lq, E), f32),
        grid=(n_steps,),
        in_specs=[
            pl.BlockSpec((Nq, E), lambda b: (b, 0)),          # X rows
            pl.BlockSpec((Nk, E), lambda b: (b, 0)),          # K rows
            pl.BlockSpec((Nk, E), lambda b: (b, 0)),          # V rows
            pl.BlockSpec((1, Lq, Lq), lambda b: (0, 0, 0)),   # target bias (resident)
            pl.BlockSpec((Bt, 1, Lkv), lambda b: (b, 0, 0)),  # source bias
        ] + [resident(w) for w in weights],
        out_specs=pl.BlockSpec((Nq, E), lambda b: (b, 0)),
        compiler_params=pltpu.CompilerParams(
            dimension_semantics=("parallel",)),
    )(X2, K2, V2, tbias, sbias, *weights)

    return out2.reshape(B, Lq, E)


# ------------------------------ parameter init ------------------------------

def init_decoder_block_params(key):
    keys = iter(jax.random.split(key, 32))

    def w(din, dout):
        return jax.random.normal(next(keys), (din, dout), jnp.float32) * 0.05

    def b(n):
        return jax.random.normal(next(keys), (n,), jnp.float32) * 0.05

    def zeros(n):
        return jnp.zeros((n,), jnp.float32)

    def ones(n):
        return jnp.ones((n,), jnp.float32)

    E, Hf = EMBED, FWD_EXP * EMBED

    def mha_params():
        return dict(wq=w(E, E), bq=b(E), wk=w(E, E), bk=b(E),
                    wv=w(E, E), bv=b(E), wo=w(E, E), bo=b(E))

    return dict(
        self_mha=mha_params(),            # DecoderBlock.MHA
        norm_g=ones(E), norm_b=zeros(E),  # DecoderBlock.norm
        cross_mha=mha_params(),           # transformer_block.MHA
        ln1_g=ones(E), ln1_b=zeros(E),    # transformer_block.Lnorm1
        ffn=dict(w1=w(E, Hf), b1=b(Hf), w2=w(Hf, E), b2=b(E)),
        ln2_g=ones(E), ln2_b=zeros(E),    # transformer_block.Lnorm2
    )


# ----------------------------------- main ------------------------------------

if __name__ == "__main__":
    key = jax.random.PRNGKey(0)
    pkey, xkey, ekey = jax.random.split(key, 3)
    params = init_decoder_block_params(pkey)

    B, L_DEC, L_ENC = 4, 8, 16
    X = jax.random.normal(xkey, (B, L_DEC, EMBED), jnp.float32)    # GT input
    enc = jax.random.normal(ekey, (B, L_ENC, EMBED), jnp.float32)  # encoder feats

    # source padding mask (B, 1, 1, L_ENC): some samples have padded frames
    lens = jnp.array([L_ENC, L_ENC - 2, L_ENC - 5, L_ENC], jnp.int32)
    src_valid = (jnp.arange(L_ENC)[None, :] < lens[:, None]).astype(jnp.float32)
    source_mask = src_valid[:, None, None, :]
    # causal target mask (B, 1, L_DEC, L_DEC)
    target_mask = jnp.broadcast_to(
        jnp.tril(jnp.ones((L_DEC, L_DEC), jnp.float32))[None, None],
        (B, 1, L_DEC, L_DEC))

    fwd = jax.jit(decoder_block_forward)
    out = fwd(params, X, enc, enc, source_mask, target_mask)
    jax.block_until_ready(out)

    assert out.shape == (B, L_DEC, EMBED)
    assert bool(jnp.all(jnp.isfinite(out)))
    print("KERNEL_OK")
</pallas_src>

<mosaic_0001>
module attributes {stable_mosaic.version = 11 : i64} {
  func.func @_decoder_block_kernel(%arg0: i32, %arg1: memref<16x32xf32, #tpu.memory_space<vmem>>, %arg2: memref<32x32xf32, #tpu.memory_space<vmem>>, %arg3: memref<32x32xf32, #tpu.memory_space<vmem>>, %arg4: memref<1x8x8xf32, #tpu.memory_space<vmem>>, %arg5: memref<2x1x16xf32, #tpu.memory_space<vmem>>, %arg6: memref<6x4x32x8xf32, #tpu.memory_space<vmem>>, %arg7: memref<6x4x1x8xf32, #tpu.memory_space<vmem>>, %arg8: memref<2x4x8x32xf32, #tpu.memory_space<vmem>>, %arg9: memref<9x1x32xf32, #tpu.memory_space<vmem>>, %arg10: memref<32x64xf32, #tpu.memory_space<vmem>>, %arg11: memref<1x64xf32, #tpu.memory_space<vmem>>, %arg12: memref<64x32xf32, #tpu.memory_space<vmem>>, %arg13: memref<16x32xf32, #tpu.memory_space<vmem>>) attributes {dimension_semantics = [#tpu.dimension_semantics<parallel>], iteration_bounds = array<i64: 2>, scalar_prefetch = 0 : i64, scratch_operands = 0 : i64, tpu.core_type = #tpu.core_type<tc>, window_params = [{transform_indices = @transform_0, window_bounds = array<i64: 16, 32>}, {transform_indices = @transform_1, window_bounds = array<i64: 32, 32>}, {transform_indices = @transform_2, window_bounds = array<i64: 32, 32>}, {pipeline_mode = #tpu.pipeline_mode<synchronous>, transform_indices = @transform_3, window_bounds = array<i64: 1, 8, 8>}, {transform_indices = @transform_4, window_bounds = array<i64: 2, 1, 16>}, {pipeline_mode = #tpu.pipeline_mode<synchronous>, transform_indices = @transform_5, window_bounds = array<i64: 6, 4, 32, 8>}, {pipeline_mode = #tpu.pipeline_mode<synchronous>, transform_indices = @transform_6, window_bounds = array<i64: 6, 4, 1, 8>}, {pipeline_mode = #tpu.pipeline_mode<synchronous>, transform_indices = @transform_7, window_bounds = array<i64: 2, 4, 8, 32>}, {pipeline_mode = #tpu.pipeline_mode<synchronous>, transform_indices = @transform_8, window_bounds = array<i64: 9, 1, 32>}, {pipeline_mode = #tpu.pipeline_mode<synchronous>, transform_indices = @transform_9, window_bounds = array<i64: 32, 64>}, {pipeline_mode = #tpu.pipeline_mode<synchronous>, transform_indices = @transform_10, window_bounds = array<i64: 1, 64>}, {pipeline_mode = #tpu.pipeline_mode<synchronous>, transform_indices = @transform_11, window_bounds = array<i64: 64, 32>}, {transform_indices = @transform_12, window_bounds = array<i64: 16, 32>}]} {
    %c0 = arith.constant 0 : index
    %c0_0 = arith.constant 0 : index
    %0 = vector.load %arg1[%c0, %c0_0] : memref<16x32xf32, #tpu.memory_space<vmem>>, vector<16x32xf32>
    %c0_1 = arith.constant 0 : index
    %c0_2 = arith.constant 0 : index
    %1 = vector.load %arg2[%c0_1, %c0_2] : memref<32x32xf32, #tpu.memory_space<vmem>>, vector<32x32xf32>
    %c0_3 = arith.constant 0 : index
    %c0_4 = arith.constant 0 : index
    %2 = vector.load %arg3[%c0_3, %c0_4] : memref<32x32xf32, #tpu.memory_space<vmem>>, vector<32x32xf32>
    %c0_5 = arith.constant 0 : index
    %c0_6 = arith.constant 0 : index
    %c0_7 = arith.constant 0 : index
    %3 = vector.load %arg4[%c0_5, %c0_6, %c0_7] : memref<1x8x8xf32, #tpu.memory_space<vmem>>, vector<1x8x8xf32>
    %4 = vector.shape_cast %3 : vector<1x8x8xf32> to vector<8x8xf32>
    %c0_8 = arith.constant 0 : index
    %c0_9 = arith.constant 0 : index
    %c0_10 = arith.constant 0 : index
    %5 = vector.load %arg5[%c0_8, %c0_9, %c0_10] : memref<2x1x16xf32, #tpu.memory_space<vmem>>, vector<2x1x16xf32>
    %cst = arith.constant 0.000000e+00 : f32
    %6 = vector.broadcast %cst : f32 to vector<16x32xf32>
    %c0_11 = arith.constant 0 : index
    %c0_12 = arith.constant 0 : index
    %c0_13 = arith.constant 0 : index
    %c0_14 = arith.constant 0 : index
    %7 = vector.load %arg6[%c0_11, %c0_12, %c0_13, %c0_14] : memref<6x4x32x8xf32, #tpu.memory_space<vmem>>, vector<1x1x32x8xf32>
    %8 = vector.shape_cast %7 : vector<1x1x32x8xf32> to vector<32x8xf32>
    %cst_15 = arith.constant dense<0.000000e+00> : vector<16x8xf32>
    %9 = tpu.matmul %0, %8, %cst_15 {dimension_numbers = #tpu.dot_dimension_numbers<[1], [0], [0], [1], [0, 0, 1, 1], [], []>} : vector<16x32xf32>, vector<32x8xf32>, vector<16x8xf32> -> vector<16x8xf32>
    %c0_16 = arith.constant 0 : index
    %c0_17 = arith.constant 0 : index
    %c0_18 = arith.constant 0 : index
    %c0_19 = arith.constant 0 : index
    %10 = vector.load %arg7[%c0_16, %c0_17, %c0_18, %c0_19] : memref<6x4x1x8xf32, #tpu.memory_space<vmem>>, vector<1x1x1x8xf32>
    %11 = vector.shape_cast %10 : vector<1x1x1x8xf32> to vector<1x8xf32>
    %12 = vector.broadcast %11 : vector<1x8xf32> to vector<16x8xf32>
    %13 = arith.addf %9, %12 : vector<16x8xf32>
    %cst_20 = arith.constant 0.353553385 : f32
    %14 = vector.broadcast %cst_20 : f32 to vector<16x8xf32>
    %15 = arith.mulf %13, %14 : vector<16x8xf32>
    %c1 = arith.constant 1 : index
    %c0_21 = arith.constant 0 : index
    %c0_22 = arith.constant 0 : index
    %c0_23 = arith.constant 0 : index
    %16 = vector.load %arg6[%c1, %c0_21, %c0_22, %c0_23] : memref<6x4x32x8xf32, #tpu.memory_space<vmem>>, vector<1x1x32x8xf32>
    %17 = vector.shape_cast %16 : vector<1x1x32x8xf32> to vector<32x8xf32>
    %cst_24 = arith.constant dense<0.000000e+00> : vector<16x8xf32>
    %18 = tpu.matmul %0, %17, %cst_24 {dimension_numbers = #tpu.dot_dimension_numbers<[1], [0], [0], [1], [0, 0, 1, 1], [], []>} : vector<16x32xf32>, vector<32x8xf32>, vector<16x8xf32> -> vector<16x8xf32>
    %c1_25 = arith.constant 1 : index
    %c0_26 = arith.constant 0 : index
    %c0_27 = arith.constant 0 : index
    %c0_28 = arith.constant 0 : index
    %19 = vector.load %arg7[%c1_25, %c0_26, %c0_27, %c0_28] : memref<6x4x1x8xf32, #tpu.memory_space<vmem>>, vector<1x1x1x8xf32>
    %20 = vector.shape_cast %19 : vector<1x1x1x8xf32> to vector<1x8xf32>
    %21 = vector.broadcast %20 : vector<1x8xf32> to vector<16x8xf32>
    %22 = arith.addf %18, %21 : vector<16x8xf32>
    %c2 = arith.constant 2 : index
    %c0_29 = arith.constant 0 : index
    %c0_30 = arith.constant 0 : index
    %c0_31 = arith.constant 0 : index
    %23 = vector.load %arg6[%c2, %c0_29, %c0_30, %c0_31] : memref<6x4x32x8xf32, #tpu.memory_space<vmem>>, vector<1x1x32x8xf32>
    %24 = vector.shape_cast %23 : vector<1x1x32x8xf32> to vector<32x8xf32>
    %cst_32 = arith.constant dense<0.000000e+00> : vector<16x8xf32>
    %25 = tpu.matmul %0, %24, %cst_32 {dimension_numbers = #tpu.dot_dimension_numbers<[1], [0], [0], [1], [0, 0, 1, 1], [], []>} : vector<16x32xf32>, vector<32x8xf32>, vector<16x8xf32> -> vector<16x8xf32>
    %c2_33 = arith.constant 2 : index
    %c0_34 = arith.constant 0 : index
    %c0_35 = arith.constant 0 : index
    %c0_36 = arith.constant 0 : index
    %26 = vector.load %arg7[%c2_33, %c0_34, %c0_35, %c0_36] : memref<6x4x1x8xf32, #tpu.memory_space<vmem>>, vector<1x1x1x8xf32>
    %27 = vector.shape_cast %26 : vector<1x1x1x8xf32> to vector<1x8xf32>
    %28 = vector.broadcast %27 : vector<1x8xf32> to vector<16x8xf32>
    %29 = arith.addf %25, %28 : vector<16x8xf32>
    %30 = vector.shape_cast %15 : vector<16x8xf32> to vector<2x8x8xf32>
    %31 = vector.shape_cast %22 : vector<16x8xf32> to vector<2x8x8xf32>
    %32 = vector.shape_cast %29 : vector<16x8xf32> to vector<2x8x8xf32>
    "tpu.trace_start"() <{level = 10 : i32, message = "bqd,bkd->bqk"}> : () -> ()
    %cst_37 = arith.constant dense<0.000000e+00> : vector<2x8x8xf32>
    %33 = tpu.matmul %30, %31, %cst_37 {dimension_numbers = #tpu.dot_dimension_numbers<[2], [2], [1], [1], [0, 0, 0, 1, 1, 1], [0], [0]>} : vector<2x8x8xf32>, vector<2x8x8xf32>, vector<2x8x8xf32> -> vector<2x8x8xf32>
    "tpu.trace_stop"() : () -> ()
    %34 = vector.shape_cast %4 : vector<8x8xf32> to vector<1x8x8xf32>
    %35 = vector.broadcast %34 : vector<1x8x8xf32> to vector<2x8x8xf32>
    %36 = arith.addf %33, %35 : vector<2x8x8xf32>
    %cst_38 = arith.constant dense<0xFF800000> : vector<2x8xf32>
    %37 = vector.multi_reduction <maximumf>, %36, %cst_38 [2] : vector<2x8x8xf32> to vector<2x8xf32>
    %38 = vector.shape_cast %37 : vector<2x8xf32> to vector<2x8x1xf32>
    %39 = vector.broadcast %38 : vector<2x8x1xf32> to vector<2x8x8xf32>
    %40 = arith.subf %36, %39 : vector<2x8x8xf32>
    %41 = math.exp %40 : vector<2x8x8xf32>
    %cst_39 = arith.constant dense<0.000000e+00> : vector<2x8xf32>
    %42 = vector.multi_reduction <add>, %41, %cst_39 [2] : vector<2x8x8xf32> to vector<2x8xf32>
    %43 = vector.shape_cast %42 : vector<2x8xf32> to vector<2x8x1xf32>
    %44 = vector.broadcast %43 : vector<2x8x1xf32> to vector<2x8x8xf32>
    %45 = arith.divf %41, %44 : vector<2x8x8xf32>
    "tpu.trace_start"() <{level = 10 : i32, message = "bqk,bkd->bqd"}> : () -> ()
    %cst_40 = arith.constant dense<0.000000e+00> : vector<2x8x8xf32>
    %46 = tpu.matmul %45, %32, %cst_40 {dimension_numbers = #tpu.dot_dimension_numbers<[2], [1], [1], [2], [0, 0, 0, 1, 1, 2], [0], [0]>} : vector<2x8x8xf32>, vector<2x8x8xf32>, vector<2x8x8xf32> -> vector<2x8x8xf32>
    "tpu.trace_stop"() : () -> ()
    %47 = vector.shape_cast %46 : vector<2x8x8xf32> to vector<16x8xf32>
    %c0_41 = arith.constant 0 : index
    %c0_42 = arith.constant 0 : index
    %c0_43 = arith.constant 0 : index
    %c0_44 = arith.constant 0 : index
    %48 = vector.load %arg8[%c0_41, %c0_42, %c0_43, %c0_44] : memref<2x4x8x32xf32, #tpu.memory_space<vmem>>, vector<1x1x8x32xf32>
    %49 = vector.shape_cast %48 : vector<1x1x8x32xf32> to vector<8x32xf32>
    %cst_45 = arith.constant dense<0.000000e+00> : vector<16x32xf32>
    %50 = tpu.matmul %47, %49, %cst_45 {dimension_numbers = #tpu.dot_dimension_numbers<[1], [0], [0], [1], [0, 0, 1, 1], [], []>} : vector<16x8xf32>, vector<8x32xf32>, vector<16x32xf32> -> vector<16x32xf32>
    %51 = arith.addf %6, %50 : vector<16x32xf32>
    %c0_46 = arith.constant 0 : index
    %c1_47 = arith.constant 1 : index
    %c0_48 = arith.constant 0 : index
    %c0_49 = arith.constant 0 : index
    %52 = vector.load %arg6[%c0_46, %c1_47, %c0_48, %c0_49] : memref<6x4x32x8xf32, #tpu.memory_space<vmem>>, vector<1x1x32x8xf32>
    %53 = vector.shape_cast %52 : vector<1x1x32x8xf32> to vector<32x8xf32>
    %cst_50 = arith.constant dense<0.000000e+00> : vector<16x8xf32>
    %54 = tpu.matmul %0, %53, %cst_50 {dimension_numbers = #tpu.dot_dimension_numbers<[1], [0], [0], [1], [0, 0, 1, 1], [], []>} : vector<16x32xf32>, vector<32x8xf32>, vector<16x8xf32> -> vector<16x8xf32>
    %c0_51 = arith.constant 0 : index
    %c1_52 = arith.constant 1 : index
    %c0_53 = arith.constant 0 : index
    %c0_54 = arith.constant 0 : index
    %55 = vector.load %arg7[%c0_51, %c1_52, %c0_53, %c0_54] : memref<6x4x1x8xf32, #tpu.memory_space<vmem>>, vector<1x1x1x8xf32>
    %56 = vector.shape_cast %55 : vector<1x1x1x8xf32> to vector<1x8xf32>
    %57 = vector.broadcast %56 : vector<1x8xf32> to vector<16x8xf32>
    %58 = arith.addf %54, %57 : vector<16x8xf32>
    %cst_55 = arith.constant 0.353553385 : f32
    %59 = vector.broadcast %cst_55 : f32 to vector<16x8xf32>
    %60 = arith.mulf %58, %59 : vector<16x8xf32>
    %c1_56 = arith.constant 1 : index
    %c1_57 = arith.constant 1 : index
    %c0_58 = arith.constant 0 : index
    %c0_59 = arith.constant 0 : index
    %61 = vector.load %arg6[%c1_56, %c1_57, %c0_58, %c0_59] : memref<6x4x32x8xf32, #tpu.memory_space<vmem>>, vector<1x1x32x8xf32>
    %62 = vector.shape_cast %61 : vector<1x1x32x8xf32> to vector<32x8xf32>
    %cst_60 = arith.constant dense<0.000000e+00> : vector<16x8xf32>
    %63 = tpu.matmul %0, %62, %cst_60 {dimension_numbers = #tpu.dot_dimension_numbers<[1], [0], [0], [1], [0, 0, 1, 1], [], []>} : vector<16x32xf32>, vector<32x8xf32>, vector<16x8xf32> -> vector<16x8xf32>
    %c1_61 = arith.constant 1 : index
    %c1_62 = arith.constant 1 : index
    %c0_63 = arith.constant 0 : index
    %c0_64 = arith.constant 0 : index
    %64 = vector.load %arg7[%c1_61, %c1_62, %c0_63, %c0_64] : memref<6x4x1x8xf32, #tpu.memory_space<vmem>>, vector<1x1x1x8xf32>
    %65 = vector.shape_cast %64 : vector<1x1x1x8xf32> to vector<1x8xf32>
    %66 = vector.broadcast %65 : vector<1x8xf32> to vector<16x8xf32>
    %67 = arith.addf %63, %66 : vector<16x8xf32>
    %c2_65 = arith.constant 2 : index
    %c1_66 = arith.constant 1 : index
    %c0_67 = arith.constant 0 : index
    %c0_68 = arith.constant 0 : index
    %68 = vector.load %arg6[%c2_65, %c1_66, %c0_67, %c0_68] : memref<6x4x32x8xf32, #tpu.memory_space<vmem>>, vector<1x1x32x8xf32>
    %69 = vector.shape_cast %68 : vector<1x1x32x8xf32> to vector<32x8xf32>
    %cst_69 = arith.constant dense<0.000000e+00> : vector<16x8xf32>
    %70 = tpu.matmul %0, %69, %cst_69 {dimension_numbers = #tpu.dot_dimension_numbers<[1], [0], [0], [1], [0, 0, 1, 1], [], []>} : vector<16x32xf32>, vector<32x8xf32>, vector<16x8xf32> -> vector<16x8xf32>
    %c2_70 = arith.constant 2 : index
    %c1_71 = arith.constant 1 : index
    %c0_72 = arith.constant 0 : index
    %c0_73 = arith.constant 0 : index
    %71 = vector.load %arg7[%c2_70, %c1_71, %c0_72, %c0_73] : memref<6x4x1x8xf32, #tpu.memory_space<vmem>>, vector<1x1x1x8xf32>
    %72 = vector.shape_cast %71 : vector<1x1x1x8xf32> to vector<1x8xf32>
    %73 = vector.broadcast %72 : vector<1x8xf32> to vector<16x8xf32>
    %74 = arith.addf %70, %73 : vector<16x8xf32>
    %75 = vector.shape_cast %60 : vector<16x8xf32> to vector<2x8x8xf32>
    %76 = vector.shape_cast %67 : vector<16x8xf32> to vector<2x8x8xf32>
    %77 = vector.shape_cast %74 : vector<16x8xf32> to vector<2x8x8xf32>
    "tpu.trace_start"() <{level = 10 : i32, message = "bqd,bkd->bqk"}> : () -> ()
    %cst_74 = arith.constant dense<0.000000e+00> : vector<2x8x8xf32>
    %78 = tpu.matmul %75, %76, %cst_74 {dimension_numbers = #tpu.dot_dimension_numbers<[2], [2], [1], [1], [0, 0, 0, 1, 1, 1], [0], [0]>} : vector<2x8x8xf32>, vector<2x8x8xf32>, vector<2x8x8xf32> -> vector<2x8x8xf32>
    "tpu.trace_stop"() : () -> ()
    %79 = vector.shape_cast %4 : vector<8x8xf32> to vector<1x8x8xf32>
    %80 = vector.broadcast %79 : vector<1x8x8xf32> to vector<2x8x8xf32>
    %81 = arith.addf %78, %80 : vector<2x8x8xf32>
    %cst_75 = arith.constant dense<0xFF800000> : vector<2x8xf32>
    %82 = vector.multi_reduction <maximumf>, %81, %cst_75 [2] : vector<2x8x8xf32> to vector<2x8xf32>
    %83 = vector.shape_cast %82 : vector<2x8xf32> to vector<2x8x1xf32>
    %84 = vector.broadcast %83 : vector<2x8x1xf32> to vector<2x8x8xf32>
    %85 = arith.subf %81, %84 : vector<2x8x8xf32>
    %86 = math.exp %85 : vector<2x8x8xf32>
    %cst_76 = arith.constant dense<0.000000e+00> : vector<2x8xf32>
    %87 = vector.multi_reduction <add>, %86, %cst_76 [2] : vector<2x8x8xf32> to vector<2x8xf32>
    %88 = vector.shape_cast %87 : vector<2x8xf32> to vector<2x8x1xf32>
    %89 = vector.broadcast %88 : vector<2x8x1xf32> to vector<2x8x8xf32>
    %90 = arith.divf %86, %89 : vector<2x8x8xf32>
    "tpu.trace_start"() <{level = 10 : i32, message = "bqk,bkd->bqd"}> : () -> ()
    %cst_77 = arith.constant dense<0.000000e+00> : vector<2x8x8xf32>
    %91 = tpu.matmul %90, %77, %cst_77 {dimension_numbers = #tpu.dot_dimension_numbers<[2], [1], [1], [2], [0, 0, 0, 1, 1, 2], [0], [0]>} : vector<2x8x8xf32>, vector<2x8x8xf32>, vector<2x8x8xf32> -> vector<2x8x8xf32>
    "tpu.trace_stop"() : () -> ()
    %92 = vector.shape_cast %91 : vector<2x8x8xf32> to vector<16x8xf32>
    %c0_78 = arith.constant 0 : index
    %c1_79 = arith.constant 1 : index
    %c0_80 = arith.constant 0 : index
    %c0_81 = arith.constant 0 : index
    %93 = vector.load %arg8[%c0_78, %c1_79, %c0_80, %c0_81] : memref<2x4x8x32xf32, #tpu.memory_space<vmem>>, vector<1x1x8x32xf32>
    %94 = vector.shape_cast %93 : vector<1x1x8x32xf32> to vector<8x32xf32>
    %cst_82 = arith.constant dense<0.000000e+00> : vector<16x32xf32>
    %95 = tpu.matmul %92, %94, %cst_82 {dimension_numbers = #tpu.dot_dimension_numbers<[1], [0], [0], [1], [0, 0, 1, 1], [], []>} : vector<16x8xf32>, vector<8x32xf32>, vector<16x32xf32> -> vector<16x32xf32>
    %96 = arith.addf %51, %95 : vector<16x32xf32>
    %c0_83 = arith.constant 0 : index
    %c2_84 = arith.constant 2 : index
    %c0_85 = arith.constant 0 : index
    %c0_86 = arith.constant 0 : index
    %97 = vector.load %arg6[%c0_83, %c2_84, %c0_85, %c0_86] : memref<6x4x32x8xf32, #tpu.memory_space<vmem>>, vector<1x1x32x8xf32>
    %98 = vector.shape_cast %97 : vector<1x1x32x8xf32> to vector<32x8xf32>
    %cst_87 = arith.constant dense<0.000000e+00> : vector<16x8xf32>
    %99 = tpu.matmul %0, %98, %cst_87 {dimension_numbers = #tpu.dot_dimension_numbers<[1], [0], [0], [1], [0, 0, 1, 1], [], []>} : vector<16x32xf32>, vector<32x8xf32>, vector<16x8xf32> -> vector<16x8xf32>
    %c0_88 = arith.constant 0 : index
    %c2_89 = arith.constant 2 : index
    %c0_90 = arith.constant 0 : index
    %c0_91 = arith.constant 0 : index
    %100 = vector.load %arg7[%c0_88, %c2_89, %c0_90, %c0_91] : memref<6x4x1x8xf32, #tpu.memory_space<vmem>>, vector<1x1x1x8xf32>
    %101 = vector.shape_cast %100 : vector<1x1x1x8xf32> to vector<1x8xf32>
    %102 = vector.broadcast %101 : vector<1x8xf32> to vector<16x8xf32>
    %103 = arith.addf %99, %102 : vector<16x8xf32>
    %cst_92 = arith.constant 0.353553385 : f32
    %104 = vector.broadcast %cst_92 : f32 to vector<16x8xf32>
    %105 = arith.mulf %103, %104 : vector<16x8xf32>
    %c1_93 = arith.constant 1 : index
    %c2_94 = arith.constant 2 : index
    %c0_95 = arith.constant 0 : index
    %c0_96 = arith.constant 0 : index
    %106 = vector.load %arg6[%c1_93, %c2_94, %c0_95, %c0_96] : memref<6x4x32x8xf32, #tpu.memory_space<vmem>>, vector<1x1x32x8xf32>
    %107 = vector.shape_cast %106 : vector<1x1x32x8xf32> to vector<32x8xf32>
    %cst_97 = arith.constant dense<0.000000e+00> : vector<16x8xf32>
    %108 = tpu.matmul %0, %107, %cst_97 {dimension_numbers = #tpu.dot_dimension_numbers<[1], [0], [0], [1], [0, 0, 1, 1], [], []>} : vector<16x32xf32>, vector<32x8xf32>, vector<16x8xf32> -> vector<16x8xf32>
    %c1_98 = arith.constant 1 : index
    %c2_99 = arith.constant 2 : index
    %c0_100 = arith.constant 0 : index
    %c0_101 = arith.constant 0 : index
    %109 = vector.load %arg7[%c1_98, %c2_99, %c0_100, %c0_101] : memref<6x4x1x8xf32, #tpu.memory_space<vmem>>, vector<1x1x1x8xf32>
    %110 = vector.shape_cast %109 : vector<1x1x1x8xf32> to vector<1x8xf32>
    %111 = vector.broadcast %110 : vector<1x8xf32> to vector<16x8xf32>
    %112 = arith.addf %108, %111 : vector<16x8xf32>
    %c2_102 = arith.constant 2 : index
    %c2_103 = arith.constant 2 : index
    %c0_104 = arith.constant 0 : index
    %c0_105 = arith.constant 0 : index
    %113 = vector.load %arg6[%c2_102, %c2_103, %c0_104, %c0_105] : memref<6x4x32x8xf32, #tpu.memory_space<vmem>>, vector<1x1x32x8xf32>
    %114 = vector.shape_cast %113 : vector<1x1x32x8xf32> to vector<32x8xf32>
    %cst_106 = arith.constant dense<0.000000e+00> : vector<16x8xf32>
    %115 = tpu.matmul %0, %114, %cst_106 {dimension_numbers = #tpu.dot_dimension_numbers<[1], [0], [0], [1], [0, 0, 1, 1], [], []>} : vector<16x32xf32>, vector<32x8xf32>, vector<16x8xf32> -> vector<16x8xf32>
    %c2_107 = arith.constant 2 : index
    %c2_108 = arith.constant 2 : index
    %c0_109 = arith.constant 0 : index
    %c0_110 = arith.constant 0 : index
    %116 = vector.load %arg7[%c2_107, %c2_108, %c0_109, %c0_110] : memref<6x4x1x8xf32, #tpu.memory_space<vmem>>, vector<1x1x1x8xf32>
    %117 = vector.shape_cast %116 : vector<1x1x1x8xf32> to vector<1x8xf32>
    %118 = vector.broadcast %117 : vector<1x8xf32> to vector<16x8xf32>
    %119 = arith.addf %115, %118 : vector<16x8xf32>
    %120 = vector.shape_cast %105 : vector<16x8xf32> to vector<2x8x8xf32>
    %121 = vector.shape_cast %112 : vector<16x8xf32> to vector<2x8x8xf32>
    %122 = vector.shape_cast %119 : vector<16x8xf32> to vector<2x8x8xf32>
    "tpu.trace_start"() <{level = 10 : i32, message = "bqd,bkd->bqk"}> : () -> ()
    %cst_111 = arith.constant dense<0.000000e+00> : vector<2x8x8xf32>
    %123 = tpu.matmul %120, %121, %cst_111 {dimension_numbers = #tpu.dot_dimension_numbers<[2], [2], [1], [1], [0, 0, 0, 1, 1, 1], [0], [0]>} : vector<2x8x8xf32>, vector<2x8x8xf32>, vector<2x8x8xf32> -> vector<2x8x8xf32>
    "tpu.trace_stop"() : () -> ()
    %124 = vector.shape_cast %4 : vector<8x8xf32> to vector<1x8x8xf32>
    %125 = vector.broadcast %124 : vector<1x8x8xf32> to vector<2x8x8xf32>
    %126 = arith.addf %123, %125 : vector<2x8x8xf32>
    %cst_112 = arith.constant dense<0xFF800000> : vector<2x8xf32>
    %127 = vector.multi_reduction <maximumf>, %126, %cst_112 [2] : vector<2x8x8xf32> to vector<2x8xf32>
    %128 = vector.shape_cast %127 : vector<2x8xf32> to vector<2x8x1xf32>
    %129 = vector.broadcast %128 : vector<2x8x1xf32> to vector<2x8x8xf32>
    %130 = arith.subf %126, %129 : vector<2x8x8xf32>
    %131 = math.exp %130 : vector<2x8x8xf32>
    %cst_113 = arith.constant dense<0.000000e+00> : vector<2x8xf32>
    %132 = vector.multi_reduction <add>, %131, %cst_113 [2] : vector<2x8x8xf32> to vector<2x8xf32>
    %133 = vector.shape_cast %132 : vector<2x8xf32> to vector<2x8x1xf32>
    %134 = vector.broadcast %133 : vector<2x8x1xf32> to vector<2x8x8xf32>
    %135 = arith.divf %131, %134 : vector<2x8x8xf32>
    "tpu.trace_start"() <{level = 10 : i32, message = "bqk,bkd->bqd"}> : () -> ()
    %cst_114 = arith.constant dense<0.000000e+00> : vector<2x8x8xf32>
    %136 = tpu.matmul %135, %122, %cst_114 {dimension_numbers = #tpu.dot_dimension_numbers<[2], [1], [1], [2], [0, 0, 0, 1, 1, 2], [0], [0]>} : vector<2x8x8xf32>, vector<2x8x8xf32>, vector<2x8x8xf32> -> vector<2x8x8xf32>
    "tpu.trace_stop"() : () -> ()
    %137 = vector.shape_cast %136 : vector<2x8x8xf32> to vector<16x8xf32>
    %c0_115 = arith.constant 0 : index
    %c2_116 = arith.constant 2 : index
    %c0_117 = arith.constant 0 : index
    %c0_118 = arith.constant 0 : index
    %138 = vector.load %arg8[%c0_115, %c2_116, %c0_117, %c0_118] : memref<2x4x8x32xf32, #tpu.memory_space<vmem>>, vector<1x1x8x32xf32>
    %139 = vector.shape_cast %138 : vector<1x1x8x32xf32> to vector<8x32xf32>
    %cst_119 = arith.constant dense<0.000000e+00> : vector<16x32xf32>
    %140 = tpu.matmul %137, %139, %cst_119 {dimension_numbers = #tpu.dot_dimension_numbers<[1], [0], [0], [1], [0, 0, 1, 1], [], []>} : vector<16x8xf32>, vector<8x32xf32>, vector<16x32xf32> -> vector<16x32xf32>
    %141 = arith.addf %96, %140 : vector<16x32xf32>
    %c0_120 = arith.constant 0 : index
    %c3 = arith.constant 3 : index
    %c0_121 = arith.constant 0 : index
    %c0_122 = arith.constant 0 : index
    %142 = vector.load %arg6[%c0_120, %c3, %c0_121, %c0_122] : memref<6x4x32x8xf32, #tpu.memory_space<vmem>>, vector<1x1x32x8xf32>
    %143 = vector.shape_cast %142 : vector<1x1x32x8xf32> to vector<32x8xf32>
    %cst_123 = arith.constant dense<0.000000e+00> : vector<16x8xf32>
    %144 = tpu.matmul %0, %143, %cst_123 {dimension_numbers = #tpu.dot_dimension_numbers<[1], [0], [0], [1], [0, 0, 1, 1], [], []>} : vector<16x32xf32>, vector<32x8xf32>, vector<16x8xf32> -> vector<16x8xf32>
    %c0_124 = arith.constant 0 : index
    %c3_125 = arith.constant 3 : index
    %c0_126 = arith.constant 0 : index
    %c0_127 = arith.constant 0 : index
    %145 = vector.load %arg7[%c0_124, %c3_125, %c0_126, %c0_127] : memref<6x4x1x8xf32, #tpu.memory_space<vmem>>, vector<1x1x1x8xf32>
    %146 = vector.shape_cast %145 : vector<1x1x1x8xf32> to vector<1x8xf32>
    %147 = vector.broadcast %146 : vector<1x8xf32> to vector<16x8xf32>
    %148 = arith.addf %144, %147 : vector<16x8xf32>
    %cst_128 = arith.constant 0.353553385 : f32
    %149 = vector.broadcast %cst_128 : f32 to vector<16x8xf32>
    %150 = arith.mulf %148, %149 : vector<16x8xf32>
    %c1_129 = arith.constant 1 : index
    %c3_130 = arith.constant 3 : index
    %c0_131 = arith.constant 0 : index
    %c0_132 = arith.constant 0 : index
    %151 = vector.load %arg6[%c1_129, %c3_130, %c0_131, %c0_132] : memref<6x4x32x8xf32, #tpu.memory_space<vmem>>, vector<1x1x32x8xf32>
    %152 = vector.shape_cast %151 : vector<1x1x32x8xf32> to vector<32x8xf32>
    %cst_133 = arith.constant dense<0.000000e+00> : vector<16x8xf32>
    %153 = tpu.matmul %0, %152, %cst_133 {dimension_numbers = #tpu.dot_dimension_numbers<[1], [0], [0], [1], [0, 0, 1, 1], [], []>} : vector<16x32xf32>, vector<32x8xf32>, vector<16x8xf32> -> vector<16x8xf32>
    %c1_134 = arith.constant 1 : index
    %c3_135 = arith.constant 3 : index
    %c0_136 = arith.constant 0 : index
    %c0_137 = arith.constant 0 : index
    %154 = vector.load %arg7[%c1_134, %c3_135, %c0_136, %c0_137] : memref<6x4x1x8xf32, #tpu.memory_space<vmem>>, vector<1x1x1x8xf32>
    %155 = vector.shape_cast %154 : vector<1x1x1x8xf32> to vector<1x8xf32>
    %156 = vector.broadcast %155 : vector<1x8xf32> to vector<16x8xf32>
    %157 = arith.addf %153, %156 : vector<16x8xf32>
    %c2_138 = arith.constant 2 : index
    %c3_139 = arith.constant 3 : index
    %c0_140 = arith.constant 0 : index
    %c0_141 = arith.constant 0 : index
    %158 = vector.load %arg6[%c2_138, %c3_139, %c0_140, %c0_141] : memref<6x4x32x8xf32, #tpu.memory_space<vmem>>, vector<1x1x32x8xf32>
    %159 = vector.shape_cast %158 : vector<1x1x32x8xf32> to vector<32x8xf32>
    %cst_142 = arith.constant dense<0.000000e+00> : vector<16x8xf32>
    %160 = tpu.matmul %0, %159, %cst_142 {dimension_numbers = #tpu.dot_dimension_numbers<[1], [0], [0], [1], [0, 0, 1, 1], [], []>} : vector<16x32xf32>, vector<32x8xf32>, vector<16x8xf32> -> vector<16x8xf32>
    %c2_143 = arith.constant 2 : index
    %c3_144 = arith.constant 3 : index
    %c0_145 = arith.constant 0 : index
    %c0_146 = arith.constant 0 : index
    %161 = vector.load %arg7[%c2_143, %c3_144, %c0_145, %c0_146] : memref<6x4x1x8xf32, #tpu.memory_space<vmem>>, vector<1x1x1x8xf32>
    %162 = vector.shape_cast %161 : vector<1x1x1x8xf32> to vector<1x8xf32>
    %163 = vector.broadcast %162 : vector<1x8xf32> to vector<16x8xf32>
    %164 = arith.addf %160, %163 : vector<16x8xf32>
    %165 = vector.shape_cast %150 : vector<16x8xf32> to vector<2x8x8xf32>
    %166 = vector.shape_cast %157 : vector<16x8xf32> to vector<2x8x8xf32>
    %167 = vector.shape_cast %164 : vector<16x8xf32> to vector<2x8x8xf32>
    "tpu.trace_start"() <{level = 10 : i32, message = "bqd,bkd->bqk"}> : () -> ()
    %cst_147 = arith.constant dense<0.000000e+00> : vector<2x8x8xf32>
    %168 = tpu.matmul %165, %166, %cst_147 {dimension_numbers = #tpu.dot_dimension_numbers<[2], [2], [1], [1], [0, 0, 0, 1, 1, 1], [0], [0]>} : vector<2x8x8xf32>, vector<2x8x8xf32>, vector<2x8x8xf32> -> vector<2x8x8xf32>
    "tpu.trace_stop"() : () -> ()
    %169 = vector.shape_cast %4 : vector<8x8xf32> to vector<1x8x8xf32>
    %170 = vector.broadcast %169 : vector<1x8x8xf32> to vector<2x8x8xf32>
    %171 = arith.addf %168, %170 : vector<2x8x8xf32>
    %cst_148 = arith.constant dense<0xFF800000> : vector<2x8xf32>
    %172 = vector.multi_reduction <maximumf>, %171, %cst_148 [2] : vector<2x8x8xf32> to vector<2x8xf32>
    %173 = vector.shape_cast %172 : vector<2x8xf32> to vector<2x8x1xf32>
    %174 = vector.broadcast %173 : vector<2x8x1xf32> to vector<2x8x8xf32>
    %175 = arith.subf %171, %174 : vector<2x8x8xf32>
    %176 = math.exp %175 : vector<2x8x8xf32>
    %cst_149 = arith.constant dense<0.000000e+00> : vector<2x8xf32>
    %177 = vector.multi_reduction <add>, %176, %cst_149 [2] : vector<2x8x8xf32> to vector<2x8xf32>
    %178 = vector.shape_cast %177 : vector<2x8xf32> to vector<2x8x1xf32>
    %179 = vector.broadcast %178 : vector<2x8x1xf32> to vector<2x8x8xf32>
    %180 = arith.divf %176, %179 : vector<2x8x8xf32>
    "tpu.trace_start"() <{level = 10 : i32, message = "bqk,bkd->bqd"}> : () -> ()
    %cst_150 = arith.constant dense<0.000000e+00> : vector<2x8x8xf32>
    %181 = tpu.matmul %180, %167, %cst_150 {dimension_numbers = #tpu.dot_dimension_numbers<[2], [1], [1], [2], [0, 0, 0, 1, 1, 2], [0], [0]>} : vector<2x8x8xf32>, vector<2x8x8xf32>, vector<2x8x8xf32> -> vector<2x8x8xf32>
    "tpu.trace_stop"() : () -> ()
    %182 = vector.shape_cast %181 : vector<2x8x8xf32> to vector<16x8xf32>
    %c0_151 = arith.constant 0 : index
    %c3_152 = arith.constant 3 : index
    %c0_153 = arith.constant 0 : index
    %c0_154 = arith.constant 0 : index
    %183 = vector.load %arg8[%c0_151, %c3_152, %c0_153, %c0_154] : memref<2x4x8x32xf32, #tpu.memory_space<vmem>>, vector<1x1x8x32xf32>
    %184 = vector.shape_cast %183 : vector<1x1x8x32xf32> to vector<8x32xf32>
    %cst_155 = arith.constant dense<0.000000e+00> : vector<16x32xf32>
    %185 = tpu.matmul %182, %184, %cst_155 {dimension_numbers = #tpu.dot_dimension_numbers<[1], [0], [0], [1], [0, 0, 1, 1], [], []>} : vector<16x8xf32>, vector<8x32xf32>, vector<16x32xf32> -> vector<16x32xf32>
    %186 = arith.addf %141, %185 : vector<16x32xf32>
    %c0_156 = arith.constant 0 : index
    %c0_157 = arith.constant 0 : index
    %c0_158 = arith.constant 0 : index
    %187 = vector.load %arg9[%c0_156, %c0_157, %c0_158] : memref<9x1x32xf32, #tpu.memory_space<vmem>>, vector<1x1x32xf32>
    %188 = vector.shape_cast %187 : vector<1x1x32xf32> to vector<1x32xf32>
    %189 = vector.broadcast %188 : vector<1x32xf32> to vector<16x32xf32>
    %190 = arith.addf %186, %189 : vector<16x32xf32>
    %191 = arith.addf %190, %0 : vector<16x32xf32>
    %c1_159 = arith.constant 1 : index
    %c0_160 = arith.constant 0 : index
    %c0_161 = arith.constant 0 : index
    %192 = vector.load %arg9[%c1_159, %c0_160, %c0_161] : memref<9x1x32xf32, #tpu.memory_space<vmem>>, vector<1x1x32xf32>
    %193 = vector.shape_cast %192 : vector<1x1x32xf32> to vector<1x32xf32>
    %c2_162 = arith.constant 2 : index
    %c0_163 = arith.constant 0 : index
    %c0_164 = arith.constant 0 : index
    %194 = vector.load %arg9[%c2_162, %c0_163, %c0_164] : memref<9x1x32xf32, #tpu.memory_space<vmem>>, vector<1x1x32xf32>
    %195 = vector.shape_cast %194 : vector<1x1x32xf32> to vector<1x32xf32>
    %cst_165 = arith.constant dense<0.000000e+00> : vector<16xf32>
    %196 = vector.multi_reduction <add>, %191, %cst_165 [1] : vector<16x32xf32> to vector<16xf32>
    %197 = vector.shape_cast %196 : vector<16xf32> to vector<16x1xf32>
    %cst_166 = arith.constant 3.200000e+01 : f32
    %198 = vector.broadcast %cst_166 : f32 to vector<16x1xf32>
    %199 = arith.divf %197, %198 : vector<16x1xf32>
    %200 = vector.broadcast %199 : vector<16x1xf32> to vector<16x32xf32>
    %201 = arith.subf %191, %200 : vector<16x32xf32>
    %202 = arith.mulf %201, %201 : vector<16x32xf32>
    %cst_167 = arith.constant dense<0.000000e+00> : vector<16xf32>
    %203 = vector.multi_reduction <add>, %202, %cst_167 [1] : vector<16x32xf32> to vector<16xf32>
    %204 = vector.shape_cast %203 : vector<16xf32> to vector<16x1xf32>
    %cst_168 = arith.constant 3.200000e+01 : f32
    %205 = vector.broadcast %cst_168 : f32 to vector<16x1xf32>
    %206 = arith.divf %204, %205 : vector<16x1xf32>
    %207 = vector.broadcast %199 : vector<16x1xf32> to vector<16x32xf32>
    %208 = arith.subf %191, %207 : vector<16x32xf32>
    %cst_169 = arith.constant 9.99999974E-6 : f32
    %209 = vector.broadcast %cst_169 : f32 to vector<16x1xf32>
    %210 = arith.addf %206, %209 : vector<16x1xf32>
    %211 = math.rsqrt %210 : vector<16x1xf32>
    %212 = vector.broadcast %211 : vector<16x1xf32> to vector<16x32xf32>
    %213 = arith.mulf %208, %212 : vector<16x32xf32>
    %214 = vector.broadcast %193 : vector<1x32xf32> to vector<16x32xf32>
    %215 = arith.mulf %213, %214 : vector<16x32xf32>
    %216 = vector.broadcast %195 : vector<1x32xf32> to vector<16x32xf32>
    %217 = arith.addf %215, %216 : vector<16x32xf32>
    %cst_170 = arith.constant 0.000000e+00 : f32
    %218 = vector.broadcast %cst_170 : f32 to vector<16x32xf32>
    %c3_171 = arith.constant 3 : index
    %c0_172 = arith.constant 0 : index
    %c0_173 = arith.constant 0 : index
    %c0_174 = arith.constant 0 : index
    %219 = vector.load %arg6[%c3_171, %c0_172, %c0_173, %c0_174] : memref<6x4x32x8xf32, #tpu.memory_space<vmem>>, vector<1x1x32x8xf32>
    %220 = vector.shape_cast %219 : vector<1x1x32x8xf32> to vector<32x8xf32>
    %cst_175 = arith.constant dense<0.000000e+00> : vector<16x8xf32>
    %221 = tpu.matmul %217, %220, %cst_175 {dimension_numbers = #tpu.dot_dimension_numbers<[1], [0], [0], [1], [0, 0, 1, 1], [], []>} : vector<16x32xf32>, vector<32x8xf32>, vector<16x8xf32> -> vector<16x8xf32>
    %c3_176 = arith.constant 3 : index
    %c0_177 = arith.constant 0 : index
    %c0_178 = arith.constant 0 : index
    %c0_179 = arith.constant 0 : index
    %222 = vector.load %arg7[%c3_176, %c0_177, %c0_178, %c0_179] : memref<6x4x1x8xf32, #tpu.memory_space<vmem>>, vector<1x1x1x8xf32>
    %223 = vector.shape_cast %222 : vector<1x1x1x8xf32> to vector<1x8xf32>
    %224 = vector.broadcast %223 : vector<1x8xf32> to vector<16x8xf32>
    %225 = arith.addf %221, %224 : vector<16x8xf32>
    %cst_180 = arith.constant 0.353553385 : f32
    %226 = vector.broadcast %cst_180 : f32 to vector<16x8xf32>
    %227 = arith.mulf %225, %226 : vector<16x8xf32>
    %c4 = arith.constant 4 : index
    %c0_181 = arith.constant 0 : index
    %c0_182 = arith.constant 0 : index
    %c0_183 = arith.constant 0 : index
    %228 = vector.load %arg6[%c4, %c0_181, %c0_182, %c0_183] : memref<6x4x32x8xf32, #tpu.memory_space<vmem>>, vector<1x1x32x8xf32>
    %229 = vector.shape_cast %228 : vector<1x1x32x8xf32> to vector<32x8xf32>
    %cst_184 = arith.constant dense<0.000000e+00> : vector<32x8xf32>
    %230 = tpu.matmul %1, %229, %cst_184 {dimension_numbers = #tpu.dot_dimension_numbers<[1], [0], [0], [1], [0, 0, 1, 1], [], []>} : vector<32x32xf32>, vector<32x8xf32>, vector<32x8xf32> -> vector<32x8xf32>
    %c4_185 = arith.constant 4 : index
    %c0_186 = arith.constant 0 : index
    %c0_187 = arith.constant 0 : index
    %c0_188 = arith.constant 0 : index
    %231 = vector.load %arg7[%c4_185, %c0_186, %c0_187, %c0_188] : memref<6x4x1x8xf32, #tpu.memory_space<vmem>>, vector<1x1x1x8xf32>
    %232 = vector.shape_cast %231 : vector<1x1x1x8xf32> to vector<1x8xf32>
    %233 = vector.broadcast %232 : vector<1x8xf32> to vector<32x8xf32>
    %234 = arith.addf %230, %233 : vector<32x8xf32>
    %c5 = arith.constant 5 : index
    %c0_189 = arith.constant 0 : index
    %c0_190 = arith.constant 0 : index
    %c0_191 = arith.constant 0 : index
    %235 = vector.load %arg6[%c5, %c0_189, %c0_190, %c0_191] : memref<6x4x32x8xf32, #tpu.memory_space<vmem>>, vector<1x1x32x8xf32>
    %236 = vector.shape_cast %235 : vector<1x1x32x8xf32> to vector<32x8xf32>
    %cst_192 = arith.constant dense<0.000000e+00> : vector<32x8xf32>
    %237 = tpu.matmul %2, %236, %cst_192 {dimension_numbers = #tpu.dot_dimension_numbers<[1], [0], [0], [1], [0, 0, 1, 1], [], []>} : vector<32x32xf32>, vector<32x8xf32>, vector<32x8xf32> -> vector<32x8xf32>
    %c5_193 = arith.constant 5 : index
    %c0_194 = arith.constant 0 : index
    %c0_195 = arith.constant 0 : index
    %c0_196 = arith.constant 0 : index
    %238 = vector.load %arg7[%c5_193, %c0_194, %c0_195, %c0_196] : memref<6x4x1x8xf32, #tpu.memory_space<vmem>>, vector<1x1x1x8xf32>
    %239 = vector.shape_cast %238 : vector<1x1x1x8xf32> to vector<1x8xf32>
    %240 = vector.broadcast %239 : vector<1x8xf32> to vector<32x8xf32>
    %241 = arith.addf %237, %240 : vector<32x8xf32>
    %242 = vector.shape_cast %227 : vector<16x8xf32> to vector<2x8x8xf32>
    %243 = vector.shape_cast %234 : vector<32x8xf32> to vector<2x16x8xf32>
    %244 = vector.shape_cast %241 : vector<32x8xf32> to vector<2x16x8xf32>
    "tpu.trace_start"() <{level = 10 : i32, message = "bqd,bkd->bqk"}> : () -> ()
    %cst_197 = arith.constant dense<0.000000e+00> : vector<2x8x16xf32>
    %245 = tpu.matmul %242, %243, %cst_197 {dimension_numbers = #tpu.dot_dimension_numbers<[2], [2], [1], [1], [0, 0, 0, 1, 1, 1], [0], [0]>} : vector<2x8x8xf32>, vector<2x16x8xf32>, vector<2x8x16xf32> -> vector<2x8x16xf32>
    "tpu.trace_stop"() : () -> ()
    %246 = vector.broadcast %5 : vector<2x1x16xf32> to vector<2x8x16xf32>
    %247 = arith.addf %245, %246 : vector<2x8x16xf32>
    %cst_198 = arith.constant dense<0xFF800000> : vector<2x8xf32>
    %248 = vector.multi_reduction <maximumf>, %247, %cst_198 [2] : vector<2x8x16xf32> to vector<2x8xf32>
    %249 = vector.shape_cast %248 : vector<2x8xf32> to vector<2x8x1xf32>
    %250 = vector.broadcast %249 : vector<2x8x1xf32> to vector<2x8x16xf32>
    %251 = arith.subf %247, %250 : vector<2x8x16xf32>
    %252 = math.exp %251 : vector<2x8x16xf32>
    %cst_199 = arith.constant dense<0.000000e+00> : vector<2x8xf32>
    %253 = vector.multi_reduction <add>, %252, %cst_199 [2] : vector<2x8x16xf32> to vector<2x8xf32>
    %254 = vector.shape_cast %253 : vector<2x8xf32> to vector<2x8x1xf32>
    %255 = vector.broadcast %254 : vector<2x8x1xf32> to vector<2x8x16xf32>
    %256 = arith.divf %252, %255 : vector<2x8x16xf32>
    "tpu.trace_start"() <{level = 10 : i32, message = "bqk,bkd->bqd"}> : () -> ()
    %cst_200 = arith.constant dense<0.000000e+00> : vector<2x8x8xf32>
    %257 = tpu.matmul %256, %244, %cst_200 {dimension_numbers = #tpu.dot_dimension_numbers<[2], [1], [1], [2], [0, 0, 0, 1, 1, 2], [0], [0]>} : vector<2x8x16xf32>, vector<2x16x8xf32>, vector<2x8x8xf32> -> vector<2x8x8xf32>
    "tpu.trace_stop"() : () -> ()
    %258 = vector.shape_cast %257 : vector<2x8x8xf32> to vector<16x8xf32>
    %c1_201 = arith.constant 1 : index
    %c0_202 = arith.constant 0 : index
    %c0_203 = arith.constant 0 : index
    %c0_204 = arith.constant 0 : index
    %259 = vector.load %arg8[%c1_201, %c0_202, %c0_203, %c0_204] : memref<2x4x8x32xf32, #tpu.memory_space<vmem>>, vector<1x1x8x32xf32>
    %260 = vector.shape_cast %259 : vector<1x1x8x32xf32> to vector<8x32xf32>
    %cst_205 = arith.constant dense<0.000000e+00> : vector<16x32xf32>
    %261 = tpu.matmul %258, %260, %cst_205 {dimension_numbers = #tpu.dot_dimension_numbers<[1], [0], [0], [1], [0, 0, 1, 1], [], []>} : vector<16x8xf32>, vector<8x32xf32>, vector<16x32xf32> -> vector<16x32xf32>
    %262 = arith.addf %218, %261 : vector<16x32xf32>
    %c3_206 = arith.constant 3 : index
    %c1_207 = arith.constant 1 : index
    %c0_208 = arith.constant 0 : index
    %c0_209 = arith.constant 0 : index
    %263 = vector.load %arg6[%c3_206, %c1_207, %c0_208, %c0_209] : memref<6x4x32x8xf32, #tpu.memory_space<vmem>>, vector<1x1x32x8xf32>
    %264 = vector.shape_cast %263 : vector<1x1x32x8xf32> to vector<32x8xf32>
    %cst_210 = arith.constant dense<0.000000e+00> : vector<16x8xf32>
    %265 = tpu.matmul %217, %264, %cst_210 {dimension_numbers = #tpu.dot_dimension_numbers<[1], [0], [0], [1], [0, 0, 1, 1], [], []>} : vector<16x32xf32>, vector<32x8xf32>, vector<16x8xf32> -> vector<16x8xf32>
    %c3_211 = arith.constant 3 : index
    %c1_212 = arith.constant 1 : index
    %c0_213 = arith.constant 0 : index
    %c0_214 = arith.constant 0 : index
    %266 = vector.load %arg7[%c3_211, %c1_212, %c0_213, %c0_214] : memref<6x4x1x8xf32, #tpu.memory_space<vmem>>, vector<1x1x1x8xf32>
    %267 = vector.shape_cast %266 : vector<1x1x1x8xf32> to vector<1x8xf32>
    %268 = vector.broadcast %267 : vector<1x8xf32> to vector<16x8xf32>
    %269 = arith.addf %265, %268 : vector<16x8xf32>
    %cst_215 = arith.constant 0.353553385 : f32
    %270 = vector.broadcast %cst_215 : f32 to vector<16x8xf32>
    %271 = arith.mulf %269, %270 : vector<16x8xf32>
    %c4_216 = arith.constant 4 : index
    %c1_217 = arith.constant 1 : index
    %c0_218 = arith.constant 0 : index
    %c0_219 = arith.constant 0 : index
    %272 = vector.load %arg6[%c4_216, %c1_217, %c0_218, %c0_219] : memref<6x4x32x8xf32, #tpu.memory_space<vmem>>, vector<1x1x32x8xf32>
    %273 = vector.shape_cast %272 : vector<1x1x32x8xf32> to vector<32x8xf32>
    %cst_220 = arith.constant dense<0.000000e+00> : vector<32x8xf32>
    %274 = tpu.matmul %1, %273, %cst_220 {dimension_numbers = #tpu.dot_dimension_numbers<[1], [0], [0], [1], [0, 0, 1, 1], [], []>} : vector<32x32xf32>, vector<32x8xf32>, vector<32x8xf32> -> vector<32x8xf32>
    %c4_221 = arith.constant 4 : index
    %c1_222 = arith.constant 1 : index
    %c0_223 = arith.constant 0 : index
    %c0_224 = arith.constant 0 : index
    %275 = vector.load %arg7[%c4_221, %c1_222, %c0_223, %c0_224] : memref<6x4x1x8xf32, #tpu.memory_space<vmem>>, vector<1x1x1x8xf32>
    %276 = vector.shape_cast %275 : vector<1x1x1x8xf32> to vector<1x8xf32>
    %277 = vector.broadcast %276 : vector<1x8xf32> to vector<32x8xf32>
    %278 = arith.addf %274, %277 : vector<32x8xf32>
    %c5_225 = arith.constant 5 : index
    %c1_226 = arith.constant 1 : index
    %c0_227 = arith.constant 0 : index
    %c0_228 = arith.constant 0 : index
    %279 = vector.load %arg6[%c5_225, %c1_226, %c0_227, %c0_228] : memref<6x4x32x8xf32, #tpu.memory_space<vmem>>, vector<1x1x32x8xf32>
    %280 = vector.shape_cast %279 : vector<1x1x32x8xf32> to vector<32x8xf32>
    %cst_229 = arith.constant dense<0.000000e+00> : vector<32x8xf32>
    %281 = tpu.matmul %2, %280, %cst_229 {dimension_numbers = #tpu.dot_dimension_numbers<[1], [0], [0], [1], [0, 0, 1, 1], [], []>} : vector<32x32xf32>, vector<32x8xf32>, vector<32x8xf32> -> vector<32x8xf32>
    %c5_230 = arith.constant 5 : index
    %c1_231 = arith.constant 1 : index
    %c0_232 = arith.constant 0 : index
    %c0_233 = arith.constant 0 : index
    %282 = vector.load %arg7[%c5_230, %c1_231, %c0_232, %c0_233] : memref<6x4x1x8xf32, #tpu.memory_space<vmem>>, vector<1x1x1x8xf32>
    %283 = vector.shape_cast %282 : vector<1x1x1x8xf32> to vector<1x8xf32>
    %284 = vector.broadcast %283 : vector<1x8xf32> to vector<32x8xf32>
    %285 = arith.addf %281, %284 : vector<32x8xf32>
    %286 = vector.shape_cast %271 : vector<16x8xf32> to vector<2x8x8xf32>
    %287 = vector.shape_cast %278 : vector<32x8xf32> to vector<2x16x8xf32>
    %288 = vector.shape_cast %285 : vector<32x8xf32> to vector<2x16x8xf32>
    "tpu.trace_start"() <{level = 10 : i32, message = "bqd,bkd->bqk"}> : () -> ()
    %cst_234 = arith.constant dense<0.000000e+00> : vector<2x8x16xf32>
    %289 = tpu.matmul %286, %287, %cst_234 {dimension_numbers = #tpu.dot_dimension_numbers<[2], [2], [1], [1], [0, 0, 0, 1, 1, 1], [0], [0]>} : vector<2x8x8xf32>, vector<2x16x8xf32>, vector<2x8x16xf32> -> vector<2x8x16xf32>
    "tpu.trace_stop"() : () -> ()
    %290 = vector.broadcast %5 : vector<2x1x16xf32> to vector<2x8x16xf32>
    %291 = arith.addf %289, %290 : vector<2x8x16xf32>
    %cst_235 = arith.constant dense<0xFF800000> : vector<2x8xf32>
    %292 = vector.multi_reduction <maximumf>, %291, %cst_235 [2] : vector<2x8x16xf32> to vector<2x8xf32>
    %293 = vector.shape_cast %292 : vector<2x8xf32> to vector<2x8x1xf32>
    %294 = vector.broadcast %293 : vector<2x8x1xf32> to vector<2x8x16xf32>
    %295 = arith.subf %291, %294 : vector<2x8x16xf32>
    %296 = math.exp %295 : vector<2x8x16xf32>
    %cst_236 = arith.constant dense<0.000000e+00> : vector<2x8xf32>
    %297 = vector.multi_reduction <add>, %296, %cst_236 [2] : vector<2x8x16xf32> to vector<2x8xf32>
    %298 = vector.shape_cast %297 : vector<2x8xf32> to vector<2x8x1xf32>
    %299 = vector.broadcast %298 : vector<2x8x1xf32> to vector<2x8x16xf32>
    %300 = arith.divf %296, %299 : vector<2x8x16xf32>
    "tpu.trace_start"() <{level = 10 : i32, message = "bqk,bkd->bqd"}> : () -> ()
    %cst_237 = arith.constant dense<0.000000e+00> : vector<2x8x8xf32>
    %301 = tpu.matmul %300, %288, %cst_237 {dimension_numbers = #tpu.dot_dimension_numbers<[2], [1], [1], [2], [0, 0, 0, 1, 1, 2], [0], [0]>} : vector<2x8x16xf32>, vector<2x16x8xf32>, vector<2x8x8xf32> -> vector<2x8x8xf32>
    "tpu.trace_stop"() : () -> ()
    %302 = vector.shape_cast %301 : vector<2x8x8xf32> to vector<16x8xf32>
    %c1_238 = arith.constant 1 : index
    %c1_239 = arith.constant 1 : index
    %c0_240 = arith.constant 0 : index
    %c0_241 = arith.constant 0 : index
    %303 = vector.load %arg8[%c1_238, %c1_239, %c0_240, %c0_241] : memref<2x4x8x32xf32, #tpu.memory_space<vmem>>, vector<1x1x8x32xf32>
    %304 = vector.shape_cast %303 : vector<1x1x8x32xf32> to vector<8x32xf32>
    %cst_242 = arith.constant dense<0.000000e+00> : vector<16x32xf32>
    %305 = tpu.matmul %302, %304, %cst_242 {dimension_numbers = #tpu.dot_dimension_numbers<[1], [0], [0], [1], [0, 0, 1, 1], [], []>} : vector<16x8xf32>, vector<8x32xf32>, vector<16x32xf32> -> vector<16x32xf32>
    %306 = arith.addf %262, %305 : vector<16x32xf32>
    %c3_243 = arith.constant 3 : index
    %c2_244 = arith.constant 2 : index
    %c0_245 = arith.constant 0 : index
    %c0_246 = arith.constant 0 : index
    %307 = vector.load %arg6[%c3_243, %c2_244, %c0_245, %c0_246] : memref<6x4x32x8xf32, #tpu.memory_space<vmem>>, vector<1x1x32x8xf32>
    %308 = vector.shape_cast %307 : vector<1x1x32x8xf32> to vector<32x8xf32>
    %cst_247 = arith.constant dense<0.000000e+00> : vector<16x8xf32>
    %309 = tpu.matmul %217, %308, %cst_247 {dimension_numbers = #tpu.dot_dimension_numbers<[1], [0], [0], [1], [0, 0, 1, 1], [], []>} : vector<16x32xf32>, vector<32x8xf32>, vector<16x8xf32> -> vector<16x8xf32>
    %c3_248 = arith.constant 3 : index
    %c2_249 = arith.constant 2 : index
    %c0_250 = arith.constant 0 : index
    %c0_251 = arith.constant 0 : index
    %310 = vector.load %arg7[%c3_248, %c2_249, %c0_250, %c0_251] : memref<6x4x1x8xf32, #tpu.memory_space<vmem>>, vector<1x1x1x8xf32>
    %311 = vector.shape_cast %310 : vector<1x1x1x8xf32> to vector<1x8xf32>
    %312 = vector.broadcast %311 : vector<1x8xf32> to vector<16x8xf32>
    %313 = arith.addf %309, %312 : vector<16x8xf32>
    %cst_252 = arith.constant 0.353553385 : f32
    %314 = vector.broadcast %cst_252 : f32 to vector<16x8xf32>
    %315 = arith.mulf %313, %314 : vector<16x8xf32>
    %c4_253 = arith.constant 4 : index
    %c2_254 = arith.constant 2 : index
    %c0_255 = arith.constant 0 : index
    %c0_256 = arith.constant 0 : index
    %316 = vector.load %arg6[%c4_253, %c2_254, %c0_255, %c0_256] : memref<6x4x32x8xf32, #tpu.memory_space<vmem>>, vector<1x1x32x8xf32>
    %317 = vector.shape_cast %316 : vector<1x1x32x8xf32> to vector<32x8xf32>
    %cst_257 = arith.constant dense<0.000000e+00> : vector<32x8xf32>
    %318 = tpu.matmul %1, %317, %cst_257 {dimension_numbers = #tpu.dot_dimension_numbers<[1], [0], [0], [1], [0, 0, 1, 1], [], []>} : vector<32x32xf32>, vector<32x8xf32>, vector<32x8xf32> -> vector<32x8xf32>
    %c4_258 = arith.constant 4 : index
    %c2_259 = arith.constant 2 : index
    %c0_260 = arith.constant 0 : index
    %c0_261 = arith.constant 0 : index
    %319 = vector.load %arg7[%c4_258, %c2_259, %c0_260, %c0_261] : memref<6x4x1x8xf32, #tpu.memory_space<vmem>>, vector<1x1x1x8xf32>
    %320 = vector.shape_cast %319 : vector<1x1x1x8xf32> to vector<1x8xf32>
    %321 = vector.broadcast %320 : vector<1x8xf32> to vector<32x8xf32>
    %322 = arith.addf %318, %321 : vector<32x8xf32>
    %c5_262 = arith.constant 5 : index
    %c2_263 = arith.constant 2 : index
    %c0_264 = arith.constant 0 : index
    %c0_265 = arith.constant 0 : index
    %323 = vector.load %arg6[%c5_262, %c2_263, %c0_264, %c0_265] : memref<6x4x32x8xf32, #tpu.memory_space<vmem>>, vector<1x1x32x8xf32>
    %324 = vector.shape_cast %323 : vector<1x1x32x8xf32> to vector<32x8xf32>
    %cst_266 = arith.constant dense<0.000000e+00> : vector<32x8xf32>
    %325 = tpu.matmul %2, %324, %cst_266 {dimension_numbers = #tpu.dot_dimension_numbers<[1], [0], [0], [1], [0, 0, 1, 1], [], []>} : vector<32x32xf32>, vector<32x8xf32>, vector<32x8xf32> -> vector<32x8xf32>
    %c5_267 = arith.constant 5 : index
    %c2_268 = arith.constant 2 : index
    %c0_269 = arith.constant 0 : index
    %c0_270 = arith.constant 0 : index
    %326 = vector.load %arg7[%c5_267, %c2_268, %c0_269, %c0_270] : memref<6x4x1x8xf32, #tpu.memory_space<vmem>>, vector<1x1x1x8xf32>
    %327 = vector.shape_cast %326 : vector<1x1x1x8xf32> to vector<1x8xf32>
    %328 = vector.broadcast %327 : vector<1x8xf32> to vector<32x8xf32>
    %329 = arith.addf %325, %328 : vector<32x8xf32>
    %330 = vector.shape_cast %315 : vector<16x8xf32> to vector<2x8x8xf32>
    %331 = vector.shape_cast %322 : vector<32x8xf32> to vector<2x16x8xf32>
    %332 = vector.shape_cast %329 : vector<32x8xf32> to vector<2x16x8xf32>
    "tpu.trace_start"() <{level = 10 : i32, message = "bqd,bkd->bqk"}> : () -> ()
    %cst_271 = arith.constant dense<0.000000e+00> : vector<2x8x16xf32>
    %333 = tpu.matmul %330, %331, %cst_271 {dimension_numbers = #tpu.dot_dimension_numbers<[2], [2], [1], [1], [0, 0, 0, 1, 1, 1], [0], [0]>} : vector<2x8x8xf32>, vector<2x16x8xf32>, vector<2x8x16xf32> -> vector<2x8x16xf32>
    "tpu.trace_stop"() : () -> ()
    %334 = vector.broadcast %5 : vector<2x1x16xf32> to vector<2x8x16xf32>
    %335 = arith.addf %333, %334 : vector<2x8x16xf32>
    %cst_272 = arith.constant dense<0xFF800000> : vector<2x8xf32>
    %336 = vector.multi_reduction <maximumf>, %335, %cst_272 [2] : vector<2x8x16xf32> to vector<2x8xf32>
    %337 = vector.shape_cast %336 : vector<2x8xf32> to vector<2x8x1xf32>
    %338 = vector.broadcast %337 : vector<2x8x1xf32> to vector<2x8x16xf32>
    %339 = arith.subf %335, %338 : vector<2x8x16xf32>
    %340 = math.exp %339 : vector<2x8x16xf32>
    %cst_273 = arith.constant dense<0.000000e+00> : vector<2x8xf32>
    %341 = vector.multi_reduction <add>, %340, %cst_273 [2] : vector<2x8x16xf32> to vector<2x8xf32>
    %342 = vector.shape_cast %341 : vector<2x8xf32> to vector<2x8x1xf32>
    %343 = vector.broadcast %342 : vector<2x8x1xf32> to vector<2x8x16xf32>
    %344 = arith.divf %340, %343 : vector<2x8x16xf32>
    "tpu.trace_start"() <{level = 10 : i32, message = "bqk,bkd->bqd"}> : () -> ()
    %cst_274 = arith.constant dense<0.000000e+00> : vector<2x8x8xf32>
    %345 = tpu.matmul %344, %332, %cst_274 {dimension_numbers = #tpu.dot_dimension_numbers<[2], [1], [1], [2], [0, 0, 0, 1, 1, 2], [0], [0]>} : vector<2x8x16xf32>, vector<2x16x8xf32>, vector<2x8x8xf32> -> vector<2x8x8xf32>
    "tpu.trace_stop"() : () -> ()
    %346 = vector.shape_cast %345 : vector<2x8x8xf32> to vector<16x8xf32>
    %c1_275 = arith.constant 1 : index
    %c2_276 = arith.constant 2 : index
    %c0_277 = arith.constant 0 : index
    %c0_278 = arith.constant 0 : index
    %347 = vector.load %arg8[%c1_275, %c2_276, %c0_277, %c0_278] : memref<2x4x8x32xf32, #tpu.memory_space<vmem>>, vector<1x1x8x32xf32>
    %348 = vector.shape_cast %347 : vector<1x1x8x32xf32> to vector<8x32xf32>
    %cst_279 = arith.constant dense<0.000000e+00> : vector<16x32xf32>
    %349 = tpu.matmul %346, %348, %cst_279 {dimension_numbers = #tpu.dot_dimension_numbers<[1], [0], [0], [1], [0, 0, 1, 1], [], []>} : vector<16x8xf32>, vector<8x32xf32>, vector<16x32xf32> -> vector<16x32xf32>
    %350 = arith.addf %306, %349 : vector<16x32xf32>
    %c3_280 = arith.constant 3 : index
    %c3_281 = arith.constant 3 : index
    %c0_282 = arith.constant 0 : index
    %c0_283 = arith.constant 0 : index
    %351 = vector.load %arg6[%c3_280, %c3_281, %c0_282, %c0_283] : memref<6x4x32x8xf32, #tpu.memory_space<vmem>>, vector<1x1x32x8xf32>
    %352 = vector.shape_cast %351 : vector<1x1x32x8xf32> to vector<32x8xf32>
    %cst_284 = arith.constant dense<0.000000e+00> : vector<16x8xf32>
    %353 = tpu.matmul %217, %352, %cst_284 {dimension_numbers = #tpu.dot_dimension_numbers<[1], [0], [0], [1], [0, 0, 1, 1], [], []>} : vector<16x32xf32>, vector<32x8xf32>, vector<16x8xf32> -> vector<16x8xf32>
    %c3_285 = arith.constant 3 : index
    %c3_286 = arith.constant 3 : index
    %c0_287 = arith.constant 0 : index
    %c0_288 = arith.constant 0 : index
    %354 = vector.load %arg7[%c3_285, %c3_286, %c0_287, %c0_288] : memref<6x4x1x8xf32, #tpu.memory_space<vmem>>, vector<1x1x1x8xf32>
    %355 = vector.shape_cast %354 : vector<1x1x1x8xf32> to vector<1x8xf32>
    %356 = vector.broadcast %355 : vector<1x8xf32> to vector<16x8xf32>
    %357 = arith.addf %353, %356 : vector<16x8xf32>
    %cst_289 = arith.constant 0.353553385 : f32
    %358 = vector.broadcast %cst_289 : f32 to vector<16x8xf32>
    %359 = arith.mulf %357, %358 : vector<16x8xf32>
    %c4_290 = arith.constant 4 : index
    %c3_291 = arith.constant 3 : index
    %c0_292 = arith.constant 0 : index
    %c0_293 = arith.constant 0 : index
    %360 = vector.load %arg6[%c4_290, %c3_291, %c0_292, %c0_293] : memref<6x4x32x8xf32, #tpu.memory_space<vmem>>, vector<1x1x32x8xf32>
    %361 = vector.shape_cast %360 : vector<1x1x32x8xf32> to vector<32x8xf32>
    %cst_294 = arith.constant dense<0.000000e+00> : vector<32x8xf32>
    %362 = tpu.matmul %1, %361, %cst_294 {dimension_numbers = #tpu.dot_dimension_numbers<[1], [0], [0], [1], [0, 0, 1, 1], [], []>} : vector<32x32xf32>, vector<32x8xf32>, vector<32x8xf32> -> vector<32x8xf32>
    %c4_295 = arith.constant 4 : index
    %c3_296 = arith.constant 3 : index
    %c0_297 = arith.constant 0 : index
    %c0_298 = arith.constant 0 : index
    %363 = vector.load %arg7[%c4_295, %c3_296, %c0_297, %c0_298] : memref<6x4x1x8xf32, #tpu.memory_space<vmem>>, vector<1x1x1x8xf32>
    %364 = vector.shape_cast %363 : vector<1x1x1x8xf32> to vector<1x8xf32>
    %365 = vector.broadcast %364 : vector<1x8xf32> to vector<32x8xf32>
    %366 = arith.addf %362, %365 : vector<32x8xf32>
    %c5_299 = arith.constant 5 : index
    %c3_300 = arith.constant 3 : index
    %c0_301 = arith.constant 0 : index
    %c0_302 = arith.constant 0 : index
    %367 = vector.load %arg6[%c5_299, %c3_300, %c0_301, %c0_302] : memref<6x4x32x8xf32, #tpu.memory_space<vmem>>, vector<1x1x32x8xf32>
    %368 = vector.shape_cast %367 : vector<1x1x32x8xf32> to vector<32x8xf32>
    %cst_303 = arith.constant dense<0.000000e+00> : vector<32x8xf32>
    %369 = tpu.matmul %2, %368, %cst_303 {dimension_numbers = #tpu.dot_dimension_numbers<[1], [0], [0], [1], [0, 0, 1, 1], [], []>} : vector<32x32xf32>, vector<32x8xf32>, vector<32x8xf32> -> vector<32x8xf32>
    %c5_304 = arith.constant 5 : index
    %c3_305 = arith.constant 3 : index
    %c0_306 = arith.constant 0 : index
    %c0_307 = arith.constant 0 : index
    %370 = vector.load %arg7[%c5_304, %c3_305, %c0_306, %c0_307] : memref<6x4x1x8xf32, #tpu.memory_space<vmem>>, vector<1x1x1x8xf32>
    %371 = vector.shape_cast %370 : vector<1x1x1x8xf32> to vector<1x8xf32>
    %372 = vector.broadcast %371 : vector<1x8xf32> to vector<32x8xf32>
    %373 = arith.addf %369, %372 : vector<32x8xf32>
    %374 = vector.shape_cast %359 : vector<16x8xf32> to vector<2x8x8xf32>
    %375 = vector.shape_cast %366 : vector<32x8xf32> to vector<2x16x8xf32>
    %376 = vector.shape_cast %373 : vector<32x8xf32> to vector<2x16x8xf32>
    "tpu.trace_start"() <{level = 10 : i32, message = "bqd,bkd->bqk"}> : () -> ()
    %cst_308 = arith.constant dense<0.000000e+00> : vector<2x8x16xf32>
    %377 = tpu.matmul %374, %375, %cst_308 {dimension_numbers = #tpu.dot_dimension_numbers<[2], [2], [1], [1], [0, 0, 0, 1, 1, 1], [0], [0]>} : vector<2x8x8xf32>, vector<2x16x8xf32>, vector<2x8x16xf32> -> vector<2x8x16xf32>
    "tpu.trace_stop"() : () -> ()
    %378 = vector.broadcast %5 : vector<2x1x16xf32> to vector<2x8x16xf32>
    %379 = arith.addf %377, %378 : vector<2x8x16xf32>
    %cst_309 = arith.constant dense<0xFF800000> : vector<2x8xf32>
    %380 = vector.multi_reduction <maximumf>, %379, %cst_309 [2] : vector<2x8x16xf32> to vector<2x8xf32>
    %381 = vector.shape_cast %380 : vector<2x8xf32> to vector<2x8x1xf32>
    %382 = vector.broadcast %381 : vector<2x8x1xf32> to vector<2x8x16xf32>
    %383 = arith.subf %379, %382 : vector<2x8x16xf32>
    %384 = math.exp %383 : vector<2x8x16xf32>
    %cst_310 = arith.constant dense<0.000000e+00> : vector<2x8xf32>
    %385 = vector.multi_reduction <add>, %384, %cst_310 [2] : vector<2x8x16xf32> to vector<2x8xf32>
    %386 = vector.shape_cast %385 : vector<2x8xf32> to vector<2x8x1xf32>
    %387 = vector.broadcast %386 : vector<2x8x1xf32> to vector<2x8x16xf32>
    %388 = arith.divf %384, %387 : vector<2x8x16xf32>
    "tpu.trace_start"() <{level = 10 : i32, message = "bqk,bkd->bqd"}> : () -> ()
    %cst_311 = arith.constant dense<0.000000e+00> : vector<2x8x8xf32>
    %389 = tpu.matmul %388, %376, %cst_311 {dimension_numbers = #tpu.dot_dimension_numbers<[2], [1], [1], [2], [0, 0, 0, 1, 1, 2], [0], [0]>} : vector<2x8x16xf32>, vector<2x16x8xf32>, vector<2x8x8xf32> -> vector<2x8x8xf32>
    "tpu.trace_stop"() : () -> ()
    %390 = vector.shape_cast %389 : vector<2x8x8xf32> to vector<16x8xf32>
    %c1_312 = arith.constant 1 : index
    %c3_313 = arith.constant 3 : index
    %c0_314 = arith.constant 0 : index
    %c0_315 = arith.constant 0 : index
    %391 = vector.load %arg8[%c1_312, %c3_313, %c0_314, %c0_315] : memref<2x4x8x32xf32, #tpu.memory_space<vmem>>, vector<1x1x8x32xf32>
    %392 = vector.shape_cast %391 : vector<1x1x8x32xf32> to vector<8x32xf32>
    %cst_316 = arith.constant dense<0.000000e+00> : vector<16x32xf32>
    %393 = tpu.matmul %390, %392, %cst_316 {dimension_numbers = #tpu.dot_dimension_numbers<[1], [0], [0], [1], [0, 0, 1, 1], [], []>} : vector<16x8xf32>, vector<8x32xf32>, vector<16x32xf32> -> vector<16x32xf32>
    %394 = arith.addf %350, %393 : vector<16x32xf32>
    %c3_317 = arith.constant 3 : index
    %c0_318 = arith.constant 0 : index
    %c0_319 = arith.constant 0 : index
    %395 = vector.load %arg9[%c3_317, %c0_318, %c0_319] : memref<9x1x32xf32, #tpu.memory_space<vmem>>, vector<1x1x32xf32>
    %396 = vector.shape_cast %395 : vector<1x1x32xf32> to vector<1x32xf32>
    %397 = vector.broadcast %396 : vector<1x32xf32> to vector<16x32xf32>
    %398 = arith.addf %394, %397 : vector<16x32xf32>
    %399 = arith.addf %398, %217 : vector<16x32xf32>
    %c4_320 = arith.constant 4 : index
    %c0_321 = arith.constant 0 : index
    %c0_322 = arith.constant 0 : index
    %400 = vector.load %arg9[%c4_320, %c0_321, %c0_322] : memref<9x1x32xf32, #tpu.memory_space<vmem>>, vector<1x1x32xf32>
    %401 = vector.shape_cast %400 : vector<1x1x32xf32> to vector<1x32xf32>
    %c5_323 = arith.constant 5 : index
    %c0_324 = arith.constant 0 : index
    %c0_325 = arith.constant 0 : index
    %402 = vector.load %arg9[%c5_323, %c0_324, %c0_325] : memref<9x1x32xf32, #tpu.memory_space<vmem>>, vector<1x1x32xf32>
    %403 = vector.shape_cast %402 : vector<1x1x32xf32> to vector<1x32xf32>
    %cst_326 = arith.constant dense<0.000000e+00> : vector<16xf32>
    %404 = vector.multi_reduction <add>, %399, %cst_326 [1] : vector<16x32xf32> to vector<16xf32>
    %405 = vector.shape_cast %404 : vector<16xf32> to vector<16x1xf32>
    %cst_327 = arith.constant 3.200000e+01 : f32
    %406 = vector.broadcast %cst_327 : f32 to vector<16x1xf32>
    %407 = arith.divf %405, %406 : vector<16x1xf32>
    %408 = vector.broadcast %407 : vector<16x1xf32> to vector<16x32xf32>
    %409 = arith.subf %399, %408 : vector<16x32xf32>
    %410 = arith.mulf %409, %409 : vector<16x32xf32>
    %cst_328 = arith.constant dense<0.000000e+00> : vector<16xf32>
    %411 = vector.multi_reduction <add>, %410, %cst_328 [1] : vector<16x32xf32> to vector<16xf32>
    %412 = vector.shape_cast %411 : vector<16xf32> to vector<16x1xf32>
    %cst_329 = arith.constant 3.200000e+01 : f32
    %413 = vector.broadcast %cst_329 : f32 to vector<16x1xf32>
    %414 = arith.divf %412, %413 : vector<16x1xf32>
    %415 = vector.broadcast %407 : vector<16x1xf32> to vector<16x32xf32>
    %416 = arith.subf %399, %415 : vector<16x32xf32>
    %cst_330 = arith.constant 9.99999974E-6 : f32
    %417 = vector.broadcast %cst_330 : f32 to vector<16x1xf32>
    %418 = arith.addf %414, %417 : vector<16x1xf32>
    %419 = math.rsqrt %418 : vector<16x1xf32>
    %420 = vector.broadcast %419 : vector<16x1xf32> to vector<16x32xf32>
    %421 = arith.mulf %416, %420 : vector<16x32xf32>
    %422 = vector.broadcast %401 : vector<1x32xf32> to vector<16x32xf32>
    %423 = arith.mulf %421, %422 : vector<16x32xf32>
    %424 = vector.broadcast %403 : vector<1x32xf32> to vector<16x32xf32>
    %425 = arith.addf %423, %424 : vector<16x32xf32>
    %c0_331 = arith.constant 0 : index
    %c0_332 = arith.constant 0 : index
    %426 = vector.load %arg10[%c0_331, %c0_332] : memref<32x64xf32, #tpu.memory_space<vmem>>, vector<32x64xf32>
    %cst_333 = arith.constant dense<0.000000e+00> : vector<16x64xf32>
    %427 = tpu.matmul %425, %426, %cst_333 {dimension_numbers = #tpu.dot_dimension_numbers<[1], [0], [0], [1], [0, 0, 1, 1], [], []>} : vector<16x32xf32>, vector<32x64xf32>, vector<16x64xf32> -> vector<16x64xf32>
    %c0_334 = arith.constant 0 : index
    %c0_335 = arith.constant 0 : index
    %428 = vector.load %arg11[%c0_334, %c0_335] : memref<1x64xf32, #tpu.memory_space<vmem>>, vector<1x64xf32>
    %429 = vector.broadcast %428 : vector<1x64xf32> to vector<16x64xf32>
    %430 = arith.addf %427, %429 : vector<16x64xf32>
    %cst_336 = arith.constant 0.000000e+00 : f32
    %431 = vector.broadcast %cst_336 : f32 to vector<16x64xf32>
    %432 = arith.cmpf oge, %430, %431 : vector<16x64xf32>
    %cst_337 = arith.constant 0.00999999977 : f32
    %433 = vector.broadcast %cst_337 : f32 to vector<16x64xf32>
    %434 = arith.mulf %433, %430 : vector<16x64xf32>
    %435 = arith.select %432, %430, %434 : vector<16x64xi1>, vector<16x64xf32>
    %c0_338 = arith.constant 0 : index
    %c0_339 = arith.constant 0 : index
    %436 = vector.load %arg12[%c0_338, %c0_339] : memref<64x32xf32, #tpu.memory_space<vmem>>, vector<64x32xf32>
    %cst_340 = arith.constant dense<0.000000e+00> : vector<16x32xf32>
    %437 = tpu.matmul %435, %436, %cst_340 {dimension_numbers = #tpu.dot_dimension_numbers<[1], [0], [0], [1], [0, 0, 1, 1], [], []>} : vector<16x64xf32>, vector<64x32xf32>, vector<16x32xf32> -> vector<16x32xf32>
    %c6 = arith.constant 6 : index
    %c0_341 = arith.constant 0 : index
    %c0_342 = arith.constant 0 : index
    %438 = vector.load %arg9[%c6, %c0_341, %c0_342] : memref<9x1x32xf32, #tpu.memory_space<vmem>>, vector<1x1x32xf32>
    %439 = vector.shape_cast %438 : vector<1x1x32xf32> to vector<1x32xf32>
    %440 = vector.broadcast %439 : vector<1x32xf32> to vector<16x32xf32>
    %441 = arith.addf %437, %440 : vector<16x32xf32>
    %442 = arith.addf %441, %425 : vector<16x32xf32>
    %c7 = arith.constant 7 : index
    %c0_343 = arith.constant 0 : index
    %c0_344 = arith.constant 0 : index
    %443 = vector.load %arg9[%c7, %c0_343, %c0_344] : memref<9x1x32xf32, #tpu.memory_space<vmem>>, vector<1x1x32xf32>
    %444 = vector.shape_cast %443 : vector<1x1x32xf32> to vector<1x32xf32>
    %c8 = arith.constant 8 : index
    %c0_345 = arith.constant 0 : index
    %c0_346 = arith.constant 0 : index
    %445 = vector.load %arg9[%c8, %c0_345, %c0_346] : memref<9x1x32xf32, #tpu.memory_space<vmem>>, vector<1x1x32xf32>
    %446 = vector.shape_cast %445 : vector<1x1x32xf32> to vector<1x32xf32>
    %cst_347 = arith.constant dense<0.000000e+00> : vector<16xf32>
    %447 = vector.multi_reduction <add>, %442, %cst_347 [1] : vector<16x32xf32> to vector<16xf32>
    %448 = vector.shape_cast %447 : vector<16xf32> to vector<16x1xf32>
    %cst_348 = arith.constant 3.200000e+01 : f32
    %449 = vector.broadcast %cst_348 : f32 to vector<16x1xf32>
    %450 = arith.divf %448, %449 : vector<16x1xf32>
    %451 = vector.broadcast %450 : vector<16x1xf32> to vector<16x32xf32>
    %452 = arith.subf %442, %451 : vector<16x32xf32>
    %453 = arith.mulf %452, %452 : vector<16x32xf32>
    %cst_349 = arith.constant dense<0.000000e+00> : vector<16xf32>
    %454 = vector.multi_reduction <add>, %453, %cst_349 [1] : vector<16x32xf32> to vector<16xf32>
    %455 = vector.shape_cast %454 : vector<16xf32> to vector<16x1xf32>
    %cst_350 = arith.constant 3.200000e+01 : f32
    %456 = vector.broadcast %cst_350 : f32 to vector<16x1xf32>
    %457 = arith.divf %455, %456 : vector<16x1xf32>
    %458 = vector.broadcast %450 : vector<16x1xf32> to vector<16x32xf32>
    %459 = arith.subf %442, %458 : vector<16x32xf32>
    %cst_351 = arith.constant 9.99999974E-6 : f32
    %460 = vector.broadcast %cst_351 : f32 to vector<16x1xf32>
    %461 = arith.addf %457, %460 : vector<16x1xf32>
    %462 = math.rsqrt %461 : vector<16x1xf32>
    %463 = vector.broadcast %462 : vector<16x1xf32> to vector<16x32xf32>
    %464 = arith.mulf %459, %463 : vector<16x32xf32>
    %465 = vector.broadcast %444 : vector<1x32xf32> to vector<16x32xf32>
    %466 = arith.mulf %464, %465 : vector<16x32xf32>
    %467 = vector.broadcast %446 : vector<1x32xf32> to vector<16x32xf32>
    %468 = arith.addf %466, %467 : vector<16x32xf32>
    %c0_352 = arith.constant 0 : index
    %c0_353 = arith.constant 0 : index
    %469 = vector.load %arg13[%c0_352, %c0_353] : memref<16x32xf32, #tpu.memory_space<vmem>>, vector<16x32xf32>
    tpu.vector_store %arg13[%c0_352, %c0_353], %468 {strides = array<i32>} : memref<16x32xf32, #tpu.memory_space<vmem>>, vector<16x32xf32>,
    return
  }
  func.func @transform_0(%arg0: i32) -> (i32, i32) {
    %c0_i32 = arith.constant 0 : i32
    %c0_i32_0 = arith.constant 0 : i32
    return %arg0, %c0_i32 : i32, i32
  }
  func.func @transform_1(%arg0: i32) -> (i32, i32) {
    %c0_i32 = arith.constant 0 : i32
    %c0_i32_0 = arith.constant 0 : i32
    return %arg0, %c0_i32 : i32, i32
  }
  func.func @transform_2(%arg0: i32) -> (i32, i32) {
    %c0_i32 = arith.constant 0 : i32
    %c0_i32_0 = arith.constant 0 : i32
    return %arg0, %c0_i32 : i32, i32
  }
  func.func @transform_3(%arg0: i32) -> (i32, i32, i32) {
    %c0_i32 = arith.constant 0 : i32
    %c0_i32_0 = arith.constant 0 : i32
    %c0_i32_1 = arith.constant 0 : i32
    %c0_i32_2 = arith.constant 0 : i32
    return %c0_i32, %c0_i32_0, %c0_i32_1 : i32, i32, i32
  }
  func.func @transform_4(%arg0: i32) -> (i32, i32, i32) {
    %c0_i32 = arith.constant 0 : i32
    %c0_i32_0 = arith.constant 0 : i32
    %c0_i32_1 = arith.constant 0 : i32
    return %arg0, %c0_i32, %c0_i32_0 : i32, i32, i32
  }
  func.func @transform_5(%arg0: i32) -> (i32, i32, i32, i32) {
    %c0_i32 = arith.constant 0 : i32
    %c0_i32_0 = arith.constant 0 : i32
    %c0_i32_1 = arith.constant 0 : i32
    %c0_i32_2 = arith.constant 0 : i32
    %c0_i32_3 = arith.constant 0 : i32
    return %c0_i32, %c0_i32_0, %c0_i32_1, %c0_i32_2 : i32, i32, i32, i32
  }
  func.func @transform_6(%arg0: i32) -> (i32, i32, i32, i32) {
    %c0_i32 = arith.constant 0 : i32
    %c0_i32_0 = arith.constant 0 : i32
    %c0_i32_1 = arith.constant 0 : i32
    %c0_i32_2 = arith.constant 0 : i32
    %c0_i32_3 = arith.constant 0 : i32
    return %c0_i32, %c0_i32_0, %c0_i32_1, %c0_i32_2 : i32, i32, i32, i32
  }
  func.func @transform_7(%arg0: i32) -> (i32, i32, i32, i32) {
    %c0_i32 = arith.constant 0 : i32
    %c0_i32_0 = arith.constant 0 : i32
    %c0_i32_1 = arith.constant 0 : i32
    %c0_i32_2 = arith.constant 0 : i32
    %c0_i32_3 = arith.constant 0 : i32
    return %c0_i32, %c0_i32_0, %c0_i32_1, %c0_i32_2 : i32, i32, i32, i32
  }
  func.func @transform_8(%arg0: i32) -> (i32, i32, i32) {
    %c0_i32 = arith.constant 0 : i32
    %c0_i32_0 = arith.constant 0 : i32
    %c0_i32_1 = arith.constant 0 : i32
    %c0_i32_2 = arith.constant 0 : i32
    return %c0_i32, %c0_i32_0, %c0_i32_1 : i32, i32, i32
  }
  func.func @transform_9(%arg0: i32) -> (i32, i32) {
    %c0_i32 = arith.constant 0 : i32
    %c0_i32_0 = arith.constant 0 : i32
    %c0_i32_1 = arith.constant 0 : i32
    return %c0_i32, %c0_i32_0 : i32, i32
  }
  func.func @transform_10(%arg0: i32) -> (i32, i32) {
    %c0_i32 = arith.constant 0 : i32
    %c0_i32_0 = arith.constant 0 : i32
    %c0_i32_1 = arith.constant 0 : i32
    return %c0_i32, %c0_i32_0 : i32, i32
  }
  func.func @transform_11(%arg0: i32) -> (i32, i32) {
    %c0_i32 = arith.constant 0 : i32
    %c0_i32_0 = arith.constant 0 : i32
    %c0_i32_1 = arith.constant 0 : i32
    return %c0_i32, %c0_i32_0 : i32, i32
  }
  func.func @transform_12(%arg0: i32) -> (i32, i32) {
    %c0_i32 = arith.constant 0 : i32
    %c0_i32_0 = arith.constant 0 : i32
    return %arg0, %c0_i32 : i32, i32
  }
}

</mosaic_0001>

<llo_original>
// kernel: decoder_block_forward.1
$region0: #{decoder_block_forward.1}
  #allocation0 [shape = 'u32[]', space=smem, size = 0x4, offset = 0x4, fixed_abs, tag = 'smem constant byte address 0x4 - core index']
  #allocation1 [shape = 'u32[72,128]{1,0:T(1,128)}', space=vmem, size = 0x9000, scoped, tag = 'internal scratch']
  %s0 = inlined_call_operand.vmem [shape: f32[32,32], index: 0, kind: input, shape index: {}]
  %s1 = inlined_call_operand.vmem [shape: f32[64,32], index: 1, kind: input, shape index: {}]
  %s2 = inlined_call_operand.vmem [shape: f32[64,32], index: 2, kind: input, shape index: {}]
  %s3 = inlined_call_operand.vmem [shape: f32[1,8,8], index: 3, kind: input, shape index: {}]
  %s4 = inlined_call_operand.vmem [shape: f32[4,1,16], index: 4, kind: input, shape index: {}]
  %s5 = inlined_call_operand.vmem [shape: f32[6,4,32,8], index: 5, kind: input, shape index: {}]
  %s6 = inlined_call_operand.vmem [shape: f32[6,4,1,8], index: 6, kind: input, shape index: {}]
  %s7 = inlined_call_operand.vmem [shape: f32[2,4,8,32], index: 7, kind: input, shape index: {}]
  %s8 = inlined_call_operand.vmem [shape: f32[9,1,32], index: 8, kind: input, shape index: {}]
  %s9 = inlined_call_operand.vmem [shape: f32[32,64], index: 9, kind: input, shape index: {}]
  %s10 = inlined_call_operand.vmem [shape: f32[1,64], index: 10, kind: input, shape index: {}]
  %s11 = inlined_call_operand.vmem [shape: f32[64,32], index: 11, kind: input, shape index: {}]
  %s12 = inlined_call_operand.hbm [shape: f32[32,32], index: 12, kind: output, shape index: {}]
  %s13 = sld [smem:[#allocation0]]
  $region81: #{decoder_block_forward.1} parent=0
    _
  %s15 = ssub.s32 1, %s13
  %s16 = scalar_select 0, %s15, %s13
  $region1: #{decoder_block_forward.1} parent=0
    #allocation2 [shape = 'u8[16384]{0}', space=vmem, size = 0x4000, scoped, tag = 'output window, operand 0']
    #allocation3 [shape = 's32[2]{0}', space=sflag, size = 0x8, scoped, tag = 'scoped memory for decoder_block_forward.1']
    %17 = vsyncpa [#allocation3], 0
    %s18 = scalar_lea.sflag [#allocation3], 1
    %19 = vsyncpa %s18, 0
    loop: start=0, step=1, limit=4
    $region2: #{decoder_block_forward.1} parent=1 // loop_pre_header
      _
    $region3: #{decoder_block_forward.1} parent=1 // loop_header
      %s21 = sphi 0, %s25
      %p22 = scmp.ge.s32.totalorder %s21, 4
      %s31 = sphi 0, %s33
      %s34 = sphi 0, %s31
      %s35 = sphi 0, %s34
      %s51 = sphi 0, %s35
      %s57 = sphi 0, %s59
      %s60 = sphi 0, %s57
      %s61 = sphi 0, %s60
      %s77 = sphi 0, %s61
      %s83 = sphi 0, %s85
      %s86 = sphi 0, %s83
      %s87 = sphi 0, %s86
      %s103 = sphi 0, %s87
      %s107 = sphi 0, %s107
      %s109 = sphi 0, %s107
      %s110 = sphi 0, %s109
      %s124 = sphi 0, %s110
      %s130 = sphi 0, %s132
      %s133 = sphi 0, %s130
      %s134 = sphi 0, %s133
      %s150 = sphi 0, %s134
      %s154 = sphi 0, %s154
      %s156 = sphi 0, %s154
      %s157 = sphi 0, %s156
      %s171 = sphi 0, %s157
      %s175 = sphi 0, %s175
      %s177 = sphi 0, %s175
      %s178 = sphi 0, %s177
      %s192 = sphi 0, %s178
      %s196 = sphi 0, %s196
      %s198 = sphi 0, %s196
      %s199 = sphi 0, %s198
      %s213 = sphi 0, %s199
      %s217 = sphi 0, %s217
      %s219 = sphi 0, %s217
      %s220 = sphi 0, %s219
      %s234 = sphi 0, %s220
      %s238 = sphi 0, %s238
      %s240 = sphi 0, %s238
      %s241 = sphi 0, %s240
      %s255 = sphi 0, %s241
      %s259 = sphi 0, %s259
      %s261 = sphi 0, %s259
      %s262 = sphi 0, %s261
      %s276 = sphi 0, %s262
      %s280 = sphi 0, %s280
      %s282 = sphi 0, %s280
      %s283 = sphi 0, %s282
      %s297 = sphi 0, %s283
      %s303 = sphi 0, %s305
      %s306 = sphi 0, %s303
      %s307 = sphi 0, %s306
      %s323 = sphi 0, %s307
    $region4: #{decoder_block_forward.1} parent=1 // loop_header_branch
      %24 = sbr.rel (%p22) target = $region8
    $region5: #{decoder_block_forward.1} parent=1 // loop_body
      %s26 = ssub.s32 %s21, 1
      %s27 = ssub.s32 %s21, 2
      %s28 = sadd.s32 %s21, 1
      %s29 = ssub.s32 %s21, %s28
      %p30 = scmp.eq.s32.totalorder %s29, 0
      %s32 = sadd.s32 %s31, 1
      %s33 = scalar_select %p30, %s31, %s32
      %p36 = pneg %p30
      %p37 = scmp.eq.s32.totalorder %s21, 1
      %p38 = por %p36, %p37
      %p39 = scmp.ne.s32.totalorder %s31, %s34
      %p40 = scmp.eq.s32.totalorder %s21, 0
      %p41 = por %p39, %p40
      %p42 = scmp.ne.s32.totalorder %s31, %s34
      %p43 = scmp.eq.s32.totalorder %s26, 1
      %p44 = por %p42, %p43
      %p45 = scmp.ne.s32.totalorder %s34, %s35
      %p46 = scmp.eq.s32.totalorder %s26, 0
      %p47 = por %p45, %p46
      %p48 = scmp.ne.s32.totalorder %s34, %s35
      %p49 = scmp.eq.s32.totalorder %s27, 1
      %p50 = por %p48, %p49
      %p52 = scmp.ne.s32.totalorder %s35, %s51
      %p53 = scmp.eq.s32.totalorder %s27, 0
      %p54 = por %p52, %p53
      %s55 = ssub.s32 %s21, %s28
      %p56 = scmp.eq.s32.totalorder %s55, 0
      %s58 = sadd.s32 %s57, 1
      %s59 = scalar_select %p56, %s57, %s58
      %p62 = pneg %p56
      %p63 = scmp.eq.s32.totalorder %s21, 1
      %p64 = por %p62, %p63
      %p65 = scmp.ne.s32.totalorder %s57, %s60
      %p66 = scmp.eq.s32.totalorder %s21, 0
      %p67 = por %p65, %p66
      %p68 = scmp.ne.s32.totalorder %s57, %s60
      %p69 = scmp.eq.s32.totalorder %s26, 1
      %p70 = por %p68, %p69
      %p71 = scmp.ne.s32.totalorder %s60, %s61
      %p72 = scmp.eq.s32.totalorder %s26, 0
      %p73 = por %p71, %p72
      %p74 = scmp.ne.s32.totalorder %s60, %s61
      %p75 = scmp.eq.s32.totalorder %s27, 1
      %p76 = por %p74, %p75
      %p78 = scmp.ne.s32.totalorder %s61, %s77
      %p79 = scmp.eq.s32.totalorder %s27, 0
      %p80 = por %p78, %p79
      %s81 = ssub.s32 %s21, %s28
      %p82 = scmp.eq.s32.totalorder %s81, 0
      %s84 = sadd.s32 %s83, 1
      %s85 = scalar_select %p82, %s83, %s84
      %p88 = pneg %p82
      %p89 = scmp.eq.s32.totalorder %s21, 1
      %p90 = por %p88, %p89
      %p91 = scmp.ne.s32.totalorder %s83, %s86
      %p92 = scmp.eq.s32.totalorder %s21, 0
      %p93 = por %p91, %p92
      %p94 = scmp.ne.s32.totalorder %s83, %s86
      %p95 = scmp.eq.s32.totalorder %s26, 1
      %p96 = por %p94, %p95
      %p97 = scmp.ne.s32.totalorder %s86, %s87
      %p98 = scmp.eq.s32.totalorder %s26, 0
      %p99 = por %p97, %p98
      %p100 = scmp.ne.s32.totalorder %s86, %s87
      %p101 = scmp.eq.s32.totalorder %s27, 1
      %p102 = por %p100, %p101
      %p104 = scmp.ne.s32.totalorder %s87, %s103
      %p105 = scmp.eq.s32.totalorder %s27, 0
      %p106 = por %p104, %p105
      %s108 = sadd.s32 %s107, 1
      %p111 = scmp.eq.s32.totalorder %s21, 1
      %p112 = scmp.ne.s32.totalorder %s107, %s109
      %p113 = scmp.eq.s32.totalorder %s21, 0
      %p114 = por %p112, %p113
      %p115 = scmp.ne.s32.totalorder %s107, %s109
      %p116 = scmp.eq.s32.totalorder %s26, 1
      %p117 = por %p115, %p116
      %p118 = scmp.ne.s32.totalorder %s109, %s110
      %p119 = scmp.eq.s32.totalorder %s26, 0
      %p120 = por %p118, %p119
      %p121 = scmp.ne.s32.totalorder %s109, %s110
      %p122 = scmp.eq.s32.totalorder %s27, 1
      %p123 = por %p121, %p122
      %p125 = scmp.ne.s32.totalorder %s110, %s124
      %p126 = scmp.eq.s32.totalorder %s27, 0
      %p127 = por %p125, %p126
      %s128 = ssub.s32 %s21, %s28
      %p129 = scmp.eq.s32.totalorder %s128, 0
      %s131 = sadd.s32 %s130, 1
      %s132 = scalar_select %p129, %s130, %s131
      %p135 = pneg %p129
      %p136 = scmp.eq.s32.totalorder %s21, 1
      %p137 = por %p135, %p136
      %p138 = scmp.ne.s32.totalorder %s130, %s133
      %p139 = scmp.eq.s32.totalorder %s21, 0
      %p140 = por %p138, %p139
      %p141 = scmp.ne.s32.totalorder %s130, %s133
      %p142 = scmp.eq.s32.totalorder %s26, 1
      %p143 = por %p141, %p142
      %p144 = scmp.ne.s32.totalorder %s133, %s134
      %p145 = scmp.eq.s32.totalorder %s26, 0
      %p146 = por %p144, %p145
      %p147 = scmp.ne.s32.totalorder %s133, %s134
      %p148 = scmp.eq.s32.totalorder %s27, 1
      %p149 = por %p147, %p148
      %p151 = scmp.ne.s32.totalorder %s134, %s150
      %p152 = scmp.eq.s32.totalorder %s27, 0
      %p153 = por %p151, %p152
      %s155 = sadd.s32 %s154, 1
      %p158 = scmp.eq.s32.totalorder %s21, 1
      %p159 = scmp.ne.s32.totalorder %s154, %s156
      %p160 = scmp.eq.s32.totalorder %s21, 0
      %p161 = por %p159, %p160
      %p162 = scmp.ne.s32.totalorder %s154, %s156
      %p163 = scmp.eq.s32.totalorder %s26, 1
      %p164 = por %p162, %p163
      %p165 = scmp.ne.s32.totalorder %s156, %s157
      %p166 = scmp.eq.s32.totalorder %s26, 0
      %p167 = por %p165, %p166
      %p168 = scmp.ne.s32.totalorder %s156, %s157
      %p169 = scmp.eq.s32.totalorder %s27, 1
      %p170 = por %p168, %p169
      %p172 = scmp.ne.s32.totalorder %s157, %s171
      %p173 = scmp.eq.s32.totalorder %s27, 0
      %p174 = por %p172, %p173
      %s176 = sadd.s32 %s175, 1
      %p179 = scmp.eq.s32.totalorder %s21, 1
      %p180 = scmp.ne.s32.totalorder %s175, %s177
      %p181 = scmp.eq.s32.totalorder %s21, 0
      %p182 = por %p180, %p181
      %p183 = scmp.ne.s32.totalorder %s175, %s177
      %p184 = scmp.eq.s32.totalorder %s26, 1
      %p185 = por %p183, %p184
      %p186 = scmp.ne.s32.totalorder %s177, %s178
      %p187 = scmp.eq.s32.totalorder %s26, 0
      %p188 = por %p186, %p187
      %p189 = scmp.ne.s32.totalorder %s177, %s178
      %p190 = scmp.eq.s32.totalorder %s27, 1
      %p191 = por %p189, %p190
      %p193 = scmp.ne.s32.totalorder %s178, %s192
      %p194 = scmp.eq.s32.totalorder %s27, 0
      %p195 = por %p193, %p194
      %s197 = sadd.s32 %s196, 1
      %p200 = scmp.eq.s32.totalorder %s21, 1
      %p201 = scmp.ne.s32.totalorder %s196, %s198
      %p202 = scmp.eq.s32.totalorder %s21, 0
      %p203 = por %p201, %p202
      %p204 = scmp.ne.s32.totalorder %s196, %s198
      %p205 = scmp.eq.s32.totalorder %s26, 1
      %p206 = por %p204, %p205
      %p207 = scmp.ne.s32.totalorder %s198, %s199
      %p208 = scmp.eq.s32.totalorder %s26, 0
      %p209 = por %p207, %p208
      %p210 = scmp.ne.s32.totalorder %s198, %s199
      %p211 = scmp.eq.s32.totalorder %s27, 1
      %p212 = por %p210, %p211
      %p214 = scmp.ne.s32.totalorder %s199, %s213
      %p215 = scmp.eq.s32.totalorder %s27, 0
      %p216 = por %p214, %p215
      %s218 = sadd.s32 %s217, 1
      %p221 = scmp.eq.s32.totalorder %s21, 1
      %p222 = scmp.ne.s32.totalorder %s217, %s219
      %p223 = scmp.eq.s32.totalorder %s21, 0
      %p224 = por %p222, %p223
      %p225 = scmp.ne.s32.totalorder %s217, %s219
      %p226 = scmp.eq.s32.totalorder %s26, 1
      %p227 = por %p225, %p226
      %p228 = scmp.ne.s32.totalorder %s219, %s220
      %p229 = scmp.eq.s32.totalorder %s26, 0
      %p230 = por %p228, %p229
      %p231 = scmp.ne.s32.totalorder %s219, %s220
      %p232 = scmp.eq.s32.totalorder %s27, 1
      %p233 = por %p231, %p232
      %p235 = scmp.ne.s32.totalorder %s220, %s234
      %p236 = scmp.eq.s32.totalorder %s27, 0
      %p237 = por %p235, %p236
      %s239 = sadd.s32 %s238, 1
      %p242 = scmp.eq.s32.totalorder %s21, 1
      %p243 = scmp.ne.s32.totalorder %s238, %s240
      %p244 = scmp.eq.s32.totalorder %s21, 0
      %p245 = por %p243, %p244
      %p246 = scmp.ne.s32.totalorder %s238, %s240
      %p247 = scmp.eq.s32.totalorder %s26, 1
      %p248 = por %p246, %p247
      %p249 = scmp.ne.s32.totalorder %s240, %s241
      %p250 = scmp.eq.s32.totalorder %s26, 0
      %p251 = por %p249, %p250
      %p252 = scmp.ne.s32.totalorder %s240, %s241
      %p253 = scmp.eq.s32.totalorder %s27, 1
      %p254 = por %p252, %p253
      %p256 = scmp.ne.s32.totalorder %s241, %s255
      %p257 = scmp.eq.s32.totalorder %s27, 0
      %p258 = por %p256, %p257
      %s260 = sadd.s32 %s259, 1
      %p263 = scmp.eq.s32.totalorder %s21, 1
      %p264 = scmp.ne.s32.totalorder %s259, %s261
      %p265 = scmp.eq.s32.totalorder %s21, 0
      %p266 = por %p264, %p265
      %p267 = scmp.ne.s32.totalorder %s259, %s261
      %p268 = scmp.eq.s32.totalorder %s26, 1
      %p269 = por %p267, %p268
      %p270 = scmp.ne.s32.totalorder %s261, %s262
      %p271 = scmp.eq.s32.totalorder %s26, 0
      %p272 = por %p270, %p271
      %p273 = scmp.ne.s32.totalorder %s261, %s262
      %p274 = scmp.eq.s32.totalorder %s27, 1
      %p275 = por %p273, %p274
      %p277 = scmp.ne.s32.totalorder %s262, %s276
      %p278 = scmp.eq.s32.totalorder %s27, 0
      %p279 = por %p277, %p278
      %s281 = sadd.s32 %s280, 1
      %p284 = scmp.eq.s32.totalorder %s21, 1
      %p285 = scmp.ne.s32.totalorder %s280, %s282
      %p286 = scmp.eq.s32.totalorder %s21, 0
      %p287 = por %p285, %p286
      %p288 = scmp.ne.s32.totalorder %s280, %s282
      %p289 = scmp.eq.s32.totalorder %s26, 1
      %p290 = por %p288, %p289
      %p291 = scmp.ne.s32.totalorder %s282, %s283
      %p292 = scmp.eq.s32.totalorder %s26, 0
      %p293 = por %p291, %p292
      %p294 = scmp.ne.s32.totalorder %s282, %s283
      %p295 = scmp.eq.s32.totalorder %s27, 1
      %p296 = por %p294, %p295
      %p298 = scmp.ne.s32.totalorder %s283, %s297
      %p299 = scmp.eq.s32.totalorder %s27, 0
      %p300 = por %p298, %p299
      %s301 = ssub.s32 %s21, %s28
      %p302 = scmp.eq.s32.totalorder %s301, 0
      %s304 = sadd.s32 %s303, 1
      %s305 = scalar_select %p302, %s303, %s304
      %p308 = pneg %p302
      %p309 = scmp.eq.s32.totalorder %s21, 1
      %p310 = por %p308, %p309
      %p311 = scmp.ne.s32.totalorder %s303, %s306
      %p312 = scmp.eq.s32.totalorder %s21, 0
      %p313 = por %p311, %p312
      %p314 = scmp.ne.s32.totalorder %s303, %s306
      %p315 = scmp.eq.s32.totalorder %s26, 1
      %p316 = por %p314, %p315
      %p317 = scmp.ne.s32.totalorder %s306, %s307
      %p318 = scmp.eq.s32.totalorder %s26, 0
      %p319 = por %p317, %p318
      %p320 = scmp.ne.s32.totalorder %s306, %s307
      %p321 = scmp.eq.s32.totalorder %s27, 1
      %p322 = por %p320, %p321
      %p324 = scmp.ne.s32.totalorder %s307, %s323
      %p325 = scmp.eq.s32.totalorder %s27, 0
      %p326 = por %p324, %p325
      %p327 = scmp.le.s32.totalorder 1, %s21
      %p328 = scmp.lt.s32.totalorder %s21, 3
      %p329 = pnand %p327, %p328
      %p330 = pneg %p329
      // Predicated region
      $region9: #{decoder_block_forward.1} parent=5 // pred_check
        _
      $region10: #{decoder_block_forward.1} parent=5 // pred_check_branch
        %332 = sbr.rel (%p329) target = $region12
      $region11: #{decoder_block_forward.1} parent=5 // pred_region
        %s333 = ssub.s32 %s21, 1
        // Predicated region
        $region13: #{decoder_block_forward.1} parent=11 // pred_check
          %p334 = pneg %p120
        $region14: #{decoder_block_forward.1} parent=11 // pred_check_branch
          %336 = sbr.rel (%p334) target = $region16
        $region15: #{decoder_block_forward.1} parent=11 // pred_region
          _
        $region16: #{decoder_block_forward.1} parent=11 // pred_fallthru
          _
        // Predicated region
        $region17: #{decoder_block_forward.1} parent=11 // pred_check
          %p337 = pneg %p167
        $region18: #{decoder_block_forward.1} parent=11 // pred_check_branch
          %339 = sbr.rel (%p337) target = $region20
        $region19: #{decoder_block_forward.1} parent=11 // pred_region
          _
        $region20: #{decoder_block_forward.1} parent=11 // pred_fallthru
          _
        // Predicated region
        $region21: #{decoder_block_forward.1} parent=11 // pred_check
          %p340 = pneg %p188
        $region22: #{decoder_block_forward.1} parent=11 // pred_check_branch
          %342 = sbr.rel (%p340) target = $region24
        $region23: #{decoder_block_forward.1} parent=11 // pred_region
          _
        $region24: #{decoder_block_forward.1} parent=11 // pred_fallthru
          _
        // Predicated region
        $region25: #{decoder_block_forward.1} parent=11 // pred_check
          %p343 = pneg %p209
        $region26: #{decoder_block_forward.1} parent=11 // pred_check_branch
          %345 = sbr.rel (%p343) target = $region28
        $region27: #{decoder_block_forward.1} parent=11 // pred_region
          _
        $region28: #{decoder_block_forward.1} parent=11 // pred_fallthru
          _
        // Predicated region
        $region29: #{decoder_block_forward.1} parent=11 // pred_check
          %p346 = pneg %p230
        $region30: #{decoder_block_forward.1} parent=11 // pred_check_branch
          %348 = sbr.rel (%p346) target = $region32
        $region31: #{decoder_block_forward.1} parent=11 // pred_region
          _
        $region32: #{decoder_block_forward.1} parent=11 // pred_fallthru
          _
        // Predicated region
        $region33: #{decoder_block_forward.1} parent=11 // pred_check
          %p349 = pneg %p251
        $region34: #{decoder_block_forward.1} parent=11 // pred_check_branch
          %351 = sbr.rel (%p349) target = $region36
        $region35: #{decoder_block_forward.1} parent=11 // pred_region
          _
        $region36: #{decoder_block_forward.1} parent=11 // pred_fallthru
          _
        // Predicated region
        $region37: #{decoder_block_forward.1} parent=11 // pred_check
          %p352 = pneg %p272
        $region38: #{decoder_block_forward.1} parent=11 // pred_check_branch
          %354 = sbr.rel (%p352) target = $region40
        $region39: #{decoder_block_forward.1} parent=11 // pred_region
          _
        $region40: #{decoder_block_forward.1} parent=11 // pred_fallthru
          _
        // Predicated region
        $region41: #{decoder_block_forward.1} parent=11 // pred_check
          %p355 = pneg %p293
        $region42: #{decoder_block_forward.1} parent=11 // pred_check_branch
          %357 = sbr.rel (%p355) target = $region44
        $region43: #{decoder_block_forward.1} parent=11 // pred_region
          _
        $region44: #{decoder_block_forward.1} parent=11 // pred_fallthru
          _
      $region12: #{decoder_block_forward.1} parent=5 // pred_fallthru
        _
      %p358 = scmp.lt.s32.totalorder %s21, 2
      // Predicated region
      $region45: #{decoder_block_forward.1} parent=5 // pred_check
        %p359 = pneg %p358
      $region46: #{decoder_block_forward.1} parent=5 // pred_check_branch
        %361 = sbr.rel (%p359) target = $region48
      $region47: #{decoder_block_forward.1} parent=5 // pred_region
        // Predicated region
        $region49: #{decoder_block_forward.1} parent=47 // pred_check
          %p362 = pneg %p41
        $region50: #{decoder_block_forward.1} parent=47 // pred_check_branch
          %364 = sbr.rel (%p362) target = $region52
        $region51: #{decoder_block_forward.1} parent=47 // pred_region
          %s365 = smul.u32 2, %s21
          %p366 = scmp.lt.s32.totalorder %s365, 3
          %s367 = scalar_select %p366, %s365, 3
          %s368 = smul.addr %s367, 8
          %s369 = scalar_lea.vmem %s0, %s368
          %s370 = smul.u32 2, %s21
        $region52: #{decoder_block_forward.1} parent=47 // pred_fallthru
          _
        // Predicated region
        $region53: #{decoder_block_forward.1} parent=47 // pred_check
          %p371 = pneg %p67
        $region54: #{decoder_block_forward.1} parent=47 // pred_check_branch
          %373 = sbr.rel (%p371) target = $region56
        $region55: #{decoder_block_forward.1} parent=47 // pred_region
          %s374 = smul.u32 4, %s21
          %p375 = scmp.lt.s32.totalorder %s374, 7
          %s376 = scalar_select %p375, %s374, 7
          %s377 = smul.addr %s376, 8
          %s378 = scalar_lea.vmem %s1, %s377
          %s379 = smul.u32 4, %s21
        $region56: #{decoder_block_forward.1} parent=47 // pred_fallthru
          _
        // Predicated region
        $region57: #{decoder_block_forward.1} parent=47 // pred_check
          %p380 = pneg %p93
        $region58: #{decoder_block_forward.1} parent=47 // pred_check_branch
          %382 = sbr.rel (%p380) target = $region60
        $region59: #{decoder_block_forward.1} parent=47 // pred_region
          %s383 = smul.u32 4, %s21
          %p384 = scmp.lt.s32.totalorder %s383, 7
          %s385 = scalar_select %p384, %s383, 7
          %s386 = smul.addr %s385, 8
          %s387 = scalar_lea.vmem %s2, %s386
          %s388 = smul.u32 4, %s21
        $region60: #{decoder_block_forward.1} parent=47 // pred_fallthru
          _
        // Predicated region
        $region61: #{decoder_block_forward.1} parent=47 // pred_check
          %p389 = pneg %p140
        $region62: #{decoder_block_forward.1} parent=47 // pred_check_branch
          %391 = sbr.rel (%p389) target = $region64
        $region63: #{decoder_block_forward.1} parent=47 // pred_region
          %s392 = smul.u32 2, %s21
          %p393 = scmp.lt.s32.totalorder %s392, 3
          %s394 = scalar_select %p393, %s392, 3
          %s395 = scalar_lea.vmem %s4, %s394
          %s396 = smul.u32 2, %s21
        $region64: #{decoder_block_forward.1} parent=47 // pred_fallthru
          _
      $region48: #{decoder_block_forward.1} parent=5 // pred_fallthru
        _
      %p397 = scmp.le.s32.totalorder 1, %s21
      %p398 = scmp.lt.s32.totalorder %s21, 3
      %p399 = pnand %p397, %p398
      %p400 = pneg %p399
      // Predicated region
      $region65: #{decoder_block_forward.1} parent=5 // pred_check
        _
      $region66: #{decoder_block_forward.1} parent=5 // pred_check_branch
        %402 = sbr.rel (%p399) target = $region68
      $region67: #{decoder_block_forward.1} parent=5 // pred_region
        %s403 = ssub.s32 %s21, 1
        %s404 = smul.u32 2, %s26
        %p405 = scmp.lt.s32.totalorder %s404, 3
        %s406 = scalar_select %p405, %s404, 3
        %s407 = smul.addr %s406, 8
        %s408 = scalar_lea.vmem %s0, %s407
        %p409 = pneg %p47
        %p410 = pneg %p44
        %s411 = smul.u32 4, %s26
        %p412 = scmp.lt.s32.totalorder %s411, 7
        %s413 = scalar_select %p412, %s411, 7
        %s414 = smul.addr %s413, 8
        %s415 = scalar_lea.vmem %s1, %s414
        %p416 = pneg %p73
        %p417 = pneg %p70
        %s418 = smul.u32 4, %s26
        %p419 = scmp.lt.s32.totalorder %s418, 7
        %s420 = scalar_select %p419, %s418, 7
        %s421 = smul.addr %s420, 8
        %s422 = scalar_lea.vmem %s2, %s421
        %p423 = pneg %p99
        %p424 = pneg %p96
        %p425 = pneg %p120
        %p426 = pneg %p117
        %s427 = smul.u32 2, %s26
        %p428 = scmp.lt.s32.totalorder %s427, 3
        %s429 = scalar_select %p428, %s427, 3
        %s430 = scalar_lea.vmem %s4, %s429
        %p431 = pneg %p146
        %p432 = pneg %p143
        %p433 = pneg %p167
        %p434 = pneg %p164
        %p435 = pneg %p188
        %p436 = pneg %p185
        %p437 = pneg %p209
        %p438 = pneg %p206
        %p439 = pneg %p230
        %p440 = pneg %p227
        %p441 = pneg %p251
        %p442 = pneg %p248
        %p443 = pneg %p272
        %p444 = pneg %p269
        %p445 = pneg %p293
        %p446 = pneg %p290
        %p447 = pneg %p319
        %p448 = pneg %p316
        %s449 = sand.u32 %s306, 1
        %s450 = scalar_lea.sflag [#allocation3], %s449
        %s451 = sand.u32 %s306, 1
        %s452 = smul.addr %s451, 16
        %s453 = scalar_lea.vmem [#allocation2], %s452
        %s454 = smul.u32 2, %s26
        %p455 = scmp.lt.s32.totalorder %s454, 3
        %s456 = scalar_select %p455, %s454, 3
        %s457 = smul.addr %s456, 8
        %s458 = scalar_lea.vmem %s0, %s457
        %s459 = smul.u32 2, %s26
        %s460 = smul.u32 4, %s26
        %p461 = scmp.lt.s32.totalorder %s460, 7
        %s462 = scalar_select %p461, %s460, 7
        %s463 = smul.addr %s462, 8
        %s464 = scalar_lea.vmem %s1, %s463
        %s465 = smul.u32 4, %s26
        %s466 = smul.u32 4, %s26
        %p467 = scmp.lt.s32.totalorder %s466, 7
        %s468 = scalar_select %p467, %s466, 7
        %s469 = smul.addr %s468, 8
        %s470 = scalar_lea.vmem %s2, %s469
        %s471 = smul.u32 4, %s26
        %s472 = smul.u32 2, %s26
        %p473 = scmp.lt.s32.totalorder %s472, 3
        %s474 = scalar_select %p473, %s472, 3
        %s475 = scalar_lea.vmem %s4, %s474
        %s476 = smul.u32 2, %s26
        %s477 = smul.u32 2, %s26
        %v478 = vld [vmem:[%s458] sm:$0xff]
        %v479 = vld [vmem:[%s458 + $0x8] sm:$0xff]
        %v480 = vld [vmem:[%s464] sm:$0xff]
        %v481 = vld [vmem:[%s464 + $0x8] sm:$0xff]
        %v482 = vld [vmem:[%s464 + $0x10] sm:$0xff]
        %v483 = vld [vmem:[%s464 + $0x18] sm:$0xff]
        %v484 = vld [vmem:[%s470] sm:$0xff]
        %v485 = vld [vmem:[%s470 + $0x8] sm:$0xff]
        %v486 = vld [vmem:[%s470 + $0x10] sm:$0xff]
        %v487 = vld [vmem:[%s470 + $0x18] sm:$0xff]
        %v488 = vld [vmem:[%s3] sm:$0xff]
        %v489 = vld [vmem:[%s475] sm:$0x1]
        %v490 = vld [vmem:[%s475 + $0x1] sm:$0x1]
        %v491 = vld [vmem:[%s5] sm:$0xff]
        %v492 = vld [vmem:[%s5 + $0x8] sm:$0xff]
        %v493 = vld [vmem:[%s5 + $0x10] sm:$0xff]
        %v494 = vld [vmem:[%s5 + $0x18] sm:$0xff]
        %v495 = vld [vmem:[%s6] sm:$0x1]
        %v497 = vperm.slane %v495, 0
        %vm499 = vcmask 261120
        %v501 = vsel %vm499, %v478, 0
        %v504 = vsel %vm499, %v479, 0
        %506 = vmatpush.msra.mxu0 0.0
        %507 = vmatpush.msra.mxu0 0.0
        %508 = vmatpush.msra.mxu0 0.0
        %509 = vmatpush.msra.mxu0 0.0
        %510 = vmatpush.msra.mxu0 0.0
        %511 = vmatpush.msra.mxu0 0.0
        %512 = vmatpush.msra.mxu0 0.0
        %513 = vmatpush.msra.mxu0 0.0
        %514 = vmatpush.msra.mxu0 0.0
        %515 = vmatpush.msra.mxu0 0.0
        %516 = vmatpush.msra.mxu0 0.0
        %517 = vmatpush.msra.mxu0 0.0
        %518 = vmatpush.msra.mxu0 %v494
        %519 = vmatpush.msra.mxu0 %v493
        %520 = vmatpush.msra.mxu0 %v492
        %521 = vmatpush.msra.mxu0 %v491
        %522 = vmatmul.f32.gmra.mxu0 %v501
        %v523 = vpop.f32.mrf.mxu0
        %v524 = vadd.f32 %v497, %v523
        %525 = vmatmul.f32.gmra.mxu0 %v504
        %v526 = vpop.f32.mrf.mxu0
        %v527 = vadd.f32 %v497, %v526
        %528 = vdwg.mxu0
        %v529 = vmul.f32 %v524, 0.35355338
        %v530 = vmul.f32 %v527, 0.35355338
        %s531 = scalar_lea.vmem %s5, 128
        %v532 = vld [vmem:[%s531] sm:$0xff]
        %v533 = vld [vmem:[%s531 + $0x8] sm:$0xff]
        %v534 = vld [vmem:[%s531 + $0x10] sm:$0xff]
        %v535 = vld [vmem:[%s531 + $0x18] sm:$0xff]
        %s536 = scalar_lea.vmem %s6, 4
        %v537 = vld [vmem:[%s536] sm:$0x1]
        %v539 = vperm.slane %v537, 0
        %541 = vmatpush.msra.mxu0 0.0
        %542 = vmatpush.msra.mxu0 0.0
        %543 = vmatpush.msra.mxu0 0.0
        %544 = vmatpush.msra.mxu0 0.0
        %545 = vmatpush.msra.mxu0 0.0
        %546 = vmatpush.msra.mxu0 0.0
        %547 = vmatpush.msra.mxu0 0.0
        %548 = vmatpush.msra.mxu0 0.0
        %549 = vmatpush.msra.mxu0 0.0
        %550 = vmatpush.msra.mxu0 0.0
        %551 = vmatpush.msra.mxu0 0.0
        %552 = vmatpush.msra.mxu0 0.0
        %553 = vmatpush.msra.mxu0 %v535
        %554 = vmatpush.msra.mxu0 %v534
        %555 = vmatpush.msra.mxu0 %v533
        %556 = vmatpush.msra.mxu0 %v532
        %557 = vmatmul.f32.gmra.mxu0 %v501
        %v558 = vpop.f32.mrf.mxu0
        %v559 = vadd.f32 %v539, %v558
        %560 = vmatmul.f32.gmra.mxu0 %v504
        %v561 = vpop.f32.mrf.mxu0
        %v562 = vadd.f32 %v539, %v561
        %563 = vdwg.mxu0
        %s564 = scalar_lea.vmem %s5, 256
        %v565 = vld [vmem:[%s564] sm:$0xff]
        %v566 = vld [vmem:[%s564 + $0x8] sm:$0xff]
        %v567 = vld [vmem:[%s564 + $0x10] sm:$0xff]
        %v568 = vld [vmem:[%s564 + $0x18] sm:$0xff]
        %s569 = scalar_lea.vmem %s6, 8
        %v570 = vld [vmem:[%s569] sm:$0x1]
        %v572 = vperm.slane %v570, 0
        %574 = vmatpush.msra.mxu0 0.0
        %575 = vmatpush.msra.mxu0 0.0
        %576 = vmatpush.msra.mxu0 0.0
        %577 = vmatpush.msra.mxu0 0.0
        %578 = vmatpush.msra.mxu0 0.0
        %579 = vmatpush.msra.mxu0 0.0
        %580 = vmatpush.msra.mxu0 0.0
        %581 = vmatpush.msra.mxu0 0.0
        %582 = vmatpush.msra.mxu0 0.0
        %583 = vmatpush.msra.mxu0 0.0
        %584 = vmatpush.msra.mxu0 0.0
        %585 = vmatpush.msra.mxu0 0.0
        %586 = vmatpush.msra.mxu0 %v568
        %587 = vmatpush.msra.mxu0 %v567
        %588 = vmatpush.msra.mxu0 %v566
        %589 = vmatpush.msra.mxu0 %v565
        %590 = vmatmul.f32.gmra.mxu0 %v501
        %v591 = vpop.f32.mrf.mxu0
        %v592 = vadd.f32 %v572, %v591
        %593 = vmatmul.f32.gmra.mxu0 %v504
        %v594 = vpop.f32.mrf.mxu0
        %v595 = vadd.f32 %v572, %v594
        %596 = vdwg.mxu0
        %vm597 = vcmask 64512
        %v599 = vsel %vm597, %v529, 0
        %v602 = vsel %vm597, %v559, 0
        %604 = vmatpush.xpose.msra.mxu0 0.0
        %605 = vmatpush.xpose.msra.mxu0 0.0
        %606 = vmatpush.xpose.msra.mxu0 0.0
        %607 = vmatpush.xpose.msra.mxu0 0.0
        %608 = vmatpush.xpose.msra.mxu0 0.0
        %609 = vmatpush.xpose.msra.mxu0 0.0
        %610 = vmatpush.xpose.msra.mxu0 0.0
        %611 = vmatpush.xpose.msra.mxu0 0.0
        %612 = vmatpush.xpose.msra.mxu0 0.0
        %613 = vmatpush.xpose.msra.mxu0 0.0
        %614 = vmatpush.xpose.msra.mxu0 0.0
        %615 = vmatpush.xpose.msra.mxu0 0.0
        %616 = vmatpush.xpose.msra.mxu0 0.0
        %617 = vmatpush.xpose.msra.mxu0 0.0
        %618 = vmatpush.xpose.msra.mxu0 0.0
        %619 = vmatpush.xpose.msra.mxu0 %v602
        %620 = vmatmul.f32.gmra.mxu0 %v599
        %v621 = vpop.f32.mrf.mxu0
        %v622 = vadd.f32 %v488, %v621
        %623 = vdwg.mxu0
        %v625 = vsel %vm597, %v530, 0
        %v628 = vsel %vm597, %v562, 0
        %630 = vmatpush.xpose.msra.mxu0 0.0
        %631 = vmatpush.xpose.msra.mxu0 0.0
        %632 = vmatpush.xpose.msra.mxu0 0.0
        %633 = vmatpush.xpose.msra.mxu0 0.0
        %634 = vmatpush.xpose.msra.mxu0 0.0
        %635 = vmatpush.xpose.msra.mxu0 0.0
        %636 = vmatpush.xpose.msra.mxu0 0.0
        %637 = vmatpush.xpose.msra.mxu0 0.0
        %638 = vmatpush.xpose.msra.mxu0 0.0
        %639 = vmatpush.xpose.msra.mxu0 0.0
        %640 = vmatpush.xpose.msra.mxu0 0.0
        %641 = vmatpush.xpose.msra.mxu0 0.0
        %642 = vmatpush.xpose.msra.mxu0 0.0
        %643 = vmatpush.xpose.msra.mxu0 0.0
        %644 = vmatpush.xpose.msra.mxu0 0.0
        %645 = vmatpush.xpose.msra.mxu0 %v628
        %646 = vmatmul.f32.gmra.mxu0 %v625
        %v647 = vpop.f32.mrf.mxu0
        %v648 = vadd.f32 %v488, %v647
        %649 = vdwg.mxu0
        %v650 = vsel %vm597, %v622, -inf
        %651 = vmax.xlane.f32.xlu0 %v650
        %v652 = vpop.xlane.xlu0 %651
        %v653 = vsel %vm597, %v648, -inf
        %654 = vmax.xlane.f32.xlu0 %v653
        %v655 = vpop.xlane.xlu0 %654
        %v656 = vsub.f32 %v622, %v652
        %v657 = vsub.f32 %v648, %v655
        %v658 = vmul.f32 %v656, 1.442695
        %v659 = vpow.pop %v658
        %v660 = vmul.f32 %v657, 1.442695
        %v661 = vpow.pop %v660
        %v662 = vsel %vm597, %v659, 0.0
        %663 = vadd.xlane.f32.xlu0 %v662
        %v664 = vpop.xlane.xlu0 %663
        %v665 = vsel %vm597, %v661, 0.0
        %666 = vadd.xlane.f32.xlu0 %v665
        %v667 = vpop.xlane.xlu0 %666
        %v668 = vrcp.pop %v664
        %v669 = vmul.f32 %v664, %v668
        %v670 = vsub.f32 1.0, %v669
        %v671 = vmul.f32 %v668, %v670
        %v672 = vadd.f32 %v668, %v671
        %vm673 = vweird.f32 %v664
        %vm674 = vweird.f32 %v668
        %vm675 = vmor %vm673, %vm674
        %v676 = vsel %vm675, %v668, %v672
        %v677 = vand.u32 2147483647, %v664
        %vm678 = vcmp.eq.f32.partialorder %v677, 8.507059e+37
        %v679 = vand.u32 %v664, 2147483648
        %v680 = vor.u32 1.1754944e-38, %v679
        %v681 = vsel %vm678, %v680, %v676
        %v682 = vmul.f32 %v659, %v681
        %v683 = vrcp.pop %v667
        %v684 = vmul.f32 %v667, %v683
        %v685 = vsub.f32 1.0, %v684
        %v686 = vmul.f32 %v683, %v685
        %v687 = vadd.f32 %v683, %v686
        %vm688 = vweird.f32 %v667
        %vm689 = vweird.f32 %v683
        %vm690 = vmor %vm688, %vm689
        %v691 = vsel %vm690, %v683, %v687
        %v692 = vand.u32 2147483647, %v667
        %vm693 = vcmp.eq.f32.partialorder %v692, 8.507059e+37
        %v694 = vand.u32 %v667, 2147483648
        %v695 = vor.u32 1.1754944e-38, %v694
        %v696 = vsel %vm693, %v695, %v691
        %v697 = vmul.f32 %v661, %v696
        %v699 = vsel %vm597, %v682, 0
        %701 = vmatpush.msra.mxu0 0.0
        %702 = vmatpush.msra.mxu0 0.0
        %703 = vmatpush.msra.mxu0 0.0
        %704 = vmatpush.msra.mxu0 0.0
        %705 = vmatpush.msra.mxu0 0.0
        %706 = vmatpush.msra.mxu0 0.0
        %707 = vmatpush.msra.mxu0 0.0
        %708 = vmatpush.msra.mxu0 0.0
        %709 = vmatpush.msra.mxu0 0.0
        %710 = vmatpush.msra.mxu0 0.0
        %711 = vmatpush.msra.mxu0 0.0
        %712 = vmatpush.msra.mxu0 0.0
        %713 = vmatpush.msra.mxu0 0.0
        %714 = vmatpush.msra.mxu0 0.0
        %715 = vmatpush.msra.mxu0 0.0
        %716 = vmatpush.msra.mxu0 %v592
        %717 = vmatmul.f32.gmra.mxu0 %v699
        %v718 = vpop.f32.mrf.mxu0
        %v719 = vadd.f32 0.0, %v718
        %720 = vdwg.mxu0
        %v722 = vsel %vm597, %v697, 0
        %724 = vmatpush.msra.mxu0 0.0
        %725 = vmatpush.msra.mxu0 0.0
        %726 = vmatpush.msra.mxu0 0.0
        %727 = vmatpush.msra.mxu0 0.0
        %728 = vmatpush.msra.mxu0 0.0
        %729 = vmatpush.msra.mxu0 0.0
        %730 = vmatpush.msra.mxu0 0.0
        %731 = vmatpush.msra.mxu0 0.0
        %732 = vmatpush.msra.mxu0 0.0
        %733 = vmatpush.msra.mxu0 0.0
        %734 = vmatpush.msra.mxu0 0.0
        %735 = vmatpush.msra.mxu0 0.0
        %736 = vmatpush.msra.mxu0 0.0
        %737 = vmatpush.msra.mxu0 0.0
        %738 = vmatpush.msra.mxu0 0.0
        %739 = vmatpush.msra.mxu0 %v595
        %740 = vmatmul.f32.gmra.mxu0 %v722
        %v741 = vpop.f32.mrf.mxu0
        %v742 = vadd.f32 0.0, %v741
        %743 = vdwg.mxu0
        %v744 = vld [vmem:[%s7] sm:$0xff]
        %s745 = scalar_lea.vmem %s5, 32
        %v746 = vld [vmem:[%s745] sm:$0xff]
        %v747 = vld [vmem:[%s745 + $0x8] sm:$0xff]
        %v748 = vld [vmem:[%s745 + $0x10] sm:$0xff]
        %v749 = vld [vmem:[%s745 + $0x18] sm:$0xff]
        %s750 = scalar_lea.vmem %s6, 1
        %v751 = vld [vmem:[%s750] sm:$0x1]
        %v753 = vperm.slane %v751, 0
        %755 = vmatpush.msra.mxu0 0.0
        %756 = vmatpush.msra.mxu0 0.0
        %757 = vmatpush.msra.mxu0 0.0
        %758 = vmatpush.msra.mxu0 0.0
        %759 = vmatpush.msra.mxu0 0.0
        %760 = vmatpush.msra.mxu0 0.0
        %761 = vmatpush.msra.mxu0 0.0
        %762 = vmatpush.msra.mxu0 0.0
        %763 = vmatpush.msra.mxu0 0.0
        %764 = vmatpush.msra.mxu0 0.0
        %765 = vmatpush.msra.mxu0 0.0
        %766 = vmatpush.msra.mxu0 0.0
        %767 = vmatpush.msra.mxu0 %v749
        %768 = vmatpush.msra.mxu0 %v748
        %769 = vmatpush.msra.mxu0 %v747
        %770 = vmatpush.msra.mxu0 %v746
        %771 = vmatmul.f32.gmra.mxu0 %v501
        %v772 = vpop.f32.mrf.mxu0
        %v773 = vadd.f32 %v753, %v772
        %774 = vmatmul.f32.gmra.mxu0 %v504
        %v775 = vpop.f32.mrf.mxu0
        %v776 = vadd.f32 %v753, %v775
        %777 = vdwg.mxu0
        %v778 = vmul.f32 %v773, 0.35355338
        %v779 = vmul.f32 %v776, 0.35355338
        %s780 = scalar_lea.vmem %s5, 160
        %v781 = vld [vmem:[%s780] sm:$0xff]
        %v782 = vld [vmem:[%s780 + $0x8] sm:$0xff]
        %v783 = vld [vmem:[%s780 + $0x10] sm:$0xff]
        %v784 = vld [vmem:[%s780 + $0x18] sm:$0xff]
        %s785 = scalar_lea.vmem %s6, 5
        %v786 = vld [vmem:[%s785] sm:$0x1]
        %v788 = vperm.slane %v786, 0
        %790 = vmatpush.msra.mxu0 0.0
        %791 = vmatpush.msra.mxu0 0.0
        %792 = vmatpush.msra.mxu0 0.0
        %793 = vmatpush.msra.mxu0 0.0
        %794 = vmatpush.msra.mxu0 0.0
        %795 = vmatpush.msra.mxu0 0.0
        %796 = vmatpush.msra.mxu0 0.0
        %797 = vmatpush.msra.mxu0 0.0
        %798 = vmatpush.msra.mxu0 0.0
        %799 = vmatpush.msra.mxu0 0.0
        %800 = vmatpush.msra.mxu0 0.0
        %801 = vmatpush.msra.mxu0 0.0
        %802 = vmatpush.msra.mxu0 %v784
        %803 = vmatpush.msra.mxu0 %v783
        %804 = vmatpush.msra.mxu0 %v782
        %805 = vmatpush.msra.mxu0 %v781
        %806 = vmatmul.f32.gmra.mxu0 %v501
        %v807 = vpop.f32.mrf.mxu0
        %v808 = vadd.f32 %v788, %v807
        %809 = vmatmul.f32.gmra.mxu0 %v504
        %v810 = vpop.f32.mrf.mxu0
        %v811 = vadd.f32 %v788, %v810
        %812 = vdwg.mxu0
        %s813 = scalar_lea.vmem %s5, 288
        %v814 = vld [vmem:[%s813] sm:$0xff]
        %v815 = vld [vmem:[%s813 + $0x8] sm:$0xff]
        %v816 = vld [vmem:[%s813 + $0x10] sm:$0xff]
        %v817 = vld [vmem:[%s813 + $0x18] sm:$0xff]
        %s818 = scalar_lea.vmem %s6, 9
        %v819 = vld [vmem:[%s818] sm:$0x1]
        %v821 = vperm.slane %v819, 0
        %823 = vmatpush.msra.mxu0 0.0
        %824 = vmatpush.msra.mxu0 0.0
        %825 = vmatpush.msra.mxu0 0.0
        %826 = vmatpush.msra.mxu0 0.0
        %827 = vmatpush.msra.mxu0 0.0
        %828 = vmatpush.msra.mxu0 0.0
        %829 = vmatpush.msra.mxu0 0.0
        %830 = vmatpush.msra.mxu0 0.0
        %831 = vmatpush.msra.mxu0 0.0
        %832 = vmatpush.msra.mxu0 0.0
        %833 = vmatpush.msra.mxu0 0.0
        %834 = vmatpush.msra.mxu0 0.0
        %835 = vmatpush.msra.mxu0 %v817
        %836 = vmatpush.msra.mxu0 %v816
        %837 = vmatpush.msra.mxu0 %v815
        %838 = vmatpush.msra.mxu0 %v814
        %839 = vmatmul.f32.gmra.mxu0 %v501
        %v840 = vpop.f32.mrf.mxu0
        %v841 = vadd.f32 %v821, %v840
        %842 = vmatmul.f32.gmra.mxu0 %v504
        %v843 = vpop.f32.mrf.mxu0
        %v844 = vadd.f32 %v821, %v843
        %845 = vdwg.mxu0
        %v847 = vsel %vm597, %v778, 0
        %v850 = vsel %vm597, %v808, 0
        %852 = vmatpush.xpose.msra.mxu0 0.0
        %853 = vmatpush.xpose.msra.mxu0 0.0
        %854 = vmatpush.xpose.msra.mxu0 0.0
        %855 = vmatpush.xpose.msra.mxu0 0.0
        %856 = vmatpush.xpose.msra.mxu0 0.0
        %857 = vmatpush.xpose.msra.mxu0 0.0
        %858 = vmatpush.xpose.msra.mxu0 0.0
        %859 = vmatpush.xpose.msra.mxu0 0.0
        %860 = vmatpush.xpose.msra.mxu0 0.0
        %861 = vmatpush.xpose.msra.mxu0 0.0
        %862 = vmatpush.xpose.msra.mxu0 0.0
        %863 = vmatpush.xpose.msra.mxu0 0.0
        %864 = vmatpush.xpose.msra.mxu0 0.0
        %865 = vmatpush.xpose.msra.mxu0 0.0
        %866 = vmatpush.xpose.msra.mxu0 0.0
        %867 = vmatpush.xpose.msra.mxu0 %v850
        %868 = vmatmul.f32.gmra.mxu0 %v847
        %v869 = vpop.f32.mrf.mxu0
        %v870 = vadd.f32 %v488, %v869
        %871 = vdwg.mxu0
        %v873 = vsel %vm597, %v779, 0
        %v876 = vsel %vm597, %v811, 0
        %878 = vmatpush.xpose.msra.mxu0 0.0
        %879 = vmatpush.xpose.msra.mxu0 0.0
        %880 = vmatpush.xpose.msra.mxu0 0.0
        %881 = vmatpush.xpose.msra.mxu0 0.0
        %882 = vmatpush.xpose.msra.mxu0 0.0
        %883 = vmatpush.xpose.msra.mxu0 0.0
        %884 = vmatpush.xpose.msra.mxu0 0.0
        %885 = vmatpush.xpose.msra.mxu0 0.0
        %886 = vmatpush.xpose.msra.mxu0 0.0
        %887 = vmatpush.xpose.msra.mxu0 0.0
        %888 = vmatpush.xpose.msra.mxu0 0.0
        %889 = vmatpush.xpose.msra.mxu0 0.0
        %890 = vmatpush.xpose.msra.mxu0 0.0
        %891 = vmatpush.xpose.msra.mxu0 0.0
        %892 = vmatpush.xpose.msra.mxu0 0.0
        %893 = vmatpush.xpose.msra.mxu0 %v876
        %894 = vmatmul.f32.gmra.mxu0 %v873
        %v895 = vpop.f32.mrf.mxu0
        %v896 = vadd.f32 %v488, %v895
        %897 = vdwg.mxu0
        %v898 = vsel %vm597, %v870, -inf
        %899 = vmax.xlane.f32.xlu0 %v898
        %v900 = vpop.xlane.xlu0 %899
        %v901 = vsel %vm597, %v896, -inf
        %902 = vmax.xlane.f32.xlu0 %v901
        %v903 = vpop.xlane.xlu0 %902
        %v904 = vsub.f32 %v870, %v900
        %v905 = vsub.f32 %v896, %v903
        %v906 = vmul.f32 %v904, 1.442695
        %v907 = vpow.pop %v906
        %v908 = vmul.f32 %v905, 1.442695
        %v909 = vpow.pop %v908
        %v910 = vsel %vm597, %v907, 0.0
        %911 = vadd.xlane.f32.xlu0 %v910
        %v912 = vpop.xlane.xlu0 %911
        %v913 = vsel %vm597, %v909, 0.0
        %914 = vadd.xlane.f32.xlu0 %v913
        %v915 = vpop.xlane.xlu0 %914
        %v916 = vrcp.pop %v912
        %v917 = vmul.f32 %v912, %v916
        %v918 = vsub.f32 1.0, %v917
        %v919 = vmul.f32 %v916, %v918
        %v920 = vadd.f32 %v916, %v919
        %vm921 = vweird.f32 %v912
        %vm922 = vweird.f32 %v916
        %vm923 = vmor %vm921, %vm922
        %v924 = vsel %vm923, %v916, %v920
        %v925 = vand.u32 2147483647, %v912
        %vm926 = vcmp.eq.f32.partialorder %v925, 8.507059e+37
        %v927 = vand.u32 %v912, 2147483648
        %v928 = vor.u32 1.1754944e-38, %v927
        %v929 = vsel %vm926, %v928, %v924
        %v930 = vmul.f32 %v907, %v929
        %v931 = vrcp.pop %v915
        %v932 = vmul.f32 %v915, %v931
        %v933 = vsub.f32 1.0, %v932
        %v934 = vmul.f32 %v931, %v933
        %v935 = vadd.f32 %v931, %v934
        %vm936 = vweird.f32 %v915
        %vm937 = vweird.f32 %v931
        %vm938 = vmor %vm936, %vm937
        %v939 = vsel %vm938, %v931, %v935
        %v940 = vand.u32 2147483647, %v915
        %vm941 = vcmp.eq.f32.partialorder %v940, 8.507059e+37
        %v942 = vand.u32 %v915, 2147483648
        %v943 = vor.u32 1.1754944e-38, %v942
        %v944 = vsel %vm941, %v943, %v939
        %v945 = vmul.f32 %v909, %v944
        %v947 = vsel %vm597, %v930, 0
        %949 = vmatpush.msra.mxu0 0.0
        %950 = vmatpush.msra.mxu0 0.0
        %951 = vmatpush.msra.mxu0 0.0
        %952 = vmatpush.msra.mxu0 0.0
        %953 = vmatpush.msra.mxu0 0.0
        %954 = vmatpush.msra.mxu0 0.0
        %955 = vmatpush.msra.mxu0 0.0
        %956 = vmatpush.msra.mxu0 0.0
        %957 = vmatpush.msra.mxu0 0.0
        %958 = vmatpush.msra.mxu0 0.0
        %959 = vmatpush.msra.mxu0 0.0
        %960 = vmatpush.msra.mxu0 0.0
        %961 = vmatpush.msra.mxu0 0.0
        %962 = vmatpush.msra.mxu0 0.0
        %963 = vmatpush.msra.mxu0 0.0
        %964 = vmatpush.msra.mxu0 %v841
        %965 = vmatmul.f32.gmra.mxu0 %v947
        %v966 = vpop.f32.mrf.mxu0
        %v967 = vadd.f32 0.0, %v966
        %968 = vdwg.mxu0
        %v970 = vsel %vm597, %v945, 0
        %972 = vmatpush.msra.mxu0 0.0
        %973 = vmatpush.msra.mxu0 0.0
        %974 = vmatpush.msra.mxu0 0.0
        %975 = vmatpush.msra.mxu0 0.0
        %976 = vmatpush.msra.mxu0 0.0
        %977 = vmatpush.msra.mxu0 0.0
        %978 = vmatpush.msra.mxu0 0.0
        %979 = vmatpush.msra.mxu0 0.0
        %980 = vmatpush.msra.mxu0 0.0
        %981 = vmatpush.msra.mxu0 0.0
        %982 = vmatpush.msra.mxu0 0.0
        %983 = vmatpush.msra.mxu0 0.0
        %984 = vmatpush.msra.mxu0 0.0
        %985 = vmatpush.msra.mxu0 0.0
        %986 = vmatpush.msra.mxu0 0.0
        %987 = vmatpush.msra.mxu0 %v844
        %988 = vmatmul.f32.gmra.mxu0 %v970
        %v989 = vpop.f32.mrf.mxu0
        %v990 = vadd.f32 0.0, %v989
        %991 = vdwg.mxu0
        %s992 = scalar_lea.vmem %s7, 8
        %v993 = vld [vmem:[%s992] sm:$0xff]
        %v995 = vsel %vm597, %v967, 0
        %v998 = vsel %vm597, %v990, 0
        %1000 = vmatpush.msra.mxu0 0.0
        %1001 = vmatpush.msra.mxu0 0.0
        %1002 = vmatpush.msra.mxu0 0.0
        %1003 = vmatpush.msra.mxu0 0.0
        %1004 = vmatpush.msra.mxu0 0.0
        %1005 = vmatpush.msra.mxu0 0.0
        %1006 = vmatpush.msra.mxu0 0.0
        %1007 = vmatpush.msra.mxu0 0.0
        %1008 = vmatpush.msra.mxu0 0.0
        %1009 = vmatpush.msra.mxu0 0.0
        %1010 = vmatpush.msra.mxu0 0.0
        %1011 = vmatpush.msra.mxu0 0.0
        %1012 = vmatpush.msra.mxu0 0.0
        %1013 = vmatpush.msra.mxu0 0.0
        %1014 = vmatpush.msra.mxu0 0.0
        %1015 = vmatpush.msra.mxu0 %v993
        %1016 = vmatmul.f32.gmra.mxu0 %v995
        %v1017 = vpop.f32.mrf.mxu0
        %v1018 = vadd.f32 0.0, %v1017
        %1019 = vmatmul.f32.gmra.mxu0 %v998
        %v1020 = vpop.f32.mrf.mxu0
        %v1021 = vadd.f32 0.0, %v1020
        %1022 = vdwg.mxu0
        %v1024 = vsel %vm597, %v719, 0
        %v1027 = vsel %vm597, %v742, 0
        %1029 = vmatpush.msra.mxu0 0.0
        %1030 = vmatpush.msra.mxu0 0.0
        %1031 = vmatpush.msra.mxu0 0.0
        %1032 = vmatpush.msra.mxu0 0.0
        %1033 = vmatpush.msra.mxu0 0.0
        %1034 = vmatpush.msra.mxu0 0.0
        %1035 = vmatpush.msra.mxu0 0.0
        %1036 = vmatpush.msra.mxu0 0.0
        %1037 = vmatpush.msra.mxu0 0.0
        %1038 = vmatpush.msra.mxu0 0.0
        %1039 = vmatpush.msra.mxu0 0.0
        %1040 = vmatpush.msra.mxu0 0.0
        %1041 = vmatpush.msra.mxu0 0.0
        %1042 = vmatpush.msra.mxu0 0.0
        %1043 = vmatpush.msra.mxu0 0.0
        %1044 = vmatpush.msra.mxu0 %v744
        %1045 = vmatmul.f32.gmra.mxu0 %v1024
        %v1046 = vpop.f32.mrf.mxu0
        %v1047 = vadd.f32 %v1018, %v1046
        %1048 = vmatmul.f32.gmra.mxu0 %v1027
        %v1049 = vpop.f32.mrf.mxu0
        %v1050 = vadd.f32 %v1021, %v1049
        %1051 = vdwg.mxu0
        %s1052 = scalar_lea.vmem %s5, 64
        %v1053 = vld [vmem:[%s1052] sm:$0xff]
        %v1054 = vld [vmem:[%s1052 + $0x8] sm:$0xff]
        %v1055 = vld [vmem:[%s1052 + $0x10] sm:$0xff]
        %v1056 = vld [vmem:[%s1052 + $0x18] sm:$0xff]
        %s1057 = scalar_lea.vmem %s6, 2
        %v1058 = vld [vmem:[%s1057] sm:$0x1]
        %v1060 = vperm.slane %v1058, 0
        %1062 = vmatpush.msra.mxu0 0.0
        %1063 = vmatpush.msra.mxu0 0.0
        %1064 = vmatpush.msra.mxu0 0.0
        %1065 = vmatpush.msra.mxu0 0.0
        %1066 = vmatpush.msra.mxu0 0.0
        %1067 = vmatpush.msra.mxu0 0.0
        %1068 = vmatpush.msra.mxu0 0.0
        %1069 = vmatpush.msra.mxu0 0.0
        %1070 = vmatpush.msra.mxu0 0.0
        %1071 = vmatpush.msra.mxu0 0.0
        %1072 = vmatpush.msra.mxu0 0.0
        %1073 = vmatpush.msra.mxu0 0.0
        %1074 = vmatpush.msra.mxu0 %v1056
        %1075 = vmatpush.msra.mxu0 %v1055
        %1076 = vmatpush.msra.mxu0 %v1054
        %1077 = vmatpush.msra.mxu0 %v1053
        %1078 = vmatmul.f32.gmra.mxu0 %v501
        %v1079 = vpop.f32.mrf.mxu0
        %v1080 = vadd.f32 %v1060, %v1079
        %1081 = vmatmul.f32.gmra.mxu0 %v504
        %v1082 = vpop.f32.mrf.mxu0
        %v1083 = vadd.f32 %v1060, %v1082
        %1084 = vdwg.mxu0
        %v1085 = vmul.f32 %v1080, 0.35355338
        %v1086 = vmul.f32 %v1083, 0.35355338
        %s1087 = scalar_lea.vmem %s5, 192
        %v1088 = vld [vmem:[%s1087] sm:$0xff]
        %v1089 = vld [vmem:[%s1087 + $0x8] sm:$0xff]
        %v1090 = vld [vmem:[%s1087 + $0x10] sm:$0xff]
        %v1091 = vld [vmem:[%s1087 + $0x18] sm:$0xff]
        %s1092 = scalar_lea.vmem %s6, 6
        %v1093 = vld [vmem:[%s1092] sm:$0x1]
        %v1095 = vperm.slane %v1093, 0
        %1097 = vmatpush.msra.mxu0 0.0
        %1098 = vmatpush.msra.mxu0 0.0
        %1099 = vmatpush.msra.mxu0 0.0
        %1100 = vmatpush.msra.mxu0 0.0
        %1101 = vmatpush.msra.mxu0 0.0
        %1102 = vmatpush.msra.mxu0 0.0
        %1103 = vmatpush.msra.mxu0 0.0
        %1104 = vmatpush.msra.mxu0 0.0
        %1105 = vmatpush.msra.mxu0 0.0
        %1106 = vmatpush.msra.mxu0 0.0
        %1107 = vmatpush.msra.mxu0 0.0
        %1108 = vmatpush.msra.mxu0 0.0
        %1109 = vmatpush.msra.mxu0 %v1091
        %1110 = vmatpush.msra.mxu0 %v1090
        %1111 = vmatpush.msra.mxu0 %v1089
        %1112 = vmatpush.msra.mxu0 %v1088
        %1113 = vmatmul.f32.gmra.mxu0 %v501
        %v1114 = vpop.f32.mrf.mxu0
        %v1115 = vadd.f32 %v1095, %v1114
        %1116 = vmatmul.f32.gmra.mxu0 %v504
        %v1117 = vpop.f32.mrf.mxu0
        %v1118 = vadd.f32 %v1095, %v1117
        %1119 = vdwg.mxu0
        %s1120 = scalar_lea.vmem %s5, 320
        %v1121 = vld [vmem:[%s1120] sm:$0xff]
        %v1122 = vld [vmem:[%s1120 + $0x8] sm:$0xff]
        %v1123 = vld [vmem:[%s1120 + $0x10] sm:$0xff]
        %v1124 = vld [vmem:[%s1120 + $0x18] sm:$0xff]
        %s1125 = scalar_lea.vmem %s6, 10
        %v1126 = vld [vmem:[%s1125] sm:$0x1]
        %v1128 = vperm.slane %v1126, 0
        %1130 = vmatpush.msra.mxu0 0.0
        %1131 = vmatpush.msra.mxu0 0.0
        %1132 = vmatpush.msra.mxu0 0.0
        %1133 = vmatpush.msra.mxu0 0.0
        %1134 = vmatpush.msra.mxu0 0.0
        %1135 = vmatpush.msra.mxu0 0.0
        %1136 = vmatpush.msra.mxu0 0.0
        %1137 = vmatpush.msra.mxu0 0.0
        %1138 = vmatpush.msra.mxu0 0.0
        %1139 = vmatpush.msra.mxu0 0.0
        %1140 = vmatpush.msra.mxu0 0.0
        %1141 = vmatpush.msra.mxu0 0.0
        %1142 = vmatpush.msra.mxu0 %v1124
        %1143 = vmatpush.msra.mxu0 %v1123
        %1144 = vmatpush.msra.mxu0 %v1122
        %1145 = vmatpush.msra.mxu0 %v1121
        %1146 = vmatmul.f32.gmra.mxu0 %v501
        %v1147 = vpop.f32.mrf.mxu0
        %v1148 = vadd.f32 %v1128, %v1147
        %1149 = vmatmul.f32.gmra.mxu0 %v504
        %v1150 = vpop.f32.mrf.mxu0
        %v1151 = vadd.f32 %v1128, %v1150
        %1152 = vdwg.mxu0
        %v1154 = vsel %vm597, %v1085, 0
        %v1157 = vsel %vm597, %v1115, 0
        %1159 = vmatpush.xpose.msra.mxu0 0.0
        %1160 = vmatpush.xpose.msra.mxu0 0.0
        %1161 = vmatpush.xpose.msra.mxu0 0.0
        %1162 = vmatpush.xpose.msra.mxu0 0.0
        %1163 = vmatpush.xpose.msra.mxu0 0.0
        %1164 = vmatpush.xpose.msra.mxu0 0.0
        %1165 = vmatpush.xpose.msra.mxu0 0.0
        %1166 = vmatpush.xpose.msra.mxu0 0.0
        %1167 = vmatpush.xpose.msra.mxu0 0.0
        %1168 = vmatpush.xpose.msra.mxu0 0.0
        %1169 = vmatpush.xpose.msra.mxu0 0.0
        %1170 = vmatpush.xpose.msra.mxu0 0.0
        %1171 = vmatpush.xpose.msra.mxu0 0.0
        %1172 = vmatpush.xpose.msra.mxu0 0.0
        %1173 = vmatpush.xpose.msra.mxu0 0.0
        %1174 = vmatpush.xpose.msra.mxu0 %v1157
        %1175 = vmatmul.f32.gmra.mxu0 %v1154
        %v1176 = vpop.f32.mrf.mxu0
        %v1177 = vadd.f32 %v488, %v1176
        %1178 = vdwg.mxu0
        %v1180 = vsel %vm597, %v1086, 0
        %v1183 = vsel %vm597, %v1118, 0
        %1185 = vmatpush.xpose.msra.mxu0 0.0
        %1186 = vmatpush.xpose.msra.mxu0 0.0
        %1187 = vmatpush.xpose.msra.mxu0 0.0
        %1188 = vmatpush.xpose.msra.mxu0 0.0
        %1189 = vmatpush.xpose.msra.mxu0 0.0
        %1190 = vmatpush.xpose.msra.mxu0 0.0
        %1191 = vmatpush.xpose.msra.mxu0 0.0
        %1192 = vmatpush.xpose.msra.mxu0 0.0
        %1193 = vmatpush.xpose.msra.mxu0 0.0
        %1194 = vmatpush.xpose.msra.mxu0 0.0
        %1195 = vmatpush.xpose.msra.mxu0 0.0
        %1196 = vmatpush.xpose.msra.mxu0 0.0
        %1197 = vmatpush.xpose.msra.mxu0 0.0
        %1198 = vmatpush.xpose.msra.mxu0 0.0
        %1199 = vmatpush.xpose.msra.mxu0 0.0
        %1200 = vmatpush.xpose.msra.mxu0 %v1183
        %1201 = vmatmul.f32.gmra.mxu0 %v1180
        %v1202 = vpop.f32.mrf.mxu0
        %v1203 = vadd.f32 %v488, %v1202
        %1204 = vdwg.mxu0
        %v1205 = vsel %vm597, %v1177, -inf
        %1206 = vmax.xlane.f32.xlu0 %v1205
        %v1207 = vpop.xlane.xlu0 %1206
        %v1208 = vsel %vm597, %v1203, -inf
        %1209 = vmax.xlane.f32.xlu0 %v1208
        %v1210 = vpop.xlane.xlu0 %1209
        %v1211 = vsub.f32 %v1177, %v1207
        %v1212 = vsub.f32 %v1203, %v1210
        %v1213 = vmul.f32 %v1211, 1.442695
        %v1214 = vpow.pop %v1213
        %v1215 = vmul.f32 %v1212, 1.442695
        %v1216 = vpow.pop %v1215
        %v1217 = vsel %vm597, %v1214, 0.0
        %1218 = vadd.xlane.f32.xlu0 %v1217
        %v1219 = vpop.xlane.xlu0 %1218
        %v1220 = vsel %vm597, %v1216, 0.0
        %1221 = vadd.xlane.f32.xlu0 %v1220
        %v1222 = vpop.xlane.xlu0 %1221
        %v1223 = vrcp.pop %v1219
        %v1224 = vmul.f32 %v1219, %v1223
        %v1225 = vsub.f32 1.0, %v1224
        %v1226 = vmul.f32 %v1223, %v1225
        %v1227 = vadd.f32 %v1223, %v1226
        %vm1228 = vweird.f32 %v1219
        %vm1229 = vweird.f32 %v1223
        %vm1230 = vmor %vm1228, %vm1229
        %v1231 = vsel %vm1230, %v1223, %v1227
        %v1232 = vand.u32 2147483647, %v1219
        %vm1233 = vcmp.eq.f32.partialorder %v1232, 8.507059e+37
        %v1234 = vand.u32 %v1219, 2147483648
        %v1235 = vor.u32 1.1754944e-38, %v1234
        %v1236 = vsel %vm1233, %v1235, %v1231
        %v1237 = vmul.f32 %v1214, %v1236
        %v1238 = vrcp.pop %v1222
        %v1239 = vmul.f32 %v1222, %v1238
        %v1240 = vsub.f32 1.0, %v1239
        %v1241 = vmul.f32 %v1238, %v1240
        %v1242 = vadd.f32 %v1238, %v1241
        %vm1243 = vweird.f32 %v1222
        %vm1244 = vweird.f32 %v1238
        %vm1245 = vmor %vm1243, %vm1244
        %v1246 = vsel %vm1245, %v1238, %v1242
        %v1247 = vand.u32 2147483647, %v1222
        %vm1248 = vcmp.eq.f32.partialorder %v1247, 8.507059e+37
        %v1249 = vand.u32 %v1222, 2147483648
        %v1250 = vor.u32 1.1754944e-38, %v1249
        %v1251 = vsel %vm1248, %v1250, %v1246
        %v1252 = vmul.f32 %v1216, %v1251
        %v1254 = vsel %vm597, %v1237, 0
        %1256 = vmatpush.msra.mxu0 0.0
        %1257 = vmatpush.msra.mxu0 0.0
        %1258 = vmatpush.msra.mxu0 0.0
        %1259 = vmatpush.msra.mxu0 0.0
        %1260 = vmatpush.msra.mxu0 0.0
        %1261 = vmatpush.msra.mxu0 0.0
        %1262 = vmatpush.msra.mxu0 0.0
        %1263 = vmatpush.msra.mxu0 0.0
        %1264 = vmatpush.msra.mxu0 0.0
        %1265 = vmatpush.msra.mxu0 0.0
        %1266 = vmatpush.msra.mxu0 0.0
        %1267 = vmatpush.msra.mxu0 0.0
        %1268 = vmatpush.msra.mxu0 0.0
        %1269 = vmatpush.msra.mxu0 0.0
        %1270 = vmatpush.msra.mxu0 0.0
        %1271 = vmatpush.msra.mxu0 %v1148
        %1272 = vmatmul.f32.gmra.mxu0 %v1254
        %v1273 = vpop.f32.mrf.mxu0
        %v1274 = vadd.f32 0.0, %v1273
        %1275 = vdwg.mxu0
        %v1277 = vsel %vm597, %v1252, 0
        %1279 = vmatpush.msra.mxu0 0.0
        %1280 = vmatpush.msra.mxu0 0.0
        %1281 = vmatpush.msra.mxu0 0.0
        %1282 = vmatpush.msra.mxu0 0.0
        %1283 = vmatpush.msra.mxu0 0.0
        %1284 = vmatpush.msra.mxu0 0.0
        %1285 = vmatpush.msra.mxu0 0.0
        %1286 = vmatpush.msra.mxu0 0.0
        %1287 = vmatpush.msra.mxu0 0.0
        %1288 = vmatpush.msra.mxu0 0.0
        %1289 = vmatpush.msra.mxu0 0.0
        %1290 = vmatpush.msra.mxu0 0.0
        %1291 = vmatpush.msra.mxu0 0.0
        %1292 = vmatpush.msra.mxu0 0.0
        %1293 = vmatpush.msra.mxu0 0.0
        %1294 = vmatpush.msra.mxu0 %v1151
        %1295 = vmatmul.f32.gmra.mxu0 %v1277
        %v1296 = vpop.f32.mrf.mxu0
        %v1297 = vadd.f32 0.0, %v1296
        %1298 = vdwg.mxu0
        %s1299 = scalar_lea.vmem %s7, 16
        %v1300 = vld [vmem:[%s1299] sm:$0xff]
        %v1302 = vsel %vm597, %v1274, 0
        %v1305 = vsel %vm597, %v1297, 0
        %1307 = vmatpush.msra.mxu0 0.0
        %1308 = vmatpush.msra.mxu0 0.0
        %1309 = vmatpush.msra.mxu0 0.0
        %1310 = vmatpush.msra.mxu0 0.0
        %1311 = vmatpush.msra.mxu0 0.0
        %1312 = vmatpush.msra.mxu0 0.0
        %1313 = vmatpush.msra.mxu0 0.0
        %1314 = vmatpush.msra.mxu0 0.0
        %1315 = vmatpush.msra.mxu0 0.0
        %1316 = vmatpush.msra.mxu0 0.0
        %1317 = vmatpush.msra.mxu0 0.0
        %1318 = vmatpush.msra.mxu0 0.0
        %1319 = vmatpush.msra.mxu0 0.0
        %1320 = vmatpush.msra.mxu0 0.0
        %1321 = vmatpush.msra.mxu0 0.0
        %1322 = vmatpush.msra.mxu0 %v1300
        %1323 = vmatmul.f32.gmra.mxu0 %v1302
        %v1324 = vpop.f32.mrf.mxu0
        %v1325 = vadd.f32 0.0, %v1324
        %1326 = vmatmul.f32.gmra.mxu0 %v1305
        %v1327 = vpop.f32.mrf.mxu0
        %v1328 = vadd.f32 0.0, %v1327
        %1329 = vdwg.mxu0
        %v1330 = vadd.f32 %v1047, %v1325
        %v1331 = vadd.f32 %v1050, %v1328
        %s1332 = scalar_lea.vmem %s5, 96
        %v1333 = vld [vmem:[%s1332] sm:$0xff]
        %v1334 = vld [vmem:[%s1332 + $0x8] sm:$0xff]
        %v1335 = vld [vmem:[%s1332 + $0x10] sm:$0xff]
        %v1336 = vld [vmem:[%s1332 + $0x18] sm:$0xff]
        %s1337 = scalar_lea.vmem %s6, 3
        %v1338 = vld [vmem:[%s1337] sm:$0x1]
        %v1340 = vperm.slane %v1338, 0
        %1342 = vmatpush.msra.mxu0 0.0
        %1343 = vmatpush.msra.mxu0 0.0
        %1344 = vmatpush.msra.mxu0 0.0
        %1345 = vmatpush.msra.mxu0 0.0
        %1346 = vmatpush.msra.mxu0 0.0
        %1347 = vmatpush.msra.mxu0 0.0
        %1348 = vmatpush.msra.mxu0 0.0
        %1349 = vmatpush.msra.mxu0 0.0
        %1350 = vmatpush.msra.mxu0 0.0
        %1351 = vmatpush.msra.mxu0 0.0
        %1352 = vmatpush.msra.mxu0 0.0
        %1353 = vmatpush.msra.mxu0 0.0
        %1354 = vmatpush.msra.mxu0 %v1336
        %1355 = vmatpush.msra.mxu0 %v1335
        %1356 = vmatpush.msra.mxu0 %v1334
        %1357 = vmatpush.msra.mxu0 %v1333
        %1358 = vmatmul.f32.gmra.mxu0 %v501
        %v1359 = vpop.f32.mrf.mxu0
        %v1360 = vadd.f32 %v1340, %v1359
        %1361 = vmatmul.f32.gmra.mxu0 %v504
        %v1362 = vpop.f32.mrf.mxu0
        %v1363 = vadd.f32 %v1340, %v1362
        %1364 = vdwg.mxu0
        %v1365 = vmul.f32 %v1360, 0.35355338
        %v1366 = vmul.f32 %v1363, 0.35355338
        %s1367 = scalar_lea.vmem %s5, 224
        %v1368 = vld [vmem:[%s1367] sm:$0xff]
        %v1369 = vld [vmem:[%s1367 + $0x8] sm:$0xff]
        %v1370 = vld [vmem:[%s1367 + $0x10] sm:$0xff]
        %v1371 = vld [vmem:[%s1367 + $0x18] sm:$0xff]
        %s1372 = scalar_lea.vmem %s6, 7
        %v1373 = vld [vmem:[%s1372] sm:$0x1]
        %v1375 = vperm.slane %v1373, 0
        %1377 = vmatpush.msra.mxu0 0.0
        %1378 = vmatpush.msra.mxu0 0.0
        %1379 = vmatpush.msra.mxu0 0.0
        %1380 = vmatpush.msra.mxu0 0.0
        %1381 = vmatpush.msra.mxu0 0.0
        %1382 = vmatpush.msra.mxu0 0.0
        %1383 = vmatpush.msra.mxu0 0.0
        %1384 = vmatpush.msra.mxu0 0.0
        %1385 = vmatpush.msra.mxu0 0.0
        %1386 = vmatpush.msra.mxu0 0.0
        %1387 = vmatpush.msra.mxu0 0.0
        %1388 = vmatpush.msra.mxu0 0.0
        %1389 = vmatpush.msra.mxu0 %v1371
        %1390 = vmatpush.msra.mxu0 %v1370
        %1391 = vmatpush.msra.mxu0 %v1369
        %1392 = vmatpush.msra.mxu0 %v1368
        %1393 = vmatmul.f32.gmra.mxu0 %v501
        %v1394 = vpop.f32.mrf.mxu0
        %v1395 = vadd.f32 %v1375, %v1394
        %1396 = vmatmul.f32.gmra.mxu0 %v504
        %v1397 = vpop.f32.mrf.mxu0
        %v1398 = vadd.f32 %v1375, %v1397
        %1399 = vdwg.mxu0
        %s1400 = scalar_lea.vmem %s5, 352
        %v1401 = vld [vmem:[%s1400] sm:$0xff]
        %v1402 = vld [vmem:[%s1400 + $0x8] sm:$0xff]
        %v1403 = vld [vmem:[%s1400 + $0x10] sm:$0xff]
        %v1404 = vld [vmem:[%s1400 + $0x18] sm:$0xff]
        %s1405 = scalar_lea.vmem %s6, 11
        %v1406 = vld [vmem:[%s1405] sm:$0x1]
        %v1408 = vperm.slane %v1406, 0
        %1410 = vmatpush.msra.mxu0 0.0
        %1411 = vmatpush.msra.mxu0 0.0
        %1412 = vmatpush.msra.mxu0 0.0
        %1413 = vmatpush.msra.mxu0 0.0
        %1414 = vmatpush.msra.mxu0 0.0
        %1415 = vmatpush.msra.mxu0 0.0
        %1416 = vmatpush.msra.mxu0 0.0
        %1417 = vmatpush.msra.mxu0 0.0
        %1418 = vmatpush.msra.mxu0 0.0
        %1419 = vmatpush.msra.mxu0 0.0
        %1420 = vmatpush.msra.mxu0 0.0
        %1421 = vmatpush.msra.mxu0 0.0
        %1422 = vmatpush.msra.mxu0 %v1404
        %1423 = vmatpush.msra.mxu0 %v1403
        %1424 = vmatpush.msra.mxu0 %v1402
        %1425 = vmatpush.msra.mxu0 %v1401
        %1426 = vmatmul.f32.gmra.mxu0 %v501
        %v1427 = vpop.f32.mrf.mxu0
        %v1428 = vadd.f32 %v1408, %v1427
        %1429 = vmatmul.f32.gmra.mxu0 %v504
        %v1430 = vpop.f32.mrf.mxu0
        %v1431 = vadd.f32 %v1408, %v1430
        %1432 = vdwg.mxu0
        %v1434 = vsel %vm597, %v1365, 0
        %v1437 = vsel %vm597, %v1395, 0
        %1439 = vmatpush.xpose.msra.mxu0 0.0
        %1440 = vmatpush.xpose.msra.mxu0 0.0
        %1441 = vmatpush.xpose.msra.mxu0 0.0
        %1442 = vmatpush.xpose.msra.mxu0 0.0
        %1443 = vmatpush.xpose.msra.mxu0 0.0
        %1444 = vmatpush.xpose.msra.mxu0 0.0
        %1445 = vmatpush.xpose.msra.mxu0 0.0
        %1446 = vmatpush.xpose.msra.mxu0 0.0
        %1447 = vmatpush.xpose.msra.mxu0 0.0
        %1448 = vmatpush.xpose.msra.mxu0 0.0
        %1449 = vmatpush.xpose.msra.mxu0 0.0
        %1450 = vmatpush.xpose.msra.mxu0 0.0
        %1451 = vmatpush.xpose.msra.mxu0 0.0
        %1452 = vmatpush.xpose.msra.mxu0 0.0
        %1453 = vmatpush.xpose.msra.mxu0 0.0
        %1454 = vmatpush.xpose.msra.mxu0 %v1437
        %1455 = vmatmul.f32.gmra.mxu0 %v1434
        %v1456 = vpop.f32.mrf.mxu0
        %v1457 = vadd.f32 %v488, %v1456
        %1458 = vdwg.mxu0
        %v1460 = vsel %vm597, %v1366, 0
        %v1463 = vsel %vm597, %v1398, 0
        %1465 = vmatpush.xpose.msra.mxu0 0.0
        %1466 = vmatpush.xpose.msra.mxu0 0.0
        %1467 = vmatpush.xpose.msra.mxu0 0.0
        %1468 = vmatpush.xpose.msra.mxu0 0.0
        %1469 = vmatpush.xpose.msra.mxu0 0.0
        %1470 = vmatpush.xpose.msra.mxu0 0.0
        %1471 = vmatpush.xpose.msra.mxu0 0.0
        %1472 = vmatpush.xpose.msra.mxu0 0.0
        %1473 = vmatpush.xpose.msra.mxu0 0.0
        %1474 = vmatpush.xpose.msra.mxu0 0.0
        %1475 = vmatpush.xpose.msra.mxu0 0.0
        %1476 = vmatpush.xpose.msra.mxu0 0.0
        %1477 = vmatpush.xpose.msra.mxu0 0.0
        %1478 = vmatpush.xpose.msra.mxu0 0.0
        %1479 = vmatpush.xpose.msra.mxu0 0.0
        %1480 = vmatpush.xpose.msra.mxu0 %v1463
        %1481 = vmatmul.f32.gmra.mxu0 %v1460
        %v1482 = vpop.f32.mrf.mxu0
        %v1483 = vadd.f32 %v488, %v1482
        %1484 = vdwg.mxu0
        %v1485 = vsel %vm597, %v1457, -inf
        %1486 = vmax.xlane.f32.xlu0 %v1485
        %v1487 = vpop.xlane.xlu0 %1486
        %v1488 = vsel %vm597, %v1483, -inf
        %1489 = vmax.xlane.f32.xlu0 %v1488
        %v1490 = vpop.xlane.xlu0 %1489
        %v1491 = vsub.f32 %v1457, %v1487
        %v1492 = vsub.f32 %v1483, %v1490
        %v1493 = vmul.f32 %v1491, 1.442695
        %v1494 = vpow.pop %v1493
        %v1495 = vmul.f32 %v1492, 1.442695
        %v1496 = vpow.pop %v1495
        %v1497 = vsel %vm597, %v1494, 0.0
        %1498 = vadd.xlane.f32.xlu0 %v1497
        %v1499 = vpop.xlane.xlu0 %1498
        %v1500 = vsel %vm597, %v1496, 0.0
        %1501 = vadd.xlane.f32.xlu0 %v1500
        %v1502 = vpop.xlane.xlu0 %1501
        %v1503 = vrcp.pop %v1499
        %v1504 = vmul.f32 %v1499, %v1503
        %v1505 = vsub.f32 1.0, %v1504
        %v1506 = vmul.f32 %v1503, %v1505
        %v1507 = vadd.f32 %v1503, %v1506
        %vm1508 = vweird.f32 %v1499
        %vm1509 = vweird.f32 %v1503
        %vm1510 = vmor %vm1508, %vm1509
        %v1511 = vsel %vm1510, %v1503, %v1507
        %v1512 = vand.u32 2147483647, %v1499
        %vm1513 = vcmp.eq.f32.partialorder %v1512, 8.507059e+37
        %v1514 = vand.u32 %v1499, 2147483648
        %v1515 = vor.u32 1.1754944e-38, %v1514
        %v1516 = vsel %vm1513, %v1515, %v1511
        %v1517 = vmul.f32 %v1494, %v1516
        %v1518 = vrcp.pop %v1502
        %v1519 = vmul.f32 %v1502, %v1518
        %v1520 = vsub.f32 1.0, %v1519
        %v1521 = vmul.f32 %v1518, %v1520
        %v1522 = vadd.f32 %v1518, %v1521
        %vm1523 = vweird.f32 %v1502
        %vm1524 = vweird.f32 %v1518
        %vm1525 = vmor %vm1523, %vm1524
        %v1526 = vsel %vm1525, %v1518, %v1522
        %v1527 = vand.u32 2147483647, %v1502
        %vm1528 = vcmp.eq.f32.partialorder %v1527, 8.507059e+37
        %v1529 = vand.u32 %v1502, 2147483648
        %v1530 = vor.u32 1.1754944e-38, %v1529
        %v1531 = vsel %vm1528, %v1530, %v1526
        %v1532 = vmul.f32 %v1496, %v1531
        %v1534 = vsel %vm597, %v1517, 0
        %1536 = vmatpush.msra.mxu0 0.0
        %1537 = vmatpush.msra.mxu0 0.0
        %1538 = vmatpush.msra.mxu0 0.0
        %1539 = vmatpush.msra.mxu0 0.0
        %1540 = vmatpush.msra.mxu0 0.0
        %1541 = vmatpush.msra.mxu0 0.0
        %1542 = vmatpush.msra.mxu0 0.0
        %1543 = vmatpush.msra.mxu0 0.0
        %1544 = vmatpush.msra.mxu0 0.0
        %1545 = vmatpush.msra.mxu0 0.0
        %1546 = vmatpush.msra.mxu0 0.0
        %1547 = vmatpush.msra.mxu0 0.0
        %1548 = vmatpush.msra.mxu0 0.0
        %1549 = vmatpush.msra.mxu0 0.0
        %1550 = vmatpush.msra.mxu0 0.0
        %1551 = vmatpush.msra.mxu0 %v1428
        %1552 = vmatmul.f32.gmra.mxu0 %v1534
        %v1553 = vpop.f32.mrf.mxu0
        %v1554 = vadd.f32 0.0, %v1553
        %1555 = vdwg.mxu0
        %v1557 = vsel %vm597, %v1532, 0
        %1559 = vmatpush.msra.mxu0 0.0
        %1560 = vmatpush.msra.mxu0 0.0
        %1561 = vmatpush.msra.mxu0 0.0
        %1562 = vmatpush.msra.mxu0 0.0
        %1563 = vmatpush.msra.mxu0 0.0
        %1564 = vmatpush.msra.mxu0 0.0
        %1565 = vmatpush.msra.mxu0 0.0
        %1566 = vmatpush.msra.mxu0 0.0
        %1567 = vmatpush.msra.mxu0 0.0
        %1568 = vmatpush.msra.mxu0 0.0
        %1569 = vmatpush.msra.mxu0 0.0
        %1570 = vmatpush.msra.mxu0 0.0
        %1571 = vmatpush.msra.mxu0 0.0
        %1572 = vmatpush.msra.mxu0 0.0
        %1573 = vmatpush.msra.mxu0 0.0
        %1574 = vmatpush.msra.mxu0 %v1431
        %1575 = vmatmul.f32.gmra.mxu0 %v1557
        %v1576 = vpop.f32.mrf.mxu0
        %v1577 = vadd.f32 0.0, %v1576
        %1578 = vdwg.mxu0
        %s1579 = scalar_lea.vmem %s7, 24
        %v1580 = vld [vmem:[%s1579] sm:$0xff]
        %v1582 = vsel %vm597, %v1554, 0
        %v1585 = vsel %vm597, %v1577, 0
        %1587 = vmatpush.msra.mxu0 0.0
        %1588 = vmatpush.msra.mxu0 0.0
        %1589 = vmatpush.msra.mxu0 0.0
        %1590 = vmatpush.msra.mxu0 0.0
        %1591 = vmatpush.msra.mxu0 0.0
        %1592 = vmatpush.msra.mxu0 0.0
        %1593 = vmatpush.msra.mxu0 0.0
        %1594 = vmatpush.msra.mxu0 0.0
        %1595 = vmatpush.msra.mxu0 0.0
        %1596 = vmatpush.msra.mxu0 0.0
        %1597 = vmatpush.msra.mxu0 0.0
        %1598 = vmatpush.msra.mxu0 0.0
        %1599 = vmatpush.msra.mxu0 0.0
        %1600 = vmatpush.msra.mxu0 0.0
        %1601 = vmatpush.msra.mxu0 0.0
        %1602 = vmatpush.msra.mxu0 %v1580
        %1603 = vmatmul.f32.gmra.mxu0 %v1582
        %v1604 = vpop.f32.mrf.mxu0
        %v1605 = vadd.f32 0.0, %v1604
        %1606 = vmatmul.f32.gmra.mxu0 %v1585
        %v1607 = vpop.f32.mrf.mxu0
        %v1608 = vadd.f32 0.0, %v1607
        %1609 = vdwg.mxu0
        %v1610 = vadd.f32 %v1330, %v1605
        %v1611 = vadd.f32 %v1331, %v1608
        %v1612 = vld [vmem:[%s8] sm:$0x1]
        %v1614 = vperm.slane %v1612, 0
        %v1616 = vadd.f32 %v1610, %v1614
        %v1617 = vadd.f32 %v1611, %v1614
        %v1618 = vadd.f32 %v1616, %v478
        %v1619 = vadd.f32 %v1617, %v479
        %s1620 = scalar_lea.vmem %s8, 1
        %v1621 = vld [vmem:[%s1620] sm:$0x1]
        %s1622 = scalar_lea.vmem %s8, 2
        %v1623 = vld [vmem:[%s1622] sm:$0x1]
        %v1624 = vsel %vm499, %v1618, 0.0
        %1625 = vadd.xlane.f32.xlu0 %v1624
        %v1626 = vpop.xlane.xlu0 %1625
        %v1627 = vsel %vm499, %v1619, 0.0
        %1628 = vadd.xlane.f32.xlu0 %v1627
        %v1629 = vpop.xlane.xlu0 %1628
        %v1630 = vrcp.pop 32.0
        %v1631 = vmul.f32 32.0, %v1630
        %v1632 = vsub.f32 1.0, %v1631
        %v1633 = vmul.f32 %v1630, %v1632
        %v1634 = vadd.f32 %v1630, %v1633
        %vm1635 = vweird.f32 %v1630
        %v1636 = vsel %vm1635, %v1630, %v1634
        %v1637 = vmul.f32 %v1626, %v1636
        %v1638 = vmul.f32 %v1629, %v1636
        %v1639 = vsub.f32 %v1618, %v1637
        %v1640 = vsub.f32 %v1619, %v1638
        %v1641 = vmul.f32 %v1639, %v1639
        %v1642 = vmul.f32 %v1640, %v1640
        %v1643 = vsel %vm499, %v1641, 0.0
        %1644 = vadd.xlane.f32.xlu0 %v1643
        %v1645 = vpop.xlane.xlu0 %1644
        %v1646 = vsel %vm499, %v1642, 0.0
        %1647 = vadd.xlane.f32.xlu0 %v1646
        %v1648 = vpop.xlane.xlu0 %1647
        %v1649 = vmul.f32 %v1645, %v1636
        %v1650 = vmul.f32 %v1648, %v1636
        %v1651 = vadd.f32 %v1649, 1e-05
        %v1652 = vadd.f32 %v1650, 1e-05
        %v1653 = vrsqrt.pop %v1651
        %v1654 = vmul.f32 %v1653, %v1651
        %v1655 = vmul.f32 %v1654, %v1653
        %v1656 = vmul.f32 0.5, %v1655
        %v1657 = vsub.f32 1.5, %v1656
        %v1658 = vmul.f32 %v1653, %v1657
        %vm1659 = vweird.f32 %v1651
        %vm1660 = vweird.f32 %v1653
        %vm1661 = vmor %vm1659, %vm1660
        %v1662 = vsel %vm1661, %v1653, %v1658
        %v1663 = vrsqrt.pop %v1652
        %v1664 = vmul.f32 %v1663, %v1652
        %v1665 = vmul.f32 %v1664, %v1663
        %v1666 = vmul.f32 0.5, %v1665
        %v1667 = vsub.f32 1.5, %v1666
        %v1668 = vmul.f32 %v1663, %v1667
        %vm1669 = vweird.f32 %v1652
        %vm1670 = vweird.f32 %v1663
        %vm1671 = vmor %vm1669, %vm1670
        %v1672 = vsel %vm1671, %v1663, %v1668
        %v1673 = vmul.f32 %v1639, %v1662
        %v1674 = vmul.f32 %v1640, %v1672
        %v1676 = vperm.slane %v1621, 0
        %v1678 = vmul.f32 %v1673, %v1676
        %v1679 = vmul.f32 %v1674, %v1676
        %v1681 = vperm.slane %v1623, 0
        %v1683 = vadd.f32 %v1678, %v1681
        %v1684 = vadd.f32 %v1679, %v1681
        %s1685 = scalar_lea.vmem %s5, 384
        %v1686 = vld [vmem:[%s1685] sm:$0xff]
        %v1687 = vld [vmem:[%s1685 + $0x8] sm:$0xff]
        %v1688 = vld [vmem:[%s1685 + $0x10] sm:$0xff]
        %v1689 = vld [vmem:[%s1685 + $0x18] sm:$0xff]
        %s1690 = scalar_lea.vmem %s6, 12
        %v1691 = vld [vmem:[%s1690] sm:$0x1]
        %v1693 = vperm.slane %v1691, 0
        %v1696 = vsel %vm499, %v1683, 0
        %v1699 = vsel %vm499, %v1684, 0
        %1701 = vmatpush.msra.mxu0 0.0
        %1702 = vmatpush.msra.mxu0 0.0
        %1703 = vmatpush.msra.mxu0 0.0
        %1704 = vmatpush.msra.mxu0 0.0
        %1705 = vmatpush.msra.mxu0 0.0
        %1706 = vmatpush.msra.mxu0 0.0
        %1707 = vmatpush.msra.mxu0 0.0
        %1708 = vmatpush.msra.mxu0 0.0
        %1709 = vmatpush.msra.mxu0 0.0
        %1710 = vmatpush.msra.mxu0 0.0
        %1711 = vmatpush.msra.mxu0 0.0
        %1712 = vmatpush.msra.mxu0 0.0
        %1713 = vmatpush.msra.mxu0 %v1689
        %1714 = vmatpush.msra.mxu0 %v1688
        %1715 = vmatpush.msra.mxu0 %v1687
        %1716 = vmatpush.msra.mxu0 %v1686
        %1717 = vmatmul.f32.gmra.mxu0 %v1696
        %v1718 = vpop.f32.mrf.mxu0
        %v1719 = vadd.f32 %v1693, %v1718
        %1720 = vmatmul.f32.gmra.mxu0 %v1699
        %v1721 = vpop.f32.mrf.mxu0
        %v1722 = vadd.f32 %v1693, %v1721
        %1723 = vdwg.mxu0
        %v1724 = vmul.f32 %v1719, 0.35355338
        %v1725 = vmul.f32 %v1722, 0.35355338
        %s1726 = scalar_lea.vmem %s5, 512
        %v1727 = vld [vmem:[%s1726] sm:$0xff]
        %v1728 = vld [vmem:[%s1726 + $0x8] sm:$0xff]
        %v1729 = vld [vmem:[%s1726 + $0x10] sm:$0xff]
        %v1730 = vld [vmem:[%s1726 + $0x18] sm:$0xff]
        %s1731 = scalar_lea.vmem %s6, 16
        %v1732 = vld [vmem:[%s1731] sm:$0x1]
        %v1734 = vperm.slane %v1732, 0
        %v1737 = vsel %vm499, %v480, 0
        %v1740 = vsel %vm499, %v481, 0
        %v1743 = vsel %vm499, %v482, 0
        %v1746 = vsel %vm499, %v483, 0
        %1748 = vmatpush.msra.mxu0 0.0
        %1749 = vmatpush.msra.mxu0 0.0
        %1750 = vmatpush.msra.mxu0 0.0
        %1751 = vmatpush.msra.mxu0 0.0
        %1752 = vmatpush.msra.mxu0 0.0
        %1753 = vmatpush.msra.mxu0 0.0
        %1754 = vmatpush.msra.mxu0 0.0
        %1755 = vmatpush.msra.mxu0 0.0
        %1756 = vmatpush.msra.mxu0 0.0
        %1757 = vmatpush.msra.mxu0 0.0
        %1758 = vmatpush.msra.mxu0 0.0
        %1759 = vmatpush.msra.mxu0 0.0
        %1760 = vmatpush.msra.mxu0 %v1730
        %1761 = vmatpush.msra.mxu0 %v1729
        %1762 = vmatpush.msra.mxu0 %v1728
        %1763 = vmatpush.msra.mxu0 %v1727
        %1764 = vmatmul.f32.gmra.mxu0 %v1737
        %v1765 = vpop.f32.mrf.mxu0
        %v1766 = vadd.f32 %v1734, %v1765
        %1767 = vmatmul.f32.gmra.mxu0 %v1740
        %v1768 = vpop.f32.mrf.mxu0
        %v1769 = vadd.f32 %v1734, %v1768
        %1770 = vmatmul.f32.gmra.mxu0 %v1743
        %v1771 = vpop.f32.mrf.mxu0
        %v1772 = vadd.f32 %v1734, %v1771
        %1773 = vmatmul.f32.gmra.mxu0 %v1746
        %v1774 = vpop.f32.mrf.mxu0
        %v1775 = vadd.f32 %v1734, %v1774
        %1776 = vdwg.mxu0
        %s1777 = scalar_lea.vmem %s5, 640
        %v1778 = vld [vmem:[%s1777] sm:$0xff]
        %v1779 = vld [vmem:[%s1777 + $0x8] sm:$0xff]
        %v1780 = vld [vmem:[%s1777 + $0x10] sm:$0xff]
        %v1781 = vld [vmem:[%s1777 + $0x18] sm:$0xff]
        %s1782 = scalar_lea.vmem %s6, 20
        %v1783 = vld [vmem:[%s1782] sm:$0x1]
        %v1785 = vperm.slane %v1783, 0
        %v1788 = vsel %vm499, %v484, 0
        %v1791 = vsel %vm499, %v485, 0
        %v1794 = vsel %vm499, %v486, 0
        %v1797 = vsel %vm499, %v487, 0
        %1799 = vmatpush.msra.mxu0 0.0
        %1800 = vmatpush.msra.mxu0 0.0
        %1801 = vmatpush.msra.mxu0 0.0
        %1802 = vmatpush.msra.mxu0 0.0
        %1803 = vmatpush.msra.mxu0 0.0
        %1804 = vmatpush.msra.mxu0 0.0
        %1805 = vmatpush.msra.mxu0 0.0
        %1806 = vmatpush.msra.mxu0 0.0
        %1807 = vmatpush.msra.mxu0 0.0
        %1808 = vmatpush.msra.mxu0 0.0
        %1809 = vmatpush.msra.mxu0 0.0
        %1810 = vmatpush.msra.mxu0 0.0
        %1811 = vmatpush.msra.mxu0 %v1781
        %1812 = vmatpush.msra.mxu0 %v1780
        %1813 = vmatpush.msra.mxu0 %v1779
        %1814 = vmatpush.msra.mxu0 %v1778
        %1815 = vmatmul.f32.gmra.mxu0 %v1788
        %v1816 = vpop.f32.mrf.mxu0
        %v1817 = vadd.f32 %v1785, %v1816
        %1818 = vmatmul.f32.gmra.mxu0 %v1791
        %v1819 = vpop.f32.mrf.mxu0
        %v1820 = vadd.f32 %v1785, %v1819
        %1821 = vmatmul.f32.gmra.mxu0 %v1794
        %v1822 = vpop.f32.mrf.mxu0
        %v1823 = vadd.f32 %v1785, %v1822
        %1824 = vmatmul.f32.gmra.mxu0 %v1797
        %v1825 = vpop.f32.mrf.mxu0
        %v1826 = vadd.f32 %v1785, %v1825
        %1827 = vdwg.mxu0
        %v1830 = vperm.slane %v489, 0
        %v1831 = vperm.slane %v490, 0
        %v1835 = vsel %vm597, %v1724, 0
        %v1838 = vsel %vm597, %v1766, 0
        %v1841 = vsel %vm597, %v1769, 0
        %1843 = vmatpush.xpose.msra.mxu0 0.0
        %1844 = vmatpush.xpose.msra.mxu0 0.0
        %1845 = vmatpush.xpose.msra.mxu0 0.0
        %1846 = vmatpush.xpose.msra.mxu0 0.0
        %1847 = vmatpush.xpose.msra.mxu0 0.0
        %1848 = vmatpush.xpose.msra.mxu0 0.0
        %1849 = vmatpush.xpose.msra.mxu0 0.0
        %1850 = vmatpush.xpose.msra.mxu0 0.0
        %1851 = vmatpush.xpose.msra.mxu0 0.0
        %1852 = vmatpush.xpose.msra.mxu0 0.0
        %1853 = vmatpush.xpose.msra.mxu0 0.0
        %1854 = vmatpush.xpose.msra.mxu0 0.0
        %1855 = vmatpush.xpose.msra.mxu0 0.0
        %1856 = vmatpush.xpose.msra.mxu0 0.0
        %1857 = vmatpush.xpose.msra.mxu0 %v1841
        %1858 = vmatpush.xpose.msra.mxu0 %v1838
        %1859 = vmatmul.f32.gmra.mxu0 %v1835
        %v1860 = vpop.f32.mrf.mxu0
        %v1861 = vadd.f32 %v1830, %v1860
        %1862 = vdwg.mxu0
        %v1864 = vsel %vm597, %v1725, 0
        %v1867 = vsel %vm597, %v1772, 0
        %v1870 = vsel %vm597, %v1775, 0
        %1872 = vmatpush.xpose.msra.mxu0 0.0
        %1873 = vmatpush.xpose.msra.mxu0 0.0
        %1874 = vmatpush.xpose.msra.mxu0 0.0
        %1875 = vmatpush.xpose.msra.mxu0 0.0
        %1876 = vmatpush.xpose.msra.mxu0 0.0
        %1877 = vmatpush.xpose.msra.mxu0 0.0
        %1878 = vmatpush.xpose.msra.mxu0 0.0
        %1879 = vmatpush.xpose.msra.mxu0 0.0
        %1880 = vmatpush.xpose.msra.mxu0 0.0
        %1881 = vmatpush.xpose.msra.mxu0 0.0
        %1882 = vmatpush.xpose.msra.mxu0 0.0
        %1883 = vmatpush.xpose.msra.mxu0 0.0
        %1884 = vmatpush.xpose.msra.mxu0 0.0
        %1885 = vmatpush.xpose.msra.mxu0 0.0
        %1886 = vmatpush.xpose.msra.mxu0 %v1870
        %1887 = vmatpush.xpose.msra.mxu0 %v1867
        %1888 = vmatmul.f32.gmra.mxu0 %v1864
        %v1889 = vpop.f32.mrf.mxu0
        %v1890 = vadd.f32 %v1831, %v1889
        %1891 = vdwg.mxu0
        %vm1892 = vcmask 130048
        %v1893 = vsel %vm1892, %v1861, -inf
        %1894 = vmax.xlane.f32.xlu0 %v1893
        %v1895 = vpop.xlane.xlu0 %1894
        %v1896 = vsel %vm1892, %v1890, -inf
        %1897 = vmax.xlane.f32.xlu0 %v1896
        %v1898 = vpop.xlane.xlu0 %1897
        %v1899 = vsub.f32 %v1861, %v1895
        %v1900 = vsub.f32 %v1890, %v1898
        %v1901 = vmul.f32 %v1899, 1.442695
        %v1902 = vpow.pop %v1901
        %v1903 = vmul.f32 %v1900, 1.442695
        %v1904 = vpow.pop %v1903
        %v1905 = vsel %vm1892, %v1902, 0.0
        %1906 = vadd.xlane.f32.xlu0 %v1905
        %v1907 = vpop.xlane.xlu0 %1906
        %v1908 = vsel %vm1892, %v1904, 0.0
        %1909 = vadd.xlane.f32.xlu0 %v1908
        %v1910 = vpop.xlane.xlu0 %1909
        %v1911 = vrcp.pop %v1907
        %v1912 = vmul.f32 %v1907, %v1911
        %v1913 = vsub.f32 1.0, %v1912
        %v1914 = vmul.f32 %v1911, %v1913
        %v1915 = vadd.f32 %v1911, %v1914
        %vm1916 = vweird.f32 %v1907
        %vm1917 = vweird.f32 %v1911
        %vm1918 = vmor %vm1916, %vm1917
        %v1919 = vsel %vm1918, %v1911, %v1915
        %v1920 = vand.u32 2147483647, %v1907
        %vm1921 = vcmp.eq.f32.partialorder %v1920, 8.507059e+37
        %v1922 = vand.u32 %v1907, 2147483648
        %v1923 = vor.u32 1.1754944e-38, %v1922
        %v1924 = vsel %vm1921, %v1923, %v1919
        %v1925 = vmul.f32 %v1902, %v1924
        %v1926 = vrcp.pop %v1910
        %v1927 = vmul.f32 %v1910, %v1926
        %v1928 = vsub.f32 1.0, %v1927
        %v1929 = vmul.f32 %v1926, %v1928
        %v1930 = vadd.f32 %v1926, %v1929
        %vm1931 = vweird.f32 %v1910
        %vm1932 = vweird.f32 %v1926
        %vm1933 = vmor %vm1931, %vm1932
        %v1934 = vsel %vm1933, %v1926, %v1930
        %v1935 = vand.u32 2147483647, %v1910
        %vm1936 = vcmp.eq.f32.partialorder %v1935, 8.507059e+37
        %v1937 = vand.u32 %v1910, 2147483648
        %v1938 = vor.u32 1.1754944e-38, %v1937
        %v1939 = vsel %vm1936, %v1938, %v1934
        %v1940 = vmul.f32 %v1904, %v1939
        %v1942 = vsel %vm1892, %v1925, 0
        %1944 = vmatpush.msra.mxu0 0.0
        %1945 = vmatpush.msra.mxu0 0.0
        %1946 = vmatpush.msra.mxu0 0.0
        %1947 = vmatpush.msra.mxu0 0.0
        %1948 = vmatpush.msra.mxu0 0.0
        %1949 = vmatpush.msra.mxu0 0.0
        %1950 = vmatpush.msra.mxu0 0.0
        %1951 = vmatpush.msra.mxu0 0.0
        %1952 = vmatpush.msra.mxu0 0.0
        %1953 = vmatpush.msra.mxu0 0.0
        %1954 = vmatpush.msra.mxu0 0.0
        %1955 = vmatpush.msra.mxu0 0.0
        %1956 = vmatpush.msra.mxu0 0.0
        %1957 = vmatpush.msra.mxu0 0.0
        %1958 = vmatpush.msra.mxu0 %v1820
        %1959 = vmatpush.msra.mxu0 %v1817
        %1960 = vmatmul.f32.gmra.mxu0 %v1942
        %v1961 = vpop.f32.mrf.mxu0
        %v1962 = vadd.f32 0.0, %v1961
        %1963 = vdwg.mxu0
        %v1965 = vsel %vm1892, %v1940, 0
        %1967 = vmatpush.msra.mxu0 0.0
        %1968 = vmatpush.msra.mxu0 0.0
        %1969 = vmatpush.msra.mxu0 0.0
        %1970 = vmatpush.msra.mxu0 0.0
        %1971 = vmatpush.msra.mxu0 0.0
        %1972 = vmatpush.msra.mxu0 0.0
        %1973 = vmatpush.msra.mxu0 0.0
        %1974 = vmatpush.msra.mxu0 0.0
        %1975 = vmatpush.msra.mxu0 0.0
        %1976 = vmatpush.msra.mxu0 0.0
        %1977 = vmatpush.msra.mxu0 0.0
        %1978 = vmatpush.msra.mxu0 0.0
        %1979 = vmatpush.msra.mxu0 0.0
        %1980 = vmatpush.msra.mxu0 0.0
        %1981 = vmatpush.msra.mxu0 %v1826
        %1982 = vmatpush.msra.mxu0 %v1823
        %1983 = vmatmul.f32.gmra.mxu0 %v1965
        %v1984 = vpop.f32.mrf.mxu0
        %v1985 = vadd.f32 0.0, %v1984
        %1986 = vdwg.mxu0
        %s1987 = scalar_lea.vmem %s7, 32
        %v1988 = vld [vmem:[%s1987] sm:$0xff]
        %s1989 = scalar_lea.vmem %s5, 416
        %v1990 = vld [vmem:[%s1989] sm:$0xff]
        %v1991 = vld [vmem:[%s1989 + $0x8] sm:$0xff]
        %v1992 = vld [vmem:[%s1989 + $0x10] sm:$0xff]
        %v1993 = vld [vmem:[%s1989 + $0x18] sm:$0xff]
        %s1994 = scalar_lea.vmem %s6, 13
        %v1995 = vld [vmem:[%s1994] sm:$0x1]
        %v1997 = vperm.slane %v1995, 0
        %1999 = vmatpush.msra.mxu0 0.0
        %2000 = vmatpush.msra.mxu0 0.0
        %2001 = vmatpush.msra.mxu0 0.0
        %2002 = vmatpush.msra.mxu0 0.0
        %2003 = vmatpush.msra.mxu0 0.0
        %2004 = vmatpush.msra.mxu0 0.0
        %2005 = vmatpush.msra.mxu0 0.0
        %2006 = vmatpush.msra.mxu0 0.0
        %2007 = vmatpush.msra.mxu0 0.0
        %2008 = vmatpush.msra.mxu0 0.0
        %2009 = vmatpush.msra.mxu0 0.0
        %2010 = vmatpush.msra.mxu0 0.0
        %2011 = vmatpush.msra.mxu0 %v1993
        %2012 = vmatpush.msra.mxu0 %v1992
        %2013 = vmatpush.msra.mxu0 %v1991
        %2014 = vmatpush.msra.mxu0 %v1990
        %2015 = vmatmul.f32.gmra.mxu0 %v1696
        %v2016 = vpop.f32.mrf.mxu0
        %v2017 = vadd.f32 %v1997, %v2016
        %2018 = vmatmul.f32.gmra.mxu0 %v1699
        %v2019 = vpop.f32.mrf.mxu0
        %v2020 = vadd.f32 %v1997, %v2019
        %2021 = vdwg.mxu0
        %v2022 = vmul.f32 %v2017, 0.35355338
        %v2023 = vmul.f32 %v2020, 0.35355338
        %s2024 = scalar_lea.vmem %s5, 544
        %v2025 = vld [vmem:[%s2024] sm:$0xff]
        %v2026 = vld [vmem:[%s2024 + $0x8] sm:$0xff]
        %v2027 = vld [vmem:[%s2024 + $0x10] sm:$0xff]
        %v2028 = vld [vmem:[%s2024 + $0x18] sm:$0xff]
        %s2029 = scalar_lea.vmem %s6, 17
        %v2030 = vld [vmem:[%s2029] sm:$0x1]
        %v2032 = vperm.slane %v2030, 0
        %2034 = vmatpush.msra.mxu0 0.0
        %2035 = vmatpush.msra.mxu0 0.0
        %2036 = vmatpush.msra.mxu0 0.0
        %2037 = vmatpush.msra.mxu0 0.0
        %2038 = vmatpush.msra.mxu0 0.0
        %2039 = vmatpush.msra.mxu0 0.0
        %2040 = vmatpush.msra.mxu0 0.0
        %2041 = vmatpush.msra.mxu0 0.0
        %2042 = vmatpush.msra.mxu0 0.0
        %2043 = vmatpush.msra.mxu0 0.0
        %2044 = vmatpush.msra.mxu0 0.0
        %2045 = vmatpush.msra.mxu0 0.0
        %2046 = vmatpush.msra.mxu0 %v2028
        %2047 = vmatpush.msra.mxu0 %v2027
        %2048 = vmatpush.msra.mxu0 %v2026
        %2049 = vmatpush.msra.mxu0 %v2025
        %2050 = vmatmul.f32.gmra.mxu0 %v1737
        %v2051 = vpop.f32.mrf.mxu0
        %v2052 = vadd.f32 %v2032, %v2051
        %2053 = vmatmul.f32.gmra.mxu0 %v1740
        %v2054 = vpop.f32.mrf.mxu0
        %v2055 = vadd.f32 %v2032, %v2054
        %2056 = vmatmul.f32.gmra.mxu0 %v1743
        %v2057 = vpop.f32.mrf.mxu0
        %v2058 = vadd.f32 %v2032, %v2057
        %2059 = vmatmul.f32.gmra.mxu0 %v1746
        %v2060 = vpop.f32.mrf.mxu0
        %v2061 = vadd.f32 %v2032, %v2060
        %2062 = vdwg.mxu0
        %s2063 = scalar_lea.vmem %s5, 672
        %v2064 = vld [vmem:[%s2063] sm:$0xff]
        %v2065 = vld [vmem:[%s2063 + $0x8] sm:$0xff]
        %v2066 = vld [vmem:[%s2063 + $0x10] sm:$0xff]
        %v2067 = vld [vmem:[%s2063 + $0x18] sm:$0xff]
        %s2068 = scalar_lea.vmem %s6, 21
        %v2069 = vld [vmem:[%s2068] sm:$0x1]
        %v2071 = vperm.slane %v2069, 0
        %2073 = vmatpush.msra.mxu0 0.0
        %2074 = vmatpush.msra.mxu0 0.0
        %2075 = vmatpush.msra.mxu0 0.0
        %2076 = vmatpush.msra.mxu0 0.0
        %2077 = vmatpush.msra.mxu0 0.0
        %2078 = vmatpush.msra.mxu0 0.0
        %2079 = vmatpush.msra.mxu0 0.0
        %2080 = vmatpush.msra.mxu0 0.0
        %2081 = vmatpush.msra.mxu0 0.0
        %2082 = vmatpush.msra.mxu0 0.0
        %2083 = vmatpush.msra.mxu0 0.0
        %2084 = vmatpush.msra.mxu0 0.0
        %2085 = vmatpush.msra.mxu0 %v2067
        %2086 = vmatpush.msra.mxu0 %v2066
        %2087 = vmatpush.msra.mxu0 %v2065
        %2088 = vmatpush.msra.mxu0 %v2064
        %2089 = vmatmul.f32.gmra.mxu0 %v1788
        %v2090 = vpop.f32.mrf.mxu0
        %v2091 = vadd.f32 %v2071, %v2090
        %2092 = vmatmul.f32.gmra.mxu0 %v1791
        %v2093 = vpop.f32.mrf.mxu0
        %v2094 = vadd.f32 %v2071, %v2093
        %2095 = vmatmul.f32.gmra.mxu0 %v1794
        %v2096 = vpop.f32.mrf.mxu0
        %v2097 = vadd.f32 %v2071, %v2096
        %2098 = vmatmul.f32.gmra.mxu0 %v1797
        %v2099 = vpop.f32.mrf.mxu0
        %v2100 = vadd.f32 %v2071, %v2099
        %2101 = vdwg.mxu0
        %v2103 = vsel %vm597, %v2022, 0
        %v2106 = vsel %vm597, %v2052, 0
        %v2109 = vsel %vm597, %v2055, 0
        %2111 = vmatpush.xpose.msra.mxu0 0.0
        %2112 = vmatpush.xpose.msra.mxu0 0.0
        %2113 = vmatpush.xpose.msra.mxu0 0.0
        %2114 = vmatpush.xpose.msra.mxu0 0.0
        %2115 = vmatpush.xpose.msra.mxu0 0.0
        %2116 = vmatpush.xpose.msra.mxu0 0.0
        %2117 = vmatpush.xpose.msra.mxu0 0.0
        %2118 = vmatpush.xpose.msra.mxu0 0.0
        %2119 = vmatpush.xpose.msra.mxu0 0.0
        %2120 = vmatpush.xpose.msra.mxu0 0.0
        %2121 = vmatpush.xpose.msra.mxu0 0.0
        %2122 = vmatpush.xpose.msra.mxu0 0.0
        %2123 = vmatpush.xpose.msra.mxu0 0.0
        %2124 = vmatpush.xpose.msra.mxu0 0.0
        %2125 = vmatpush.xpose.msra.mxu0 %v2109
        %2126 = vmatpush.xpose.msra.mxu0 %v2106
        %2127 = vmatmul.f32.gmra.mxu0 %v2103
        %v2128 = vpop.f32.mrf.mxu0
        %v2129 = vadd.f32 %v1830, %v2128
        %2130 = vdwg.mxu0
        %v2132 = vsel %vm597, %v2023, 0
        %v2135 = vsel %vm597, %v2058, 0
        %v2138 = vsel %vm597, %v2061, 0
        %2140 = vmatpush.xpose.msra.mxu0 0.0
        %2141 = vmatpush.xpose.msra.mxu0 0.0
        %2142 = vmatpush.xpose.msra.mxu0 0.0
        %2143 = vmatpush.xpose.msra.mxu0 0.0
        %2144 = vmatpush.xpose.msra.mxu0 0.0
        %2145 = vmatpush.xpose.msra.mxu0 0.0
        %2146 = vmatpush.xpose.msra.mxu0 0.0
        %2147 = vmatpush.xpose.msra.mxu0 0.0
        %2148 = vmatpush.xpose.msra.mxu0 0.0
        %2149 = vmatpush.xpose.msra.mxu0 0.0
        %2150 = vmatpush.xpose.msra.mxu0 0.0
        %2151 = vmatpush.xpose.msra.mxu0 0.0
        %2152 = vmatpush.xpose.msra.mxu0 0.0
        %2153 = vmatpush.xpose.msra.mxu0 0.0
        %2154 = vmatpush.xpose.msra.mxu0 %v2138
        %2155 = vmatpush.xpose.msra.mxu0 %v2135
        %2156 = vmatmul.f32.gmra.mxu0 %v2132
        %v2157 = vpop.f32.mrf.mxu0
        %v2158 = vadd.f32 %v1831, %v2157
        %2159 = vdwg.mxu0
        %v2160 = vsel %vm1892, %v2129, -inf
        %2161 = vmax.xlane.f32.xlu0 %v2160
        %v2162 = vpop.xlane.xlu0 %2161
        %v2163 = vsel %vm1892, %v2158, -inf
        %2164 = vmax.xlane.f32.xlu0 %v2163
        %v2165 = vpop.xlane.xlu0 %2164
        %v2166 = vsub.f32 %v2129, %v2162
        %v2167 = vsub.f32 %v2158, %v2165
        %v2168 = vmul.f32 %v2166, 1.442695
        %v2169 = vpow.pop %v2168
        %v2170 = vmul.f32 %v2167, 1.442695
        %v2171 = vpow.pop %v2170
        %v2172 = vsel %vm1892, %v2169, 0.0
        %2173 = vadd.xlane.f32.xlu0 %v2172
        %v2174 = vpop.xlane.xlu0 %2173
        %v2175 = vsel %vm1892, %v2171, 0.0
        %2176 = vadd.xlane.f32.xlu0 %v2175
        %v2177 = vpop.xlane.xlu0 %2176
        %v2178 = vrcp.pop %v2174
        %v2179 = vmul.f32 %v2174, %v2178
        %v2180 = vsub.f32 1.0, %v2179
        %v2181 = vmul.f32 %v2178, %v2180
        %v2182 = vadd.f32 %v2178, %v2181
        %vm2183 = vweird.f32 %v2174
        %vm2184 = vweird.f32 %v2178
        %vm2185 = vmor %vm2183, %vm2184
        %v2186 = vsel %vm2185, %v2178, %v2182
        %v2187 = vand.u32 2147483647, %v2174
        %vm2188 = vcmp.eq.f32.partialorder %v2187, 8.507059e+37
        %v2189 = vand.u32 %v2174, 2147483648
        %v2190 = vor.u32 1.1754944e-38, %v2189
        %v2191 = vsel %vm2188, %v2190, %v2186
        %v2192 = vmul.f32 %v2169, %v2191
        %v2193 = vrcp.pop %v2177
        %v2194 = vmul.f32 %v2177, %v2193
        %v2195 = vsub.f32 1.0, %v2194
        %v2196 = vmul.f32 %v2193, %v2195
        %v2197 = vadd.f32 %v2193, %v2196
        %vm2198 = vweird.f32 %v2177
        %vm2199 = vweird.f32 %v2193
        %vm2200 = vmor %vm2198, %vm2199
        %v2201 = vsel %vm2200, %v2193, %v2197
        %v2202 = vand.u32 2147483647, %v2177
        %vm2203 = vcmp.eq.f32.partialorder %v2202, 8.507059e+37
        %v2204 = vand.u32 %v2177, 2147483648
        %v2205 = vor.u32 1.1754944e-38, %v2204
        %v2206 = vsel %vm2203, %v2205, %v2201
        %v2207 = vmul.f32 %v2171, %v2206
        %v2209 = vsel %vm1892, %v2192, 0
        %2211 = vmatpush.msra.mxu0 0.0
        %2212 = vmatpush.msra.mxu0 0.0
        %2213 = vmatpush.msra.mxu0 0.0
        %2214 = vmatpush.msra.mxu0 0.0
        %2215 = vmatpush.msra.mxu0 0.0
        %2216 = vmatpush.msra.mxu0 0.0
        %2217 = vmatpush.msra.mxu0 0.0
        %2218 = vmatpush.msra.mxu0 0.0
        %2219 = vmatpush.msra.mxu0 0.0
        %2220 = vmatpush.msra.mxu0 0.0
        %2221 = vmatpush.msra.mxu0 0.0
        %2222 = vmatpush.msra.mxu0 0.0
        %2223 = vmatpush.msra.mxu0 0.0
        %2224 = vmatpush.msra.mxu0 0.0
        %2225 = vmatpush.msra.mxu0 %v2094
        %2226 = vmatpush.msra.mxu0 %v2091
        %2227 = vmatmul.f32.gmra.mxu0 %v2209
        %v2228 = vpop.f32.mrf.mxu0
        %v2229 = vadd.f32 0.0, %v2228
        %2230 = vdwg.mxu0
        %v2232 = vsel %vm1892, %v2207, 0
        %2234 = vmatpush.msra.mxu0 0.0
        %2235 = vmatpush.msra.mxu0 0.0
        %2236 = vmatpush.msra.mxu0 0.0
        %2237 = vmatpush.msra.mxu0 0.0
        %2238 = vmatpush.msra.mxu0 0.0
        %2239 = vmatpush.msra.mxu0 0.0
        %2240 = vmatpush.msra.mxu0 0.0
        %2241 = vmatpush.msra.mxu0 0.0
        %2242 = vmatpush.msra.mxu0 0.0
        %2243 = vmatpush.msra.mxu0 0.0
        %2244 = vmatpush.msra.mxu0 0.0
        %2245 = vmatpush.msra.mxu0 0.0
        %2246 = vmatpush.msra.mxu0 0.0
        %2247 = vmatpush.msra.mxu0 0.0
        %2248 = vmatpush.msra.mxu0 %v2100
        %2249 = vmatpush.msra.mxu0 %v2097
        %2250 = vmatmul.f32.gmra.mxu0 %v2232
        %v2251 = vpop.f32.mrf.mxu0
        %v2252 = vadd.f32 0.0, %v2251
        %2253 = vdwg.mxu0
        %s2254 = scalar_lea.vmem %s7, 40
        %v2255 = vld [vmem:[%s2254] sm:$0xff]
        %v2257 = vsel %vm597, %v2229, 0
        %v2260 = vsel %vm597, %v2252, 0
        %2262 = vmatpush.msra.mxu0 0.0
        %2263 = vmatpush.msra.mxu0 0.0
        %2264 = vmatpush.msra.mxu0 0.0
        %2265 = vmatpush.msra.mxu0 0.0
        %2266 = vmatpush.msra.mxu0 0.0
        %2267 = vmatpush.msra.mxu0 0.0
        %2268 = vmatpush.msra.mxu0 0.0
        %2269 = vmatpush.msra.mxu0 0.0
        %2270 = vmatpush.msra.mxu0 0.0
        %2271 = vmatpush.msra.mxu0 0.0
        %2272 = vmatpush.msra.mxu0 0.0
        %2273 = vmatpush.msra.mxu0 0.0
        %2274 = vmatpush.msra.mxu0 0.0
        %2275 = vmatpush.msra.mxu0 0.0
        %2276 = vmatpush.msra.mxu0 0.0
        %2277 = vmatpush.msra.mxu0 %v2255
        %2278 = vmatmul.f32.gmra.mxu0 %v2257
        %v2279 = vpop.f32.mrf.mxu0
        %v2280 = vadd.f32 0.0, %v2279
        %2281 = vmatmul.f32.gmra.mxu0 %v2260
        %v2282 = vpop.f32.mrf.mxu0
        %v2283 = vadd.f32 0.0, %v2282
        %2284 = vdwg.mxu0
        %v2286 = vsel %vm597, %v1962, 0
        %v2289 = vsel %vm597, %v1985, 0
        %2291 = vmatpush.msra.mxu0 0.0
        %2292 = vmatpush.msra.mxu0 0.0
        %2293 = vmatpush.msra.mxu0 0.0
        %2294 = vmatpush.msra.mxu0 0.0
        %2295 = vmatpush.msra.mxu0 0.0
        %2296 = vmatpush.msra.mxu0 0.0
        %2297 = vmatpush.msra.mxu0 0.0
        %2298 = vmatpush.msra.mxu0 0.0
        %2299 = vmatpush.msra.mxu0 0.0
        %2300 = vmatpush.msra.mxu0 0.0
        %2301 = vmatpush.msra.mxu0 0.0
        %2302 = vmatpush.msra.mxu0 0.0
        %2303 = vmatpush.msra.mxu0 0.0
        %2304 = vmatpush.msra.mxu0 0.0
        %2305 = vmatpush.msra.mxu0 0.0
        %2306 = vmatpush.msra.mxu0 %v1988
        %2307 = vmatmul.f32.gmra.mxu0 %v2286
        %v2308 = vpop.f32.mrf.mxu0
        %v2309 = vadd.f32 %v2280, %v2308
        %2310 = vmatmul.f32.gmra.mxu0 %v2289
        %v2311 = vpop.f32.mrf.mxu0
        %v2312 = vadd.f32 %v2283, %v2311
        %2313 = vdwg.mxu0
        %s2314 = scalar_lea.vmem %s5, 448
        %v2315 = vld [vmem:[%s2314] sm:$0xff]
        %v2316 = vld [vmem:[%s2314 + $0x8] sm:$0xff]
        %v2317 = vld [vmem:[%s2314 + $0x10] sm:$0xff]
        %v2318 = vld [vmem:[%s2314 + $0x18] sm:$0xff]
        %s2319 = scalar_lea.vmem %s6, 14
        %v2320 = vld [vmem:[%s2319] sm:$0x1]
        %v2322 = vperm.slane %v2320, 0
        %2324 = vmatpush.msra.mxu0 0.0
        %2325 = vmatpush.msra.mxu0 0.0
        %2326 = vmatpush.msra.mxu0 0.0
        %2327 = vmatpush.msra.mxu0 0.0
        %2328 = vmatpush.msra.mxu0 0.0
        %2329 = vmatpush.msra.mxu0 0.0
        %2330 = vmatpush.msra.mxu0 0.0
        %2331 = vmatpush.msra.mxu0 0.0
        %2332 = vmatpush.msra.mxu0 0.0
        %2333 = vmatpush.msra.mxu0 0.0
        %2334 = vmatpush.msra.mxu0 0.0
        %2335 = vmatpush.msra.mxu0 0.0
        %2336 = vmatpush.msra.mxu0 %v2318
        %2337 = vmatpush.msra.mxu0 %v2317
        %2338 = vmatpush.msra.mxu0 %v2316
        %2339 = vmatpush.msra.mxu0 %v2315
        %2340 = vmatmul.f32.gmra.mxu0 %v1696
        %v2341 = vpop.f32.mrf.mxu0
        %v2342 = vadd.f32 %v2322, %v2341
        %2343 = vmatmul.f32.gmra.mxu0 %v1699
        %v2344 = vpop.f32.mrf.mxu0
        %v2345 = vadd.f32 %v2322, %v2344
        %2346 = vdwg.mxu0
        %v2347 = vmul.f32 %v2342, 0.35355338
        %v2348 = vmul.f32 %v2345, 0.35355338
        %s2349 = scalar_lea.vmem %s5, 576
        %v2350 = vld [vmem:[%s2349] sm:$0xff]
        %v2351 = vld [vmem:[%s2349 + $0x8] sm:$0xff]
        %v2352 = vld [vmem:[%s2349 + $0x10] sm:$0xff]
        %v2353 = vld [vmem:[%s2349 + $0x18] sm:$0xff]
        %s2354 = scalar_lea.vmem %s6, 18
        %v2355 = vld [vmem:[%s2354] sm:$0x1]
        %v2357 = vperm.slane %v2355, 0
        %2359 = vmatpush.msra.mxu0 0.0
        %2360 = vmatpush.msra.mxu0 0.0
        %2361 = vmatpush.msra.mxu0 0.0
        %2362 = vmatpush.msra.mxu0 0.0
        %2363 = vmatpush.msra.mxu0 0.0
        %2364 = vmatpush.msra.mxu0 0.0
        %2365 = vmatpush.msra.mxu0 0.0
        %2366 = vmatpush.msra.mxu0 0.0
        %2367 = vmatpush.msra.mxu0 0.0
        %2368 = vmatpush.msra.mxu0 0.0
        %2369 = vmatpush.msra.mxu0 0.0
        %2370 = vmatpush.msra.mxu0 0.0
        %2371 = vmatpush.msra.mxu0 %v2353
        %2372 = vmatpush.msra.mxu0 %v2352
        %2373 = vmatpush.msra.mxu0 %v2351
        %2374 = vmatpush.msra.mxu0 %v2350
        %2375 = vmatmul.f32.gmra.mxu0 %v1737
        %v2376 = vpop.f32.mrf.mxu0
        %v2377 = vadd.f32 %v2357, %v2376
        %2378 = vmatmul.f32.gmra.mxu0 %v1740
        %v2379 = vpop.f32.mrf.mxu0
        %v2380 = vadd.f32 %v2357, %v2379
        %2381 = vmatmul.f32.gmra.mxu0 %v1743
        %v2382 = vpop.f32.mrf.mxu0
        %v2383 = vadd.f32 %v2357, %v2382
        %2384 = vmatmul.f32.gmra.mxu0 %v1746
        %v2385 = vpop.f32.mrf.mxu0
        %v2386 = vadd.f32 %v2357, %v2385
        %2387 = vdwg.mxu0
        %s2388 = scalar_lea.vmem %s5, 704
        %v2389 = vld [vmem:[%s2388] sm:$0xff]
        %v2390 = vld [vmem:[%s2388 + $0x8] sm:$0xff]
        %v2391 = vld [vmem:[%s2388 + $0x10] sm:$0xff]
        %v2392 = vld [vmem:[%s2388 + $0x18] sm:$0xff]
        %s2393 = scalar_lea.vmem %s6, 22
        %v2394 = vld [vmem:[%s2393] sm:$0x1]
        %v2396 = vperm.slane %v2394, 0
        %2398 = vmatpush.msra.mxu0 0.0
        %2399 = vmatpush.msra.mxu0 0.0
        %2400 = vmatpush.msra.mxu0 0.0
        %2401 = vmatpush.msra.mxu0 0.0
        %2402 = vmatpush.msra.mxu0 0.0
        %2403 = vmatpush.msra.mxu0 0.0
        %2404 = vmatpush.msra.mxu0 0.0
        %2405 = vmatpush.msra.mxu0 0.0
        %2406 = vmatpush.msra.mxu0 0.0
        %2407 = vmatpush.msra.mxu0 0.0
        %2408 = vmatpush.msra.mxu0 0.0
        %2409 = vmatpush.msra.mxu0 0.0
        %2410 = vmatpush.msra.mxu0 %v2392
        %2411 = vmatpush.msra.mxu0 %v2391
        %2412 = vmatpush.msra.mxu0 %v2390
        %2413 = vmatpush.msra.mxu0 %v2389
        %2414 = vmatmul.f32.gmra.mxu0 %v1788
        %v2415 = vpop.f32.mrf.mxu0
        %v2416 = vadd.f32 %v2396, %v2415
        %2417 = vmatmul.f32.gmra.mxu0 %v1791
        %v2418 = vpop.f32.mrf.mxu0
        %v2419 = vadd.f32 %v2396, %v2418
        %2420 = vmatmul.f32.gmra.mxu0 %v1794
        %v2421 = vpop.f32.mrf.mxu0
        %v2422 = vadd.f32 %v2396, %v2421
        %2423 = vmatmul.f32.gmra.mxu0 %v1797
        %v2424 = vpop.f32.mrf.mxu0
        %v2425 = vadd.f32 %v2396, %v2424
        %2426 = vdwg.mxu0
        %v2428 = vsel %vm597, %v2347, 0
        %v2431 = vsel %vm597, %v2377, 0
        %v2434 = vsel %vm597, %v2380, 0
        %2436 = vmatpush.xpose.msra.mxu0 0.0
        %2437 = vmatpush.xpose.msra.mxu0 0.0
        %2438 = vmatpush.xpose.msra.mxu0 0.0
        %2439 = vmatpush.xpose.msra.mxu0 0.0
        %2440 = vmatpush.xpose.msra.mxu0 0.0
        %2441 = vmatpush.xpose.msra.mxu0 0.0
        %2442 = vmatpush.xpose.msra.mxu0 0.0
        %2443 = vmatpush.xpose.msra.mxu0 0.0
        %2444 = vmatpush.xpose.msra.mxu0 0.0
        %2445 = vmatpush.xpose.msra.mxu0 0.0
        %2446 = vmatpush.xpose.msra.mxu0 0.0
        %2447 = vmatpush.xpose.msra.mxu0 0.0
        %2448 = vmatpush.xpose.msra.mxu0 0.0
        %2449 = vmatpush.xpose.msra.mxu0 0.0
        %2450 = vmatpush.xpose.msra.mxu0 %v2434
        %2451 = vmatpush.xpose.msra.mxu0 %v2431
        %2452 = vmatmul.f32.gmra.mxu0 %v2428
        %v2453 = vpop.f32.mrf.mxu0
        %v2454 = vadd.f32 %v1830, %v2453
        %2455 = vdwg.mxu0
        %v2457 = vsel %vm597, %v2348, 0
        %v2460 = vsel %vm597, %v2383, 0
        %v2463 = vsel %vm597, %v2386, 0
        %2465 = vmatpush.xpose.msra.mxu0 0.0
        %2466 = vmatpush.xpose.msra.mxu0 0.0
        %2467 = vmatpush.xpose.msra.mxu0 0.0
        %2468 = vmatpush.xpose.msra.mxu0 0.0
        %2469 = vmatpush.xpose.msra.mxu0 0.0
        %2470 = vmatpush.xpose.msra.mxu0 0.0
        %2471 = vmatpush.xpose.msra.mxu0 0.0
        %2472 = vmatpush.xpose.msra.mxu0 0.0
        %2473 = vmatpush.xpose.msra.mxu0 0.0
        %2474 = vmatpush.xpose.msra.mxu0 0.0
        %2475 = vmatpush.xpose.msra.mxu0 0.0
        %2476 = vmatpush.xpose.msra.mxu0 0.0
        %2477 = vmatpush.xpose.msra.mxu0 0.0
        %2478 = vmatpush.xpose.msra.mxu0 0.0
        %2479 = vmatpush.xpose.msra.mxu0 %v2463
        %2480 = vmatpush.xpose.msra.mxu0 %v2460
        %2481 = vmatmul.f32.gmra.mxu0 %v2457
        %v2482 = vpop.f32.mrf.mxu0
        %v2483 = vadd.f32 %v1831, %v2482
        %2484 = vdwg.mxu0
        %v2485 = vsel %vm1892, %v2454, -inf
        %2486 = vmax.xlane.f32.xlu0 %v2485
        %v2487 = vpop.xlane.xlu0 %2486
        %v2488 = vsel %vm1892, %v2483, -inf
        %2489 = vmax.xlane.f32.xlu0 %v2488
        %v2490 = vpop.xlane.xlu0 %2489
        %v2491 = vsub.f32 %v2454, %v2487
        %v2492 = vsub.f32 %v2483, %v2490
        %v2493 = vmul.f32 %v2491, 1.442695
        %v2494 = vpow.pop %v2493
        %v2495 = vmul.f32 %v2492, 1.442695
        %v2496 = vpow.pop %v2495
        %v2497 = vsel %vm1892, %v2494, 0.0
        %2498 = vadd.xlane.f32.xlu0 %v2497
        %v2499 = vpop.xlane.xlu0 %2498
        %v2500 = vsel %vm1892, %v2496, 0.0
        %2501 = vadd.xlane.f32.xlu0 %v2500
        %v2502 = vpop.xlane.xlu0 %2501
        %v2503 = vrcp.pop %v2499
        %v2504 = vmul.f32 %v2499, %v2503
        %v2505 = vsub.f32 1.0, %v2504
        %v2506 = vmul.f32 %v2503, %v2505
        %v2507 = vadd.f32 %v2503, %v2506
        %vm2508 = vweird.f32 %v2499
        %vm2509 = vweird.f32 %v2503
        %vm2510 = vmor %vm2508, %vm2509
        %v2511 = vsel %vm2510, %v2503, %v2507
        %v2512 = vand.u32 2147483647, %v2499
        %vm2513 = vcmp.eq.f32.partialorder %v2512, 8.507059e+37
        %v2514 = vand.u32 %v2499, 2147483648
        %v2515 = vor.u32 1.1754944e-38, %v2514
        %v2516 = vsel %vm2513, %v2515, %v2511
        %v2517 = vmul.f32 %v2494, %v2516
        %v2518 = vrcp.pop %v2502
        %v2519 = vmul.f32 %v2502, %v2518
        %v2520 = vsub.f32 1.0, %v2519
        %v2521 = vmul.f32 %v2518, %v2520
        %v2522 = vadd.f32 %v2518, %v2521
        %vm2523 = vweird.f32 %v2502
        %vm2524 = vweird.f32 %v2518
        %vm2525 = vmor %vm2523, %vm2524
        %v2526 = vsel %vm2525, %v2518, %v2522
        %v2527 = vand.u32 2147483647, %v2502
        %vm2528 = vcmp.eq.f32.partialorder %v2527, 8.507059e+37
        %v2529 = vand.u32 %v2502, 2147483648
        %v2530 = vor.u32 1.1754944e-38, %v2529
        %v2531 = vsel %vm2528, %v2530, %v2526
        %v2532 = vmul.f32 %v2496, %v2531
        %v2534 = vsel %vm1892, %v2517, 0
        %2536 = vmatpush.msra.mxu0 0.0
        %2537 = vmatpush.msra.mxu0 0.0
        %2538 = vmatpush.msra.mxu0 0.0
        %2539 = vmatpush.msra.mxu0 0.0
        %2540 = vmatpush.msra.mxu0 0.0
        %2541 = vmatpush.msra.mxu0 0.0
        %2542 = vmatpush.msra.mxu0 0.0
        %2543 = vmatpush.msra.mxu0 0.0
        %2544 = vmatpush.msra.mxu0 0.0
        %2545 = vmatpush.msra.mxu0 0.0
        %2546 = vmatpush.msra.mxu0 0.0
        %2547 = vmatpush.msra.mxu0 0.0
        %2548 = vmatpush.msra.mxu0 0.0
        %2549 = vmatpush.msra.mxu0 0.0
        %2550 = vmatpush.msra.mxu0 %v2419
        %2551 = vmatpush.msra.mxu0 %v2416
        %2552 = vmatmul.f32.gmra.mxu0 %v2534
        %v2553 = vpop.f32.mrf.mxu0
        %v2554 = vadd.f32 0.0, %v2553
        %2555 = vdwg.mxu0
        %v2557 = vsel %vm1892, %v2532, 0
        %2559 = vmatpush.msra.mxu0 0.0
        %2560 = vmatpush.msra.mxu0 0.0
        %2561 = vmatpush.msra.mxu0 0.0
        %2562 = vmatpush.msra.mxu0 0.0
        %2563 = vmatpush.msra.mxu0 0.0
        %2564 = vmatpush.msra.mxu0 0.0
        %2565 = vmatpush.msra.mxu0 0.0
        %2566 = vmatpush.msra.mxu0 0.0
        %2567 = vmatpush.msra.mxu0 0.0
        %2568 = vmatpush.msra.mxu0 0.0
        %2569 = vmatpush.msra.mxu0 0.0
        %2570 = vmatpush.msra.mxu0 0.0
        %2571 = vmatpush.msra.mxu0 0.0
        %2572 = vmatpush.msra.mxu0 0.0
        %2573 = vmatpush.msra.mxu0 %v2425
        %2574 = vmatpush.msra.mxu0 %v2422
        %2575 = vmatmul.f32.gmra.mxu0 %v2557
        %v2576 = vpop.f32.mrf.mxu0
        %v2577 = vadd.f32 0.0, %v2576
        %2578 = vdwg.mxu0
        %s2579 = scalar_lea.vmem %s7, 48
        %v2580 = vld [vmem:[%s2579] sm:$0xff]
        %v2582 = vsel %vm597, %v2554, 0
        %v2585 = vsel %vm597, %v2577, 0
        %2587 = vmatpush.msra.mxu0 0.0
        %2588 = vmatpush.msra.mxu0 0.0
        %2589 = vmatpush.msra.mxu0 0.0
        %2590 = vmatpush.msra.mxu0 0.0
        %2591 = vmatpush.msra.mxu0 0.0
        %2592 = vmatpush.msra.mxu0 0.0
        %2593 = vmatpush.msra.mxu0 0.0
        %2594 = vmatpush.msra.mxu0 0.0
        %2595 = vmatpush.msra.mxu0 0.0
        %2596 = vmatpush.msra.mxu0 0.0
        %2597 = vmatpush.msra.mxu0 0.0
        %2598 = vmatpush.msra.mxu0 0.0
        %2599 = vmatpush.msra.mxu0 0.0
        %2600 = vmatpush.msra.mxu0 0.0
        %2601 = vmatpush.msra.mxu0 0.0
        %2602 = vmatpush.msra.mxu0 %v2580
        %2603 = vmatmul.f32.gmra.mxu0 %v2582
        %v2604 = vpop.f32.mrf.mxu0
        %v2605 = vadd.f32 0.0, %v2604
        %2606 = vmatmul.f32.gmra.mxu0 %v2585
        %v2607 = vpop.f32.mrf.mxu0
        %v2608 = vadd.f32 0.0, %v2607
        %2609 = vdwg.mxu0
        %v2610 = vadd.f32 %v2309, %v2605
        %v2611 = vadd.f32 %v2312, %v2608
        %s2612 = scalar_lea.vmem %s5, 480
        %v2613 = vld [vmem:[%s2612] sm:$0xff]
        %v2614 = vld [vmem:[%s2612 + $0x8] sm:$0xff]
        %v2615 = vld [vmem:[%s2612 + $0x10] sm:$0xff]
        %v2616 = vld [vmem:[%s2612 + $0x18] sm:$0xff]
        %s2617 = scalar_lea.vmem %s6, 15
        %v2618 = vld [vmem:[%s2617] sm:$0x1]
        %v2620 = vperm.slane %v2618, 0
        %2622 = vmatpush.msra.mxu0 0.0
        %2623 = vmatpush.msra.mxu0 0.0
        %2624 = vmatpush.msra.mxu0 0.0
        %2625 = vmatpush.msra.mxu0 0.0
        %2626 = vmatpush.msra.mxu0 0.0
        %2627 = vmatpush.msra.mxu0 0.0
        %2628 = vmatpush.msra.mxu0 0.0
        %2629 = vmatpush.msra.mxu0 0.0
        %2630 = vmatpush.msra.mxu0 0.0
        %2631 = vmatpush.msra.mxu0 0.0
        %2632 = vmatpush.msra.mxu0 0.0
        %2633 = vmatpush.msra.mxu0 0.0
        %2634 = vmatpush.msra.mxu0 %v2616
        %2635 = vmatpush.msra.mxu0 %v2615
        %2636 = vmatpush.msra.mxu0 %v2614
        %2637 = vmatpush.msra.mxu0 %v2613
        %2638 = vmatmul.f32.gmra.mxu0 %v1696
        %v2639 = vpop.f32.mrf.mxu0
        %v2640 = vadd.f32 %v2620, %v2639
        %2641 = vmatmul.f32.gmra.mxu0 %v1699
        %v2642 = vpop.f32.mrf.mxu0
        %v2643 = vadd.f32 %v2620, %v2642
        %2644 = vdwg.mxu0
        %v2645 = vmul.f32 %v2640, 0.35355338
        %v2646 = vmul.f32 %v2643, 0.35355338
        %s2647 = scalar_lea.vmem %s5, 608
        %v2648 = vld [vmem:[%s2647] sm:$0xff]
        %v2649 = vld [vmem:[%s2647 + $0x8] sm:$0xff]
        %v2650 = vld [vmem:[%s2647 + $0x10] sm:$0xff]
        %v2651 = vld [vmem:[%s2647 + $0x18] sm:$0xff]
        %s2652 = scalar_lea.vmem %s6, 19
        %v2653 = vld [vmem:[%s2652] sm:$0x1]
        %v2655 = vperm.slane %v2653, 0
        %2657 = vmatpush.msra.mxu0 0.0
        %2658 = vmatpush.msra.mxu0 0.0
        %2659 = vmatpush.msra.mxu0 0.0
        %2660 = vmatpush.msra.mxu0 0.0
        %2661 = vmatpush.msra.mxu0 0.0
        %2662 = vmatpush.msra.mxu0 0.0
        %2663 = vmatpush.msra.mxu0 0.0
        %2664 = vmatpush.msra.mxu0 0.0
        %2665 = vmatpush.msra.mxu0 0.0
        %2666 = vmatpush.msra.mxu0 0.0
        %2667 = vmatpush.msra.mxu0 0.0
        %2668 = vmatpush.msra.mxu0 0.0
        %2669 = vmatpush.msra.mxu0 %v2651
        %2670 = vmatpush.msra.mxu0 %v2650
        %2671 = vmatpush.msra.mxu0 %v2649
        %2672 = vmatpush.msra.mxu0 %v2648
        %2673 = vmatmul.f32.gmra.mxu0 %v1737
        %v2674 = vpop.f32.mrf.mxu0
        %v2675 = vadd.f32 %v2655, %v2674
        %2676 = vmatmul.f32.gmra.mxu0 %v1740
        %v2677 = vpop.f32.mrf.mxu0
        %v2678 = vadd.f32 %v2655, %v2677
        %2679 = vmatmul.f32.gmra.mxu0 %v1743
        %v2680 = vpop.f32.mrf.mxu0
        %v2681 = vadd.f32 %v2655, %v2680
        %2682 = vmatmul.f32.gmra.mxu0 %v1746
        %v2683 = vpop.f32.mrf.mxu0
        %v2684 = vadd.f32 %v2655, %v2683
        %2685 = vdwg.mxu0
        %s2686 = scalar_lea.vmem %s5, 736
        %v2687 = vld [vmem:[%s2686] sm:$0xff]
        %v2688 = vld [vmem:[%s2686 + $0x8] sm:$0xff]
        %v2689 = vld [vmem:[%s2686 + $0x10] sm:$0xff]
        %v2690 = vld [vmem:[%s2686 + $0x18] sm:$0xff]
        %s2691 = scalar_lea.vmem %s6, 23
        %v2692 = vld [vmem:[%s2691] sm:$0x1]
        %v2694 = vperm.slane %v2692, 0
        %2696 = vmatpush.msra.mxu0 0.0
        %2697 = vmatpush.msra.mxu0 0.0
        %2698 = vmatpush.msra.mxu0 0.0
        %2699 = vmatpush.msra.mxu0 0.0
        %2700 = vmatpush.msra.mxu0 0.0
        %2701 = vmatpush.msra.mxu0 0.0
        %2702 = vmatpush.msra.mxu0 0.0
        %2703 = vmatpush.msra.mxu0 0.0
        %2704 = vmatpush.msra.mxu0 0.0
        %2705 = vmatpush.msra.mxu0 0.0
        %2706 = vmatpush.msra.mxu0 0.0
        %2707 = vmatpush.msra.mxu0 0.0
        %2708 = vmatpush.msra.mxu0 %v2690
        %2709 = vmatpush.msra.mxu0 %v2689
        %2710 = vmatpush.msra.mxu0 %v2688
        %2711 = vmatpush.msra.mxu0 %v2687
        %2712 = vmatmul.f32.gmra.mxu0 %v1788
        %v2713 = vpop.f32.mrf.mxu0
        %v2714 = vadd.f32 %v2694, %v2713
        %2715 = vmatmul.f32.gmra.mxu0 %v1791
        %v2716 = vpop.f32.mrf.mxu0
        %v2717 = vadd.f32 %v2694, %v2716
        %2718 = vmatmul.f32.gmra.mxu0 %v1794
        %v2719 = vpop.f32.mrf.mxu0
        %v2720 = vadd.f32 %v2694, %v2719
        %2721 = vmatmul.f32.gmra.mxu0 %v1797
        %v2722 = vpop.f32.mrf.mxu0
        %v2723 = vadd.f32 %v2694, %v2722
        %2724 = vdwg.mxu0
        %v2726 = vsel %vm597, %v2645, 0
        %v2729 = vsel %vm597, %v2675, 0
        %v2732 = vsel %vm597, %v2678, 0
        %2734 = vmatpush.xpose.msra.mxu0 0.0
        %2735 = vmatpush.xpose.msra.mxu0 0.0
        %2736 = vmatpush.xpose.msra.mxu0 0.0
        %2737 = vmatpush.xpose.msra.mxu0 0.0
        %2738 = vmatpush.xpose.msra.mxu0 0.0
        %2739 = vmatpush.xpose.msra.mxu0 0.0
        %2740 = vmatpush.xpose.msra.mxu0 0.0
        %2741 = vmatpush.xpose.msra.mxu0 0.0
        %2742 = vmatpush.xpose.msra.mxu0 0.0
        %2743 = vmatpush.xpose.msra.mxu0 0.0
        %2744 = vmatpush.xpose.msra.mxu0 0.0
        %2745 = vmatpush.xpose.msra.mxu0 0.0
        %2746 = vmatpush.xpose.msra.mxu0 0.0
        %2747 = vmatpush.xpose.msra.mxu0 0.0
        %2748 = vmatpush.xpose.msra.mxu0 %v2732
        %2749 = vmatpush.xpose.msra.mxu0 %v2729
        %2750 = vmatmul.f32.gmra.mxu0 %v2726
        %v2751 = vpop.f32.mrf.mxu0
        %v2752 = vadd.f32 %v1830, %v2751
        %2753 = vdwg.mxu0
        %v2755 = vsel %vm597, %v2646, 0
        %v2758 = vsel %vm597, %v2681, 0
        %v2761 = vsel %vm597, %v2684, 0
        %2763 = vmatpush.xpose.msra.mxu0 0.0
        %2764 = vmatpush.xpose.msra.mxu0 0.0
        %2765 = vmatpush.xpose.msra.mxu0 0.0
        %2766 = vmatpush.xpose.msra.mxu0 0.0
        %2767 = vmatpush.xpose.msra.mxu0 0.0
        %2768 = vmatpush.xpose.msra.mxu0 0.0
        %2769 = vmatpush.xpose.msra.mxu0 0.0
        %2770 = vmatpush.xpose.msra.mxu0 0.0
        %2771 = vmatpush.xpose.msra.mxu0 0.0
        %2772 = vmatpush.xpose.msra.mxu0 0.0
        %2773 = vmatpush.xpose.msra.mxu0 0.0
        %2774 = vmatpush.xpose.msra.mxu0 0.0
        %2775 = vmatpush.xpose.msra.mxu0 0.0
        %2776 = vmatpush.xpose.msra.mxu0 0.0
        %2777 = vmatpush.xpose.msra.mxu0 %v2761
        %2778 = vmatpush.xpose.msra.mxu0 %v2758
        %2779 = vmatmul.f32.gmra.mxu0 %v2755
        %v2780 = vpop.f32.mrf.mxu0
        %v2781 = vadd.f32 %v1831, %v2780
        %2782 = vdwg.mxu0
        %v2783 = vsel %vm1892, %v2752, -inf
        %2784 = vmax.xlane.f32.xlu0 %v2783
        %v2785 = vpop.xlane.xlu0 %2784
        %v2786 = vsel %vm1892, %v2781, -inf
        %2787 = vmax.xlane.f32.xlu0 %v2786
        %v2788 = vpop.xlane.xlu0 %2787
        %v2789 = vsub.f32 %v2752, %v2785
        %v2790 = vsub.f32 %v2781, %v2788
        %v2791 = vmul.f32 %v2789, 1.442695
        %v2792 = vpow.pop %v2791
        %v2793 = vmul.f32 %v2790, 1.442695
        %v2794 = vpow.pop %v2793
        %v2795 = vsel %vm1892, %v2792, 0.0
        %2796 = vadd.xlane.f32.xlu0 %v2795
        %v2797 = vpop.xlane.xlu0 %2796
        %v2798 = vsel %vm1892, %v2794, 0.0
        %2799 = vadd.xlane.f32.xlu0 %v2798
        %v2800 = vpop.xlane.xlu0 %2799
        %v2801 = vrcp.pop %v2797
        %v2802 = vmul.f32 %v2797, %v2801
        %v2803 = vsub.f32 1.0, %v2802
        %v2804 = vmul.f32 %v2801, %v2803
        %v2805 = vadd.f32 %v2801, %v2804
        %vm2806 = vweird.f32 %v2797
        %vm2807 = vweird.f32 %v2801
        %vm2808 = vmor %vm2806, %vm2807
        %v2809 = vsel %vm2808, %v2801, %v2805
        %v2810 = vand.u32 2147483647, %v2797
        %vm2811 = vcmp.eq.f32.partialorder %v2810, 8.507059e+37
        %v2812 = vand.u32 %v2797, 2147483648
        %v2813 = vor.u32 1.1754944e-38, %v2812
        %v2814 = vsel %vm2811, %v2813, %v2809
        %v2815 = vmul.f32 %v2792, %v2814
        %v2816 = vrcp.pop %v2800
        %v2817 = vmul.f32 %v2800, %v2816
        %v2818 = vsub.f32 1.0, %v2817
        %v2819 = vmul.f32 %v2816, %v2818
        %v2820 = vadd.f32 %v2816, %v2819
        %vm2821 = vweird.f32 %v2800
        %vm2822 = vweird.f32 %v2816
        %vm2823 = vmor %vm2821, %vm2822
        %v2824 = vsel %vm2823, %v2816, %v2820
        %v2825 = vand.u32 2147483647, %v2800
        %vm2826 = vcmp.eq.f32.partialorder %v2825, 8.507059e+37
        %v2827 = vand.u32 %v2800, 2147483648
        %v2828 = vor.u32 1.1754944e-38, %v2827
        %v2829 = vsel %vm2826, %v2828, %v2824
        %v2830 = vmul.f32 %v2794, %v2829
        %v2832 = vsel %vm1892, %v2815, 0
        %2834 = vmatpush.msra.mxu0 0.0
        %2835 = vmatpush.msra.mxu0 0.0
        %2836 = vmatpush.msra.mxu0 0.0
        %2837 = vmatpush.msra.mxu0 0.0
        %2838 = vmatpush.msra.mxu0 0.0
        %2839 = vmatpush.msra.mxu0 0.0
        %2840 = vmatpush.msra.mxu0 0.0
        %2841 = vmatpush.msra.mxu0 0.0
        %2842 = vmatpush.msra.mxu0 0.0
        %2843 = vmatpush.msra.mxu0 0.0
        %2844 = vmatpush.msra.mxu0 0.0
        %2845 = vmatpush.msra.mxu0 0.0
        %2846 = vmatpush.msra.mxu0 0.0
        %2847 = vmatpush.msra.mxu0 0.0
        %2848 = vmatpush.msra.mxu0 %v2717
        %2849 = vmatpush.msra.mxu0 %v2714
        %2850 = vmatmul.f32.gmra.mxu0 %v2832
        %v2851 = vpop.f32.mrf.mxu0
        %v2852 = vadd.f32 0.0, %v2851
        %2853 = vdwg.mxu0
        %v2855 = vsel %vm1892, %v2830, 0
        %2857 = vmatpush.msra.mxu0 0.0
        %2858 = vmatpush.msra.mxu0 0.0
        %2859 = vmatpush.msra.mxu0 0.0
        %2860 = vmatpush.msra.mxu0 0.0
        %2861 = vmatpush.msra.mxu0 0.0
        %2862 = vmatpush.msra.mxu0 0.0
        %2863 = vmatpush.msra.mxu0 0.0
        %2864 = vmatpush.msra.mxu0 0.0
        %2865 = vmatpush.msra.mxu0 0.0
        %2866 = vmatpush.msra.mxu0 0.0
        %2867 = vmatpush.msra.mxu0 0.0
        %2868 = vmatpush.msra.mxu0 0.0
        %2869 = vmatpush.msra.mxu0 0.0
        %2870 = vmatpush.msra.mxu0 0.0
        %2871 = vmatpush.msra.mxu0 %v2723
        %2872 = vmatpush.msra.mxu0 %v2720
        %2873 = vmatmul.f32.gmra.mxu0 %v2855
        %v2874 = vpop.f32.mrf.mxu0
        %v2875 = vadd.f32 0.0, %v2874
        %2876 = vdwg.mxu0
        %s2877 = scalar_lea.vmem %s7, 56
        %v2878 = vld [vmem:[%s2877] sm:$0xff]
        %v2880 = vsel %vm597, %v2852, 0
        %v2883 = vsel %vm597, %v2875, 0
        %2885 = vmatpush.msra.mxu0 0.0
        %2886 = vmatpush.msra.mxu0 0.0
        %2887 = vmatpush.msra.mxu0 0.0
        %2888 = vmatpush.msra.mxu0 0.0
        %2889 = vmatpush.msra.mxu0 0.0
        %2890 = vmatpush.msra.mxu0 0.0
        %2891 = vmatpush.msra.mxu0 0.0
        %2892 = vmatpush.msra.mxu0 0.0
        %2893 = vmatpush.msra.mxu0 0.0
        %2894 = vmatpush.msra.mxu0 0.0
        %2895 = vmatpush.msra.mxu0 0.0
        %2896 = vmatpush.msra.mxu0 0.0
        %2897 = vmatpush.msra.mxu0 0.0
        %2898 = vmatpush.msra.mxu0 0.0
        %2899 = vmatpush.msra.mxu0 0.0
        %2900 = vmatpush.msra.mxu0 %v2878
        %2901 = vmatmul.f32.gmra.mxu0 %v2880
        %v2902 = vpop.f32.mrf.mxu0
        %v2903 = vadd.f32 0.0, %v2902
        %2904 = vmatmul.f32.gmra.mxu0 %v2883
        %v2905 = vpop.f32.mrf.mxu0
        %v2906 = vadd.f32 0.0, %v2905
        %2907 = vdwg.mxu0
        %v2908 = vadd.f32 %v2610, %v2903
        %v2909 = vadd.f32 %v2611, %v2906
        %s2910 = scalar_lea.vmem %s8, 3
        %v2911 = vld [vmem:[%s2910] sm:$0x1]
        %v2913 = vperm.slane %v2911, 0
        %v2915 = vadd.f32 %v2908, %v2913
        %v2916 = vadd.f32 %v2909, %v2913
        %v2917 = vadd.f32 %v2915, %v1683
        %v2918 = vadd.f32 %v2916, %v1684
        %s2919 = scalar_lea.vmem %s8, 4
        %v2920 = vld [vmem:[%s2919] sm:$0x1]
        %s2921 = scalar_lea.vmem %s8, 5
        %v2922 = vld [vmem:[%s2921] sm:$0x1]
        %v2923 = vsel %vm499, %v2917, 0.0
        %2924 = vadd.xlane.f32.xlu0 %v2923
        %v2925 = vpop.xlane.xlu0 %2924
        %v2926 = vsel %vm499, %v2918, 0.0
        %2927 = vadd.xlane.f32.xlu0 %v2926
        %v2928 = vpop.xlane.xlu0 %2927
        %v2929 = vmul.f32 %v2925, %v1636
        %v2930 = vmul.f32 %v2928, %v1636
        %v2931 = vsub.f32 %v2917, %v2929
        %v2932 = vsub.f32 %v2918, %v2930
        %v2933 = vmul.f32 %v2931, %v2931
        %v2934 = vmul.f32 %v2932, %v2932
        %v2935 = vsel %vm499, %v2933, 0.0
        %2936 = vadd.xlane.f32.xlu0 %v2935
        %v2937 = vpop.xlane.xlu0 %2936
        %v2938 = vsel %vm499, %v2934, 0.0
        %2939 = vadd.xlane.f32.xlu0 %v2938
        %v2940 = vpop.xlane.xlu0 %2939
        %v2941 = vmul.f32 %v2937, %v1636
        %v2942 = vmul.f32 %v2940, %v1636
        %v2943 = vadd.f32 %v2941, 1e-05
        %v2944 = vadd.f32 %v2942, 1e-05
        %v2945 = vrsqrt.pop %v2943
        %v2946 = vmul.f32 %v2945, %v2943
        %v2947 = vmul.f32 %v2946, %v2945
        %v2948 = vmul.f32 0.5, %v2947
        %v2949 = vsub.f32 1.5, %v2948
        %v2950 = vmul.f32 %v2945, %v2949
        %vm2951 = vweird.f32 %v2943
        %vm2952 = vweird.f32 %v2945
        %vm2953 = vmor %vm2951, %vm2952
        %v2954 = vsel %vm2953, %v2945, %v2950
        %v2955 = vrsqrt.pop %v2944
        %v2956 = vmul.f32 %v2955, %v2944
        %v2957 = vmul.f32 %v2956, %v2955
        %v2958 = vmul.f32 0.5, %v2957
        %v2959 = vsub.f32 1.5, %v2958
        %v2960 = vmul.f32 %v2955, %v2959
        %vm2961 = vweird.f32 %v2944
        %vm2962 = vweird.f32 %v2955
        %vm2963 = vmor %vm2961, %vm2962
        %v2964 = vsel %vm2963, %v2955, %v2960
        %v2965 = vmul.f32 %v2931, %v2954
        %v2966 = vmul.f32 %v2932, %v2964
        %v2968 = vperm.slane %v2920, 0
        %v2970 = vmul.f32 %v2965, %v2968
        %v2971 = vmul.f32 %v2966, %v2968
        %v2973 = vperm.slane %v2922, 0
        %v2975 = vadd.f32 %v2970, %v2973
        %v2976 = vadd.f32 %v2971, %v2973
        %v2977 = vld [vmem:[%s9] sm:$0xff]
        %v2978 = vld [vmem:[%s9 + $0x8] sm:$0xff]
        %v2979 = vld [vmem:[%s9 + $0x10] sm:$0xff]
        %v2980 = vld [vmem:[%s9 + $0x18] sm:$0xff]
        %v2981 = vld [vmem:[%s10] sm:$0x1]
        %v2983 = vperm.slane %v2981, 0
        %v2986 = vsel %vm499, %v2975, 0
        %v2989 = vsel %vm499, %v2976, 0
        %2991 = vmatpush.msra.mxu0 0.0
        %2992 = vmatpush.msra.mxu0 0.0
        %2993 = vmatpush.msra.mxu0 0.0
        %2994 = vmatpush.msra.mxu0 0.0
        %2995 = vmatpush.msra.mxu0 0.0
        %2996 = vmatpush.msra.mxu0 0.0
        %2997 = vmatpush.msra.mxu0 0.0
        %2998 = vmatpush.msra.mxu0 0.0
        %2999 = vmatpush.msra.mxu0 0.0
        %3000 = vmatpush.msra.mxu0 0.0
        %3001 = vmatpush.msra.mxu0 0.0
        %3002 = vmatpush.msra.mxu0 0.0
        %3003 = vmatpush.msra.mxu0 %v2980
        %3004 = vmatpush.msra.mxu0 %v2979
        %3005 = vmatpush.msra.mxu0 %v2978
        %3006 = vmatpush.msra.mxu0 %v2977
        %3007 = vmatmul.f32.gmra.mxu0 %v2986
        %v3008 = vpop.f32.mrf.mxu0
        %v3009 = vadd.f32 %v2983, %v3008
        %3010 = vmatmul.f32.gmra.mxu0 %v2989
        %v3011 = vpop.f32.mrf.mxu0
        %v3012 = vadd.f32 %v2983, %v3011
        %3013 = vdwg.mxu0
        %vm3014 = vcmp.ge.f32.partialorder %v3009, 0.0
        %vm3015 = vcmp.ge.f32.partialorder %v3012, 0.0
        %v3016 = vmul.f32 %v3009, 0.01
        %v3017 = vmul.f32 %v3012, 0.01
        %v3018 = vsel %vm3014, %v3009, %v3016
        %v3019 = vsel %vm3015, %v3012, %v3017
        %v3020 = vld [vmem:[%s11] sm:$0xff]
        %v3021 = vld [vmem:[%s11 + $0x8] sm:$0xff]
        %v3022 = vld [vmem:[%s11 + $0x10] sm:$0xff]
        %v3023 = vld [vmem:[%s11 + $0x18] sm:$0xff]
        %v3024 = vld [vmem:[%s11 + $0x20] sm:$0xff]
        %v3025 = vld [vmem:[%s11 + $0x28] sm:$0xff]
        %v3026 = vld [vmem:[%s11 + $0x30] sm:$0xff]
        %v3027 = vld [vmem:[%s11 + $0x38] sm:$0xff]
        %s3028 = scalar_lea.vmem %s8, 6
        %v3029 = vld [vmem:[%s3028] sm:$0x1]
        %v3031 = vperm.slane %v3029, 0
        %vm3033 = vcmask 523264
        %v3035 = vsel %vm3033, %v3018, 0
        %v3038 = vsel %vm3033, %v3019, 0
        %3040 = vmatpush.msra.mxu0 0.0
        %3041 = vmatpush.msra.mxu0 0.0
        %3042 = vmatpush.msra.mxu0 0.0
        %3043 = vmatpush.msra.mxu0 0.0
        %3044 = vmatpush.msra.mxu0 0.0
        %3045 = vmatpush.msra.mxu0 0.0
        %3046 = vmatpush.msra.mxu0 0.0
        %3047 = vmatpush.msra.mxu0 0.0
        %3048 = vmatpush.msra.mxu0 %v3027
        %3049 = vmatpush.msra.mxu0 %v3026
        %3050 = vmatpush.msra.mxu0 %v3025
        %3051 = vmatpush.msra.mxu0 %v3024
        %3052 = vmatpush.msra.mxu0 %v3023
        %3053 = vmatpush.msra.mxu0 %v3022
        %3054 = vmatpush.msra.mxu0 %v3021
        %3055 = vmatpush.msra.mxu0 %v3020
        %3056 = vmatmul.f32.gmra.mxu0 %v3035
        %v3057 = vpop.f32.mrf.mxu0
        %v3058 = vadd.f32 %v3031, %v3057
        %3059 = vmatmul.f32.gmra.mxu0 %v3038
        %v3060 = vpop.f32.mrf.mxu0
        %v3061 = vadd.f32 %v3031, %v3060
        %3062 = vdwg.mxu0
        %v3063 = vadd.f32 %v3058, %v2975
        %v3064 = vadd.f32 %v3061, %v2976
        %s3065 = scalar_lea.vmem %s8, 7
        %v3066 = vld [vmem:[%s3065] sm:$0x1]
        %s3067 = scalar_lea.vmem %s8, 8
        %v3068 = vld [vmem:[%s3067] sm:$0x1]
        %v3069 = vsel %vm499, %v3063, 0.0
        %3070 = vadd.xlane.f32.xlu0 %v3069
        %v3071 = vpop.xlane.xlu0 %3070
        %v3072 = vsel %vm499, %v3064, 0.0
        %3073 = vadd.xlane.f32.xlu0 %v3072
        %v3074 = vpop.xlane.xlu0 %3073
        %v3075 = vmul.f32 %v3071, %v1636
        %v3076 = vmul.f32 %v3074, %v1636
        %v3077 = vsub.f32 %v3063, %v3075
        %v3078 = vsub.f32 %v3064, %v3076
        %v3079 = vmul.f32 %v3077, %v3077
        %v3080 = vmul.f32 %v3078, %v3078
        %v3081 = vsel %vm499, %v3079, 0.0
        %3082 = vadd.xlane.f32.xlu0 %v3081
        %v3083 = vpop.xlane.xlu0 %3082
        %v3084 = vsel %vm499, %v3080, 0.0
        %3085 = vadd.xlane.f32.xlu0 %v3084
        %v3086 = vpop.xlane.xlu0 %3085
        %v3087 = vmul.f32 %v3083, %v1636
        %v3088 = vmul.f32 %v3086, %v1636
        %v3089 = vadd.f32 %v3087, 1e-05
        %v3090 = vadd.f32 %v3088, 1e-05
        %v3091 = vrsqrt.pop %v3089
        %v3092 = vmul.f32 %v3091, %v3089
        %v3093 = vmul.f32 %v3092, %v3091
        %v3094 = vmul.f32 0.5, %v3093
        %v3095 = vsub.f32 1.5, %v3094
        %v3096 = vmul.f32 %v3091, %v3095
        %vm3097 = vweird.f32 %v3089
        %vm3098 = vweird.f32 %v3091
        %vm3099 = vmor %vm3097, %vm3098
        %v3100 = vsel %vm3099, %v3091, %v3096
        %v3101 = vrsqrt.pop %v3090
        %v3102 = vmul.f32 %v3101, %v3090
        %v3103 = vmul.f32 %v3102, %v3101
        %v3104 = vmul.f32 0.5, %v3103
        %v3105 = vsub.f32 1.5, %v3104
        %v3106 = vmul.f32 %v3101, %v3105
        %vm3107 = vweird.f32 %v3090
        %vm3108 = vweird.f32 %v3101
        %vm3109 = vmor %vm3107, %vm3108
        %v3110 = vsel %vm3109, %v3101, %v3106
        %v3111 = vmul.f32 %v3077, %v3100
        %v3112 = vmul.f32 %v3078, %v3110
        %v3114 = vperm.slane %v3066, 0
        %v3116 = vmul.f32 %v3111, %v3114
        %v3117 = vmul.f32 %v3112, %v3114
        %v3119 = vperm.slane %v3068, 0
        %v3121 = vadd.f32 %v3116, %v3119
        %v3122 = vadd.f32 %v3117, %v3119
        %3123 = vst.msk [vmem:[%s453] sm:$0xff] %vm499, %v3121
        %3124 = vst.msk [vmem:[%s453 + $0x8] sm:$0xff] %vm499, %v3122
        %s3125 = sand.u32 %s306, 1
        %s3126 = scalar_lea.sflag [#allocation3], %s3125
        %s3127 = sand.u32 %s306, 1
        %s3128 = smul.addr %s3127, 16
        %s3129 = scalar_lea.vmem [#allocation2], %s3128
        // Predicated region
        $region69: #{decoder_block_forward.1} parent=67 // pred_check
          %p3130 = pneg %p316
        $region70: #{decoder_block_forward.1} parent=67 // pred_check_branch
          %3132 = sbr.rel (%p3130) target = $region72
        $region71: #{decoder_block_forward.1} parent=67 // pred_region
          %s3133 = smul.u32 2, %s26
          %3135 = vsyncadd %s3126, 0
          %s3136 = smul.addr %s3133, 8
          %s3137 = scalar_lea.hbm %s12, %s3136
          %s3138 = sshll.u32 %s3129, 4
          %s3139 = int_to_ptr.vmem [resolvable:$true] %s3138
          %s3140 = sshll.u32 %s3137, 4
          %s3141 = int_to_ptr.hbm [resolvable:$true] %s3140
          %3146 = dma.vmem_to_hbm [thread:$0]  %s3139, 256, %s3141, %s3126, 128, 128, 8
        $region72: #{decoder_block_forward.1} parent=67 // pred_fallthru
          _
      $region68: #{decoder_block_forward.1} parent=5 // pred_fallthru
        _
      %p3147 = scmp.le.s32.totalorder 2, %s21
      // Predicated region
      $region73: #{decoder_block_forward.1} parent=5 // pred_check
        %p3148 = pneg %p3147
      $region74: #{decoder_block_forward.1} parent=5 // pred_check_branch
        %3150 = sbr.rel (%p3148) target = $region76
      $region75: #{decoder_block_forward.1} parent=5 // pred_region
        %s3151 = ssub.s32 %s21, 2
        // Predicated region
        $region77: #{decoder_block_forward.1} parent=75 // pred_check
          %p3152 = pneg %p322
        $region78: #{decoder_block_forward.1} parent=75 // pred_check_branch
          %3154 = sbr.rel (%p3152) target = $region80
        $region79: #{decoder_block_forward.1} parent=75 // pred_region
          %s3155 = sand.u32 %s307, 1
          %s3156 = scalar_lea.sflag [#allocation3], %s3155
          %s3157 = sand.u32 %s307, 1
          %s3158 = smul.addr %s3157, 16
          %s3159 = scalar_lea.vmem [#allocation2], %s3158
          %3161 = dma.done %s3156, 256
        $region80: #{decoder_block_forward.1} parent=75 // pred_fallthru
          _
      $region76: #{decoder_block_forward.1} parent=5 // pred_fallthru
        _
    $region6: #{decoder_block_forward.1} parent=1 // loop_footer
      %s25 = sadd.s32 1, %s21
    $region7: #{decoder_block_forward.1} parent=1 // loop_footer_branch
      %20 = sbr.rel target = $region3
    $region8: #{decoder_block_forward.1} parent=1 // loop_exit
      _
    %3162 = vsyncpa [#allocation3], 1
    %s3163 = scalar_lea.sflag [#allocation3], 1
    %3164 = vsyncpa %s3163, 1

</llo_original>
